<compile_context>
chip_gen: v7x
topology: tpu7x:2x2x1
jax: 0.10.0
libtpu: 0.0.40
codegen_flags: <defaults>
</compile_context>

<pallas_src>
import jax
import jax.numpy as jnp
from jax.experimental import pallas as pl
from jax.experimental.pallas import tpu as pltpu


# ----------------------------------------------------------------------------
# Generic  out = X @ W + b  kernel (single block, whole arrays in VMEM).
# Used for (a) the hoisted per-layer input projection over all timesteps and
# both directions at once, and (b) the final fully-connected layer.
# Weights are bf16, accumulation is f32.
# ----------------------------------------------------------------------------
def _matmul_bias_kernel(x_ref, w_ref, b_ref, o_ref):
    o_ref[...] = (
        jnp.dot(x_ref[...].astype(jnp.bfloat16), w_ref[...],
                preferred_element_type=jnp.float32)
        + b_ref[...])


def matmul_bias(x, w, b):
    M, K = x.shape
    N = w.shape[1]
    return pl.pallas_call(
        _matmul_bias_kernel,
        out_shape=jax.ShapeDtypeStruct((M, N), jnp.float32),
        in_specs=[pl.BlockSpec((M, K), lambda: (0, 0)),
                  pl.BlockSpec((K, N), lambda: (0, 0)),
                  pl.BlockSpec((1, N), lambda: (0, 0))],
        out_specs=pl.BlockSpec((M, N), lambda: (0, 0)),
    )(x, w, b)


# ----------------------------------------------------------------------------
# Bidirectional LSTM layer kernel: grid=(2,) over direction; the full time
# recurrence is an in-kernel fori_loop bounded by max(text_lengths).
# ----------------------------------------------------------------------------
def _bilstm_recurrence_kernel(nsteps_ref, xp_ref, len_ref, whh_ref,
                              hseq_ref, hfin_ref):
    """One LSTM layer, both directions.

    nsteps_ref: (1,)  SMEM  max(text_lengths); steps beyond it are all masked
    xp_ref    : (T, B, 4H)  precomputed x @ W_ih + (b_ih + b_hh), this direction
    len_ref   : (B, 1)      int32 text lengths (pack_padded_sequence mask)
    whh_ref   : (1, H, 4H)  bf16 recurrent weights, this direction
    hseq_ref  : (T, B, H)   this direction's half of the (T, B, 2H) output seq
    hfin_ref  : (B, H)      this direction's half of the (B, 2H) final hidden
    """
    d = pl.program_id(0)                    # 0 = forward, 1 = backward
    _, B, H = hseq_ref.shape
    n = nsteps_ref[0]                       # number of active timesteps

    whh = whh_ref[0]                        # (H, 4H) bf16, hoisted out of loop
    lens = len_ref[...]                     # (B, 1)  int32

    # pad_packed_sequence zero-pads past each sequence's length; positions
    # t >= max(length) (incl. all emoji positions) are never touched below.
    hseq_ref[...] = jnp.zeros(hseq_ref.shape, hseq_ref.dtype)

    h0 = jnp.zeros((B, H), jnp.float32)
    c0 = jnp.zeros((B, H), jnp.float32)

    def step(t, carry):
        h, c = carry
        # forward walks 0..n-1; backward walks n-1..0 (masked steps never
        # update state, so starting the backward pass at n-1 is exact).
        t_orig = t + d * (n - 1 - 2 * t)

        gates = xp_ref[t_orig] + jnp.dot(
            h.astype(jnp.bfloat16), whh, preferred_element_type=jnp.float32)

        # PyTorch gate order i, f, g, o; H=128 keeps slices 128-lane aligned.
        i_g = jax.nn.sigmoid(gates[:, 0 * H:1 * H])
        f_g = jax.nn.sigmoid(gates[:, 1 * H:2 * H])
        g_g = jnp.tanh(gates[:, 2 * H:3 * H])
        o_g = jax.nn.sigmoid(gates[:, 3 * H:4 * H])

        c_new = f_g * c + i_g * g_g
        h_new = o_g * jnp.tanh(c_new)

        # pack_padded_sequence semantics: steps t >= length[b] never update.
        mask = t_orig < lens                               # (B, 1) bool
        h = jnp.where(mask, h_new, h)
        c = jnp.where(mask, c_new, c)
        hseq_ref[t_orig] = jnp.where(mask, h_new, jnp.zeros_like(h_new))
        return h, c

    h_fin, _ = jax.lax.fori_loop(0, n, step, (h0, c0))
    # Final hidden written once, at the end (no per-step store).
    hfin_ref[...] = h_fin


def bilstm_layer(xp, lengths, nsteps, w_hh):
    """xp: (T, B, 8H) f32 -- fwd gates in lanes [:4H], bwd in [4H:].
    w_hh: (2, H, 4H) bf16. Returns hseq (T, B, 2H) and hfin (B, 2H)."""
    T, B, G2 = xp.shape
    H = w_hh.shape[1]
    assert G2 == 8 * H
    hseq, hfin = pl.pallas_call(
        _bilstm_recurrence_kernel,
        out_shape=(jax.ShapeDtypeStruct((T, B, 2 * H), jnp.float32),
                   jax.ShapeDtypeStruct((B, 2 * H), jnp.float32)),
        grid_spec=pltpu.PrefetchScalarGridSpec(
            num_scalar_prefetch=1,            # nsteps -> SMEM
            grid=(2,),                        # direction axis (fwd, bwd)
            in_specs=[
                pl.BlockSpec((T, B, 4 * H), lambda d, ns: (0, 0, d)),   # xproj
                pl.BlockSpec((B, 1), lambda d, ns: (0, 0)),             # lengths
                pl.BlockSpec((1, H, 4 * H), lambda d, ns: (d, 0, 0)),   # W_hh
                # NOTE: at production sizes add pipeline_mode=pl.Buffered(1)
                # to the constant-index weight spec and set vmem_limit_bytes.
            ],
            out_specs=(
                pl.BlockSpec((T, B, H), lambda d, ns: (0, 0, d)),   # hseq half
                pl.BlockSpec((B, H), lambda d, ns: (0, d)),         # hfin half
            ),
        ),
        compiler_params=pltpu.CompilerParams(
            dimension_semantics=("parallel",)),   # 2 TCs on v7x
    )(nsteps, xp, lengths, w_hh)
    return hseq, hfin


# ----------------------------------------------------------------------------
# Full EmojiLSTM forward (eval mode: dropout = identity).
# ----------------------------------------------------------------------------
def emoji_lstm_forward(params, text, text_lengths, emoji):
    # Embedding lookups + seq concat (XLA glue).
    text_emb = params["text_emb"][text]     # (Tt, B, E)
    # TODO(synk): nn.Dropout on text_embedded -- identity in eval mode.
    emoji_emb = params["emoji_emb"][emoji]  # (Te, B, E)  (requires same E)
    embedded = jnp.concatenate([text_emb, emoji_emb], axis=0)   # (T, B, E)
    T, B, _ = embedded.shape

    lengths = text_lengths.astype(jnp.int32).reshape(B, 1)          # (B, 1)
    nsteps = jnp.minimum(jnp.max(lengths), T).astype(jnp.int32).reshape(1)

    layer_in = embedded
    hfin = None
    for layer in params["lstm"]:
        D = layer_in.shape[-1]
        # Hoisted input projection: one big matmul over all T*B rows and both
        # directions; biases (b_ih + b_hh) folded in here.
        xp = matmul_bias(layer_in.reshape(T * B, D), layer["w_ih"], layer["b"])
        xp = xp.reshape(T, B, -1)                                   # (T, B, 8H)
        hseq, hfin = bilstm_layer(xp, lengths, nsteps, layer["w_hh"])
        layer_in = hseq                 # (T, B, 2H): fwd / bwd lane-halves

    # hidden[-2] = hfin[:, :H] (last-layer fwd), hidden[-1] = hfin[:, H:] (bwd).
    # TODO(synk): dropout on hidden -- identity in eval mode.
    return matmul_bias(hfin, params["fc_w"], params["fc_b"])


# ----------------------------------------------------------------------------
# Deterministic parameter initialization (weights in bf16, biases/emb in f32).
# ----------------------------------------------------------------------------
def init_params(key, vocab_size, emoji_vocab_size, embedding_dim, hidden_dim,
                output_dim, n_layers, pad_idx):
    ks = iter(jax.random.split(key, 4 + n_layers * 6))

    def rnd(shape, dtype=jnp.float32, scale=0.1):
        return (scale * jax.random.normal(next(ks), shape)).astype(dtype)

    # TODO(synk): PyTorch LSTM uses uniform(-1/sqrt(H)) init; scaled normal here.
    text_emb = rnd((vocab_size, embedding_dim)).at[pad_idx].set(0.0)
    emoji_emb = rnd((emoji_vocab_size, embedding_dim)).at[pad_idx].set(0.0)

    lstm = []
    H = hidden_dim
    for l in range(n_layers):
        in_dim = embedding_dim if l == 0 else 2 * H
        # fwd/bwd input weights stacked along the output (lane) axis; recurrent
        # weights stacked along a leading direction axis; b = b_ih + b_hh.
        w_ih = jnp.concatenate([rnd((in_dim, 4 * H), jnp.bfloat16),
                                rnd((in_dim, 4 * H), jnp.bfloat16)], axis=1)
        w_hh = jnp.stack([rnd((H, 4 * H), jnp.bfloat16),
                          rnd((H, 4 * H), jnp.bfloat16)], axis=0)
        b = jnp.concatenate([rnd((1, 4 * H)), rnd((1, 4 * H))], axis=1)
        lstm.append(dict(w_ih=w_ih, w_hh=w_hh, b=b))

    fc_w = rnd((2 * H, output_dim), jnp.bfloat16)
    fc_b = rnd((1, output_dim))
    return dict(text_emb=text_emb, emoji_emb=emoji_emb, lstm=lstm,
                fc_w=fc_w, fc_b=fc_b)


if __name__ == "__main__":
    # Small synthetic config consistent with the module's __init__ / forward.
    VOCAB = 100
    EMOJI_VOCAB = 50
    EMB_DIM = 64          # emoji_embedding_dim must equal embedding_dim (cat dim 0)
    HIDDEN_DIM = 128      # keeps gates / outputs 128-lane aligned
    OUTPUT_DIM = 8
    N_LAYERS = 2
    PAD_IDX = 0
    B = 2                 # batch
    T_TEXT = 8            # text sequence length
    T_EMOJI = 4           # emoji sequence length

    key = jax.random.PRNGKey(0)
    k_text, k_emoji, k_param = jax.random.split(key, 3)

    text = jax.random.randint(k_text, (T_TEXT, B), 1, VOCAB, dtype=jnp.int32)
    emoji = jax.random.randint(k_emoji, (T_EMOJI, B), 1, EMOJI_VOCAB,
                               dtype=jnp.int32)
    # pack_padded_sequence requires sorted (descending) lengths.
    text_lengths = jnp.array([8, 6], dtype=jnp.int32)

    params = init_params(k_param, VOCAB, EMOJI_VOCAB, EMB_DIM, HIDDEN_DIM,
                         OUTPUT_DIM, N_LAYERS, PAD_IDX)

    fwd = jax.jit(emoji_lstm_forward)
    out = jax.block_until_ready(fwd(params, text, text_lengths, emoji))
    assert out.shape == (B, OUTPUT_DIM), out.shape
    assert out.dtype == jnp.float32, out.dtype
    print("KERNEL_OK")
</pallas_src>

<mosaic_0001>
module attributes {stable_mosaic.version = 11 : i64} {
  func.func @_matmul_bias_kernel(%arg0: memref<24x64xf32, #tpu.memory_space<vmem>>, %arg1: memref<64x1024xbf16, #tpu.memory_space<vmem>>, %arg2: memref<1x1024xf32, #tpu.memory_space<vmem>>, %arg3: memref<24x1024xf32, #tpu.memory_space<vmem>>) attributes {dimension_semantics = [], scalar_prefetch = 0 : i64, scratch_operands = 0 : i64, tpu.core_type = #tpu.core_type<tc>} {
    %c0 = arith.constant 0 : index
    %c0_0 = arith.constant 0 : index
    %0 = vector.load %arg0[%c0, %c0_0] : memref<24x64xf32, #tpu.memory_space<vmem>>, vector<24x64xf32>
    %1 = arith.truncf %0 : vector<24x64xf32> to vector<24x64xbf16>
    %c0_1 = arith.constant 0 : index
    %c0_2 = arith.constant 0 : index
    %2 = vector.load %arg1[%c0_1, %c0_2] : memref<64x1024xbf16, #tpu.memory_space<vmem>>, vector<64x1024xbf16>
    %cst = arith.constant dense<0.000000e+00> : vector<24x1024xf32>
    %3 = tpu.matmul %1, %2, %cst {dimension_numbers = #tpu.dot_dimension_numbers<[1], [0], [0], [1], [0, 0, 1, 1], [], []>} : vector<24x64xbf16>, vector<64x1024xbf16>, vector<24x1024xf32> -> vector<24x1024xf32>
    %c0_3 = arith.constant 0 : index
    %c0_4 = arith.constant 0 : index
    %4 = vector.load %arg2[%c0_3, %c0_4] : memref<1x1024xf32, #tpu.memory_space<vmem>>, vector<1x1024xf32>
    %5 = vector.broadcast %4 : vector<1x1024xf32> to vector<24x1024xf32>
    %6 = arith.addf %3, %5 : vector<24x1024xf32>
    %c0_5 = arith.constant 0 : index
    %c0_6 = arith.constant 0 : index
    %7 = vector.load %arg3[%c0_5, %c0_6] : memref<24x1024xf32, #tpu.memory_space<vmem>>, vector<24x1024xf32>
    tpu.vector_store %arg3[%c0_5, %c0_6], %6 {strides = array<i32>} : memref<24x1024xf32, #tpu.memory_space<vmem>>, vector<24x1024xf32>,
    return
  }
}

module attributes {stable_mosaic.version = 11 : i64} {
  func.func @_bilstm_recurrence_kernel(%arg0: i32, %arg1: memref<1xi32, #tpu.memory_space<smem>>, %arg2: memref<12x2x512xf32, #tpu.memory_space<vmem>>, %arg3: memref<2x1xi32, #tpu.memory_space<vmem>>, %arg4: memref<1x128x512xbf16, #tpu.memory_space<vmem>>, %arg5: memref<12x2x128xf32, #tpu.memory_space<vmem>>, %arg6: memref<2x128xf32, #tpu.memory_space<vmem>>) attributes {dimension_semantics = [#tpu.dimension_semantics<parallel>], iteration_bounds = array<i64: 2>, scalar_prefetch = 1 : i64, scratch_operands = 0 : i64, tpu.core_type = #tpu.core_type<tc>, window_params = [{transform_indices = @transform_0, window_bounds = array<i64: 12, 2, 512>}, {pipeline_mode = #tpu.pipeline_mode<synchronous>, transform_indices = @transform_1, window_bounds = array<i64: 2, 1>}, {transform_indices = @transform_2, window_bounds = array<i64: 1, 128, 512>}, {transform_indices = @transform_3, window_bounds = array<i64: 12, 2, 128>}, {transform_indices = @transform_4, window_bounds = array<i64: 2, 128>}]} {
    %c0 = arith.constant 0 : index
    %0 = memref.load %arg1[%c0] : memref<1xi32, #tpu.memory_space<smem>>
    %c0_0 = arith.constant 0 : index
    %c0_1 = arith.constant 0 : index
    %c0_2 = arith.constant 0 : index
    %1 = vector.load %arg4[%c0_0, %c0_1, %c0_2] : memref<1x128x512xbf16, #tpu.memory_space<vmem>>, vector<1x128x512xbf16>
    %2 = vector.shape_cast %1 : vector<1x128x512xbf16> to vector<128x512xbf16>
    %c0_3 = arith.constant 0 : index
    %c0_4 = arith.constant 0 : index
    %3 = vector.load %arg3[%c0_3, %c0_4] : memref<2x1xi32, #tpu.memory_space<vmem>>, vector<2x1xi32>
    %cst = arith.constant 0.000000e+00 : f32
    %4 = vector.broadcast %cst : f32 to vector<12x2x128xf32>
    %c0_5 = arith.constant 0 : index
    %c0_6 = arith.constant 0 : index
    %c0_7 = arith.constant 0 : index
    %5 = vector.load %arg5[%c0_5, %c0_6, %c0_7] : memref<12x2x128xf32, #tpu.memory_space<vmem>>, vector<12x2x128xf32>
    tpu.vector_store %arg5[%c0_5, %c0_6, %c0_7], %4 {strides = array<i32>} : memref<12x2x128xf32, #tpu.memory_space<vmem>>, vector<12x2x128xf32>,
    %cst_8 = arith.constant 0.000000e+00 : f32
    %6 = vector.broadcast %cst_8 : f32 to vector<2x128xf32>
    %cst_9 = arith.constant 0.000000e+00 : f32
    %7 = vector.broadcast %cst_9 : f32 to vector<2x128xf32>
    %c0_i32 = arith.constant 0 : i32
    %8 = arith.subi %0, %c0_i32 : i32
    %9 = arith.addi %c0_i32, %8 : i32
    %c1_i32 = arith.constant 1 : i32
    %10:2 = scf.for %arg7 = %c0_i32 to %9 step %c1_i32 iter_args(%arg8 = %6, %arg9 = %7) -> (vector<2x128xf32>, vector<2x128xf32>)  : i32 {
      %c1_i32_12 = arith.constant 1 : i32
      %12 = arith.subi %0, %c1_i32_12 : i32
      %c2_i32 = arith.constant 2 : i32
      %13 = arith.muli %c2_i32, %arg7 : i32
      %14 = arith.subi %12, %13 : i32
      %15 = arith.muli %arg0, %14 : i32
      %16 = arith.addi %arg7, %15 : i32
      %17 = arith.index_cast %16 : i32 to index
      %c0_13 = arith.constant 0 : index
      %c0_14 = arith.constant 0 : index
      %18 = vector.load %arg2[%17, %c0_13, %c0_14] : memref<12x2x512xf32, #tpu.memory_space<vmem>>, vector<1x2x512xf32>
      %19 = vector.shape_cast %18 : vector<1x2x512xf32> to vector<2x512xf32>
      %20 = arith.truncf %arg8 : vector<2x128xf32> to vector<2x128xbf16>
      %cst_15 = arith.constant dense<0.000000e+00> : vector<2x512xf32>
      %21 = tpu.matmul %20, %2, %cst_15 {dimension_numbers = #tpu.dot_dimension_numbers<[1], [0], [0], [1], [0, 0, 1, 1], [], []>} : vector<2x128xbf16>, vector<128x512xbf16>, vector<2x512xf32> -> vector<2x512xf32>
      %22 = arith.addf %19, %21 : vector<2x512xf32>
      %23 = vector.extract_strided_slice %22 {offsets = [0, 0], sizes = [2, 128], strides = [1, 1]} : vector<2x512xf32> to vector<2x128xf32>
      %24 = arith.negf %23 : vector<2x128xf32>
      %25 = math.exp %24 : vector<2x128xf32>
      %cst_16 = arith.constant 1.000000e+00 : f32
      %26 = vector.broadcast %cst_16 : f32 to vector<2x128xf32>
      %27 = arith.addf %26, %25 : vector<2x128xf32>
      %28 = arith.divf %26, %27 : vector<2x128xf32>
      %29 = vector.extract_strided_slice %22 {offsets = [0, 128], sizes = [2, 128], strides = [1, 1]} : vector<2x512xf32> to vector<2x128xf32>
      %30 = arith.negf %29 : vector<2x128xf32>
      %31 = math.exp %30 : vector<2x128xf32>
      %cst_17 = arith.constant 1.000000e+00 : f32
      %32 = vector.broadcast %cst_17 : f32 to vector<2x128xf32>
      %33 = arith.addf %32, %31 : vector<2x128xf32>
      %34 = arith.divf %32, %33 : vector<2x128xf32>
      %35 = vector.extract_strided_slice %22 {offsets = [0, 256], sizes = [2, 128], strides = [1, 1]} : vector<2x512xf32> to vector<2x128xf32>
      %36 = math.tanh %35 : vector<2x128xf32>
      %37 = vector.extract_strided_slice %22 {offsets = [0, 384], sizes = [2, 128], strides = [1, 1]} : vector<2x512xf32> to vector<2x128xf32>
      %38 = arith.negf %37 : vector<2x128xf32>
      %39 = math.exp %38 : vector<2x128xf32>
      %cst_18 = arith.constant 1.000000e+00 : f32
      %40 = vector.broadcast %cst_18 : f32 to vector<2x128xf32>
      %41 = arith.addf %40, %39 : vector<2x128xf32>
      %42 = arith.divf %40, %41 : vector<2x128xf32>
      %43 = arith.mulf %34, %arg9 : vector<2x128xf32>
      %44 = arith.mulf %28, %36 : vector<2x128xf32>
      %45 = arith.addf %43, %44 : vector<2x128xf32>
      %46 = math.tanh %45 : vector<2x128xf32>
      %47 = arith.mulf %42, %46 : vector<2x128xf32>
      %48 = vector.broadcast %16 : i32 to vector<2x1xi32>
      %49 = arith.cmpi slt, %48, %3 : vector<2x1xi32>
      %50 = vector.shape_cast %49 : vector<2x1xi1> to vector<2x1xi1>
      %51 = vector.broadcast %50 : vector<2x1xi1> to vector<2x128xi1>
      %52 = arith.select %51, %47, %arg8 : vector<2x128xi1>, vector<2x128xf32>
      %53 = vector.shape_cast %49 : vector<2x1xi1> to vector<2x1xi1>
      %54 = vector.broadcast %53 : vector<2x1xi1> to vector<2x128xi1>
      %55 = arith.select %54, %45, %arg9 : vector<2x128xi1>, vector<2x128xf32>
      %cst_19 = arith.constant 0.000000e+00 : f32
      %56 = vector.broadcast %cst_19 : f32 to vector<2x128xf32>
      %57 = vector.shape_cast %49 : vector<2x1xi1> to vector<2x1xi1>
      %58 = vector.broadcast %57 : vector<2x1xi1> to vector<2x128xi1>
      %59 = arith.select %58, %47, %56 : vector<2x128xi1>, vector<2x128xf32>
      %60 = arith.index_cast %16 : i32 to index
      %c0_20 = arith.constant 0 : index
      %c0_21 = arith.constant 0 : index
      %61 = vector.load %arg5[%60, %c0_20, %c0_21] : memref<12x2x128xf32, #tpu.memory_space<vmem>>, vector<1x2x128xf32>
      %62 = vector.shape_cast %61 : vector<1x2x128xf32> to vector<2x128xf32>
      %63 = vector.shape_cast %59 : vector<2x128xf32> to vector<1x2x128xf32>
      tpu.vector_store %arg5[%60, %c0_20, %c0_21], %63 {strides = array<i32>} : memref<12x2x128xf32, #tpu.memory_space<vmem>>, vector<1x2x128xf32>,
      scf.yield %52, %55 : vector<2x128xf32>, vector<2x128xf32>
    }
    %c0_10 = arith.constant 0 : index
    %c0_11 = arith.constant 0 : index
    %11 = vector.load %arg6[%c0_10, %c0_11] : memref<2x128xf32, #tpu.memory_space<vmem>>, vector<2x128xf32>
    tpu.vector_store %arg6[%c0_10, %c0_11], %10#0 {strides = array<i32>} : memref<2x128xf32, #tpu.memory_space<vmem>>, vector<2x128xf32>,
    return
  }
  func.func @transform_0(%arg0: i32, %arg1: memref<1xi32, #tpu.memory_space<smem>>) -> (i32, i32, i32) {
    %c0_i32 = arith.constant 0 : i32
    %c0_i32_0 = arith.constant 0 : i32
    %c0_i32_1 = arith.constant 0 : i32
    return %c0_i32, %c0_i32_0, %arg0 : i32, i32, i32
  }
  func.func @transform_1(%arg0: i32, %arg1: memref<1xi32, #tpu.memory_space<smem>>) -> (i32, i32) {
    %c0_i32 = arith.constant 0 : i32
    %c0_i32_0 = arith.constant 0 : i32
    %c0_i32_1 = arith.constant 0 : i32
    return %c0_i32, %c0_i32_0 : i32, i32
  }
  func.func @transform_2(%arg0: i32, %arg1: memref<1xi32, #tpu.memory_space<smem>>) -> (i32, i32, i32) {
    %c0_i32 = arith.constant 0 : i32
    %c0_i32_0 = arith.constant 0 : i32
    %c0_i32_1 = arith.constant 0 : i32
    return %arg0, %c0_i32, %c0_i32_0 : i32, i32, i32
  }
  func.func @transform_3(%arg0: i32, %arg1: memref<1xi32, #tpu.memory_space<smem>>) -> (i32, i32, i32) {
    %c0_i32 = arith.constant 0 : i32
    %c0_i32_0 = arith.constant 0 : i32
    %c0_i32_1 = arith.constant 0 : i32
    return %c0_i32, %c0_i32_0, %arg0 : i32, i32, i32
  }
  func.func @transform_4(%arg0: i32, %arg1: memref<1xi32, #tpu.memory_space<smem>>) -> (i32, i32) {
    %c0_i32 = arith.constant 0 : i32
    %c0_i32_0 = arith.constant 0 : i32
    return %c0_i32, %arg0 : i32, i32
  }
}

module attributes {stable_mosaic.version = 11 : i64} {
  func.func @_matmul_bias_kernel(%arg0: memref<24x256xf32, #tpu.memory_space<vmem>>, %arg1: memref<256x1024xbf16, #tpu.memory_space<vmem>>, %arg2: memref<1x1024xf32, #tpu.memory_space<vmem>>, %arg3: memref<24x1024xf32, #tpu.memory_space<vmem>>) attributes {dimension_semantics = [], scalar_prefetch = 0 : i64, scratch_operands = 0 : i64, tpu.core_type = #tpu.core_type<tc>} {
    %c0 = arith.constant 0 : index
    %c0_0 = arith.constant 0 : index
    %0 = vector.load %arg0[%c0, %c0_0] : memref<24x256xf32, #tpu.memory_space<vmem>>, vector<24x256xf32>
    %1 = arith.truncf %0 : vector<24x256xf32> to vector<24x256xbf16>
    %c0_1 = arith.constant 0 : index
    %c0_2 = arith.constant 0 : index
    %2 = vector.load %arg1[%c0_1, %c0_2] : memref<256x1024xbf16, #tpu.memory_space<vmem>>, vector<256x1024xbf16>
    %cst = arith.constant dense<0.000000e+00> : vector<24x1024xf32>
    %3 = tpu.matmul %1, %2, %cst {dimension_numbers = #tpu.dot_dimension_numbers<[1], [0], [0], [1], [0, 0, 1, 1], [], []>} : vector<24x256xbf16>, vector<256x1024xbf16>, vector<24x1024xf32> -> vector<24x1024xf32>
    %c0_3 = arith.constant 0 : index
    %c0_4 = arith.constant 0 : index
    %4 = vector.load %arg2[%c0_3, %c0_4] : memref<1x1024xf32, #tpu.memory_space<vmem>>, vector<1x1024xf32>
    %5 = vector.broadcast %4 : vector<1x1024xf32> to vector<24x1024xf32>
    %6 = arith.addf %3, %5 : vector<24x1024xf32>
    %c0_5 = arith.constant 0 : index
    %c0_6 = arith.constant 0 : index
    %7 = vector.load %arg3[%c0_5, %c0_6] : memref<24x1024xf32, #tpu.memory_space<vmem>>, vector<24x1024xf32>
    tpu.vector_store %arg3[%c0_5, %c0_6], %6 {strides = array<i32>} : memref<24x1024xf32, #tpu.memory_space<vmem>>, vector<24x1024xf32>,
    return
  }
}

module attributes {stable_mosaic.version = 11 : i64} {
  func.func @_bilstm_recurrence_kernel(%arg0: i32, %arg1: memref<1xi32, #tpu.memory_space<smem>>, %arg2: memref<12x2x512xf32, #tpu.memory_space<vmem>>, %arg3: memref<2x1xi32, #tpu.memory_space<vmem>>, %arg4: memref<1x128x512xbf16, #tpu.memory_space<vmem>>, %arg5: memref<12x2x128xf32, #tpu.memory_space<vmem>>, %arg6: memref<2x128xf32, #tpu.memory_space<vmem>>) attributes {dimension_semantics = [#tpu.dimension_semantics<parallel>], iteration_bounds = array<i64: 2>, scalar_prefetch = 1 : i64, scratch_operands = 0 : i64, tpu.core_type = #tpu.core_type<tc>, window_params = [{transform_indices = @transform_0, window_bounds = array<i64: 12, 2, 512>}, {pipeline_mode = #tpu.pipeline_mode<synchronous>, transform_indices = @transform_1, window_bounds = array<i64: 2, 1>}, {transform_indices = @transform_2, window_bounds = array<i64: 1, 128, 512>}, {transform_indices = @transform_3, window_bounds = array<i64: 12, 2, 128>}, {transform_indices = @transform_4, window_bounds = array<i64: 2, 128>}]} {
    %c0 = arith.constant 0 : index
    %0 = memref.load %arg1[%c0] : memref<1xi32, #tpu.memory_space<smem>>
    %c0_0 = arith.constant 0 : index
    %c0_1 = arith.constant 0 : index
    %c0_2 = arith.constant 0 : index
    %1 = vector.load %arg4[%c0_0, %c0_1, %c0_2] : memref<1x128x512xbf16, #tpu.memory_space<vmem>>, vector<1x128x512xbf16>
    %2 = vector.shape_cast %1 : vector<1x128x512xbf16> to vector<128x512xbf16>
    %c0_3 = arith.constant 0 : index
    %c0_4 = arith.constant 0 : index
    %3 = vector.load %arg3[%c0_3, %c0_4] : memref<2x1xi32, #tpu.memory_space<vmem>>, vector<2x1xi32>
    %cst = arith.constant 0.000000e+00 : f32
    %4 = vector.broadcast %cst : f32 to vector<12x2x128xf32>
    %c0_5 = arith.constant 0 : index
    %c0_6 = arith.constant 0 : index
    %c0_7 = arith.constant 0 : index
    %5 = vector.load %arg5[%c0_5, %c0_6, %c0_7] : memref<12x2x128xf32, #tpu.memory_space<vmem>>, vector<12x2x128xf32>
    tpu.vector_store %arg5[%c0_5, %c0_6, %c0_7], %4 {strides = array<i32>} : memref<12x2x128xf32, #tpu.memory_space<vmem>>, vector<12x2x128xf32>,
    %cst_8 = arith.constant 0.000000e+00 : f32
    %6 = vector.broadcast %cst_8 : f32 to vector<2x128xf32>
    %cst_9 = arith.constant 0.000000e+00 : f32
    %7 = vector.broadcast %cst_9 : f32 to vector<2x128xf32>
    %c0_i32 = arith.constant 0 : i32
    %8 = arith.subi %0, %c0_i32 : i32
    %9 = arith.addi %c0_i32, %8 : i32
    %c1_i32 = arith.constant 1 : i32
    %10:2 = scf.for %arg7 = %c0_i32 to %9 step %c1_i32 iter_args(%arg8 = %6, %arg9 = %7) -> (vector<2x128xf32>, vector<2x128xf32>)  : i32 {
      %c1_i32_12 = arith.constant 1 : i32
      %12 = arith.subi %0, %c1_i32_12 : i32
      %c2_i32 = arith.constant 2 : i32
      %13 = arith.muli %c2_i32, %arg7 : i32
      %14 = arith.subi %12, %13 : i32
      %15 = arith.muli %arg0, %14 : i32
      %16 = arith.addi %arg7, %15 : i32
      %17 = arith.index_cast %16 : i32 to index
      %c0_13 = arith.constant 0 : index
      %c0_14 = arith.constant 0 : index
      %18 = vector.load %arg2[%17, %c0_13, %c0_14] : memref<12x2x512xf32, #tpu.memory_space<vmem>>, vector<1x2x512xf32>
      %19 = vector.shape_cast %18 : vector<1x2x512xf32> to vector<2x512xf32>
      %20 = arith.truncf %arg8 : vector<2x128xf32> to vector<2x128xbf16>
      %cst_15 = arith.constant dense<0.000000e+00> : vector<2x512xf32>
      %21 = tpu.matmul %20, %2, %cst_15 {dimension_numbers = #tpu.dot_dimension_numbers<[1], [0], [0], [1], [0, 0, 1, 1], [], []>} : vector<2x128xbf16>, vector<128x512xbf16>, vector<2x512xf32> -> vector<2x512xf32>
      %22 = arith.addf %19, %21 : vector<2x512xf32>
      %23 = vector.extract_strided_slice %22 {offsets = [0, 0], sizes = [2, 128], strides = [1, 1]} : vector<2x512xf32> to vector<2x128xf32>
      %24 = arith.negf %23 : vector<2x128xf32>
      %25 = math.exp %24 : vector<2x128xf32>
      %cst_16 = arith.constant 1.000000e+00 : f32
      %26 = vector.broadcast %cst_16 : f32 to vector<2x128xf32>
      %27 = arith.addf %26, %25 : vector<2x128xf32>
      %28 = arith.divf %26, %27 : vector<2x128xf32>
      %29 = vector.extract_strided_slice %22 {offsets = [0, 128], sizes = [2, 128], strides = [1, 1]} : vector<2x512xf32> to vector<2x128xf32>
      %30 = arith.negf %29 : vector<2x128xf32>
      %31 = math.exp %30 : vector<2x128xf32>
      %cst_17 = arith.constant 1.000000e+00 : f32
      %32 = vector.broadcast %cst_17 : f32 to vector<2x128xf32>
      %33 = arith.addf %32, %31 : vector<2x128xf32>
      %34 = arith.divf %32, %33 : vector<2x128xf32>
      %35 = vector.extract_strided_slice %22 {offsets = [0, 256], sizes = [2, 128], strides = [1, 1]} : vector<2x512xf32> to vector<2x128xf32>
      %36 = math.tanh %35 : vector<2x128xf32>
      %37 = vector.extract_strided_slice %22 {offsets = [0, 384], sizes = [2, 128], strides = [1, 1]} : vector<2x512xf32> to vector<2x128xf32>
      %38 = arith.negf %37 : vector<2x128xf32>
      %39 = math.exp %38 : vector<2x128xf32>
      %cst_18 = arith.constant 1.000000e+00 : f32
      %40 = vector.broadcast %cst_18 : f32 to vector<2x128xf32>
      %41 = arith.addf %40, %39 : vector<2x128xf32>
      %42 = arith.divf %40, %41 : vector<2x128xf32>
      %43 = arith.mulf %34, %arg9 : vector<2x128xf32>
      %44 = arith.mulf %28, %36 : vector<2x128xf32>
      %45 = arith.addf %43, %44 : vector<2x128xf32>
      %46 = math.tanh %45 : vector<2x128xf32>
      %47 = arith.mulf %42, %46 : vector<2x128xf32>
      %48 = vector.broadcast %16 : i32 to vector<2x1xi32>
      %49 = arith.cmpi slt, %48, %3 : vector<2x1xi32>
      %50 = vector.shape_cast %49 : vector<2x1xi1> to vector<2x1xi1>
      %51 = vector.broadcast %50 : vector<2x1xi1> to vector<2x128xi1>
      %52 = arith.select %51, %47, %arg8 : vector<2x128xi1>, vector<2x128xf32>
      %53 = vector.shape_cast %49 : vector<2x1xi1> to vector<2x1xi1>
      %54 = vector.broadcast %53 : vector<2x1xi1> to vector<2x128xi1>
      %55 = arith.select %54, %45, %arg9 : vector<2x128xi1>, vector<2x128xf32>
      %cst_19 = arith.constant 0.000000e+00 : f32
      %56 = vector.broadcast %cst_19 : f32 to vector<2x128xf32>
      %57 = vector.shape_cast %49 : vector<2x1xi1> to vector<2x1xi1>
      %58 = vector.broadcast %57 : vector<2x1xi1> to vector<2x128xi1>
      %59 = arith.select %58, %47, %56 : vector<2x128xi1>, vector<2x128xf32>
      %60 = arith.index_cast %16 : i32 to index
      %c0_20 = arith.constant 0 : index
      %c0_21 = arith.constant 0 : index
      %61 = vector.load %arg5[%60, %c0_20, %c0_21] : memref<12x2x128xf32, #tpu.memory_space<vmem>>, vector<1x2x128xf32>
      %62 = vector.shape_cast %61 : vector<1x2x128xf32> to vector<2x128xf32>
      %63 = vector.shape_cast %59 : vector<2x128xf32> to vector<1x2x128xf32>
      tpu.vector_store %arg5[%60, %c0_20, %c0_21], %63 {strides = array<i32>} : memref<12x2x128xf32, #tpu.memory_space<vmem>>, vector<1x2x128xf32>,
      scf.yield %52, %55 : vector<2x128xf32>, vector<2x128xf32>
    }
    %c0_10 = arith.constant 0 : index
    %c0_11 = arith.constant 0 : index
    %11 = vector.load %arg6[%c0_10, %c0_11] : memref<2x128xf32, #tpu.memory_space<vmem>>, vector<2x128xf32>
    tpu.vector_store %arg6[%c0_10, %c0_11], %10#0 {strides = array<i32>} : memref<2x128xf32, #tpu.memory_space<vmem>>, vector<2x128xf32>,
    return
  }
  func.func @transform_0(%arg0: i32, %arg1: memref<1xi32, #tpu.memory_space<smem>>) -> (i32, i32, i32) {
    %c0_i32 = arith.constant 0 : i32
    %c0_i32_0 = arith.constant 0 : i32
    %c0_i32_1 = arith.constant 0 : i32
    return %c0_i32, %c0_i32_0, %arg0 : i32, i32, i32
  }
  func.func @transform_1(%arg0: i32, %arg1: memref<1xi32, #tpu.memory_space<smem>>) -> (i32, i32) {
    %c0_i32 = arith.constant 0 : i32
    %c0_i32_0 = arith.constant 0 : i32
    %c0_i32_1 = arith.constant 0 : i32
    return %c0_i32, %c0_i32_0 : i32, i32
  }
  func.func @transform_2(%arg0: i32, %arg1: memref<1xi32, #tpu.memory_space<smem>>) -> (i32, i32, i32) {
    %c0_i32 = arith.constant 0 : i32
    %c0_i32_0 = arith.constant 0 : i32
    %c0_i32_1 = arith.constant 0 : i32
    return %arg0, %c0_i32, %c0_i32_0 : i32, i32, i32
  }
  func.func @transform_3(%arg0: i32, %arg1: memref<1xi32, #tpu.memory_space<smem>>) -> (i32, i32, i32) {
    %c0_i32 = arith.constant 0 : i32
    %c0_i32_0 = arith.constant 0 : i32
    %c0_i32_1 = arith.constant 0 : i32
    return %c0_i32, %c0_i32_0, %arg0 : i32, i32, i32
  }
  func.func @transform_4(%arg0: i32, %arg1: memref<1xi32, #tpu.memory_space<smem>>) -> (i32, i32) {
    %c0_i32 = arith.constant 0 : i32
    %c0_i32_0 = arith.constant 0 : i32
    return %c0_i32, %arg0 : i32, i32
  }
}

module attributes {stable_mosaic.version = 11 : i64} {
  func.func @_matmul_bias_kernel(%arg0: memref<2x256xf32, #tpu.memory_space<vmem>>, %arg1: memref<256x8xbf16, #tpu.memory_space<vmem>>, %arg2: memref<1x8xf32, #tpu.memory_space<vmem>>, %arg3: memref<2x8xf32, #tpu.memory_space<vmem>>) attributes {dimension_semantics = [], scalar_prefetch = 0 : i64, scratch_operands = 0 : i64, tpu.core_type = #tpu.core_type<tc>} {
    %c0 = arith.constant 0 : index
    %c0_0 = arith.constant 0 : index
    %0 = vector.load %arg0[%c0, %c0_0] : memref<2x256xf32, #tpu.memory_space<vmem>>, vector<2x256xf32>
    %1 = arith.truncf %0 : vector<2x256xf32> to vector<2x256xbf16>
    %c0_1 = arith.constant 0 : index
    %c0_2 = arith.constant 0 : index
    %2 = vector.load %arg1[%c0_1, %c0_2] : memref<256x8xbf16, #tpu.memory_space<vmem>>, vector<256x8xbf16>
    %cst = arith.constant dense<0.000000e+00> : vector<2x8xf32>
    %3 = tpu.matmul %1, %2, %cst {dimension_numbers = #tpu.dot_dimension_numbers<[1], [0], [0], [1], [0, 0, 1, 1], [], []>} : vector<2x256xbf16>, vector<256x8xbf16>, vector<2x8xf32> -> vector<2x8xf32>
    %c0_3 = arith.constant 0 : index
    %c0_4 = arith.constant 0 : index
    %4 = vector.load %arg2[%c0_3, %c0_4] : memref<1x8xf32, #tpu.memory_space<vmem>>, vector<1x8xf32>
    %5 = vector.broadcast %4 : vector<1x8xf32> to vector<2x8xf32>
    %6 = arith.addf %3, %5 : vector<2x8xf32>
    %c0_5 = arith.constant 0 : index
    %c0_6 = arith.constant 0 : index
    %7 = vector.load %arg3[%c0_5, %c0_6] : memref<2x8xf32, #tpu.memory_space<vmem>>, vector<2x8xf32>
    tpu.vector_store %arg3[%c0_5, %c0_6], %6 {strides = array<i32>} : memref<2x8xf32, #tpu.memory_space<vmem>>, vector<2x8xf32>,
    return
  }
}

</mosaic_0001>

<llo_original>
// kernel: emoji_lstm_forward.5
$region0: #{emoji_lstm_forward.5}
  #allocation0 [shape = 'u32[]', space=smem, size = 0x4, offset = 0x4, fixed_abs, tag = 'smem constant byte address 0x4 - core index']
  #allocation1 [shape = 'u32[144,128]{1,0:T(1,128)}', space=vmem, size = 0x12000, scoped, tag = 'internal scratch']
  %s0 = inlined_call_operand.vmem [shape: f32[24,64], index: 0, kind: input, shape index: {}]
  %s1 = inlined_call_operand.vmem [shape: bf16[64,1024], index: 1, kind: input, shape index: {}]
  %s2 = inlined_call_operand.vmem [shape: f32[1,1024], index: 2, kind: input, shape index: {}]
  %s3 = inlined_call_operand.vmem [shape: f32[24,1024], index: 3, kind: output, shape index: {}]
  %s4 = sld [smem:[#allocation0]]
  $region22: #{emoji_lstm_forward.5} parent=0
    _
  %s6 = ssub.s32 1, %s4
  %s7 = scalar_select 0, %s6, %s4
  // Predicated region
  $region2: #{emoji_lstm_forward.5} parent=0 // pred_check
    _
  $region3: #{emoji_lstm_forward.5} parent=0 // pred_check_branch
    %9 = sbr.rel (0) target = $region5
  $region4: #{emoji_lstm_forward.5} parent=0 // pred_region
    _
  $region5: #{emoji_lstm_forward.5} parent=0 // pred_fallthru
    _
  // Predicated region
  $region6: #{emoji_lstm_forward.5} parent=0 // pred_check
    _
  $region7: #{emoji_lstm_forward.5} parent=0 // pred_check_branch
    %11 = sbr.rel (0) target = $region9
  $region8: #{emoji_lstm_forward.5} parent=0 // pred_region
    _
  $region9: #{emoji_lstm_forward.5} parent=0 // pred_fallthru
    _
  // Predicated region
  $region10: #{emoji_lstm_forward.5} parent=0 // pred_check
    _
  $region11: #{emoji_lstm_forward.5} parent=0 // pred_check_branch
    %13 = sbr.rel (0) target = $region13
  $region12: #{emoji_lstm_forward.5} parent=0 // pred_region
    _
  $region13: #{emoji_lstm_forward.5} parent=0 // pred_fallthru
    _
  %v15 = vld [vmem:[%s0] sm:$0xff]
  %v16 = vld [vmem:[%s0 + $0x8] sm:$0xff]
  %v17 = vld [vmem:[%s0 + $0x10] sm:$0xff]
  %v18 = vpack.c.bf16 %v16, %v15
  %v19 = vpack.c.bf16 %v17, %v17
  %v20 = vld [vmem:[%s1] sm:$0xff]
  %v21 = vld [vmem:[%s1 + $0x8] sm:$0xff]
  %v22 = vld [vmem:[%s1 + $0x10] sm:$0xff]
  %v23 = vld [vmem:[%s1 + $0x18] sm:$0xff]
  %v24 = vld [vmem:[%s1 + $0x20] sm:$0xff]
  %v25 = vld [vmem:[%s1 + $0x28] sm:$0xff]
  %v26 = vld [vmem:[%s1 + $0x30] sm:$0xff]
  %v27 = vld [vmem:[%s1 + $0x38] sm:$0xff]
  %v28 = vld [vmem:[%s1 + $0x40] sm:$0xff]
  %v29 = vld [vmem:[%s1 + $0x48] sm:$0xff]
  %v30 = vld [vmem:[%s1 + $0x50] sm:$0xff]
  %v31 = vld [vmem:[%s1 + $0x58] sm:$0xff]
  %v32 = vld [vmem:[%s1 + $0x60] sm:$0xff]
  %v33 = vld [vmem:[%s1 + $0x68] sm:$0xff]
  %v34 = vld [vmem:[%s1 + $0x70] sm:$0xff]
  %v35 = vld [vmem:[%s1 + $0x78] sm:$0xff]
  %v36 = vld [vmem:[%s1 + $0x80] sm:$0xff]
  %v37 = vld [vmem:[%s1 + $0x88] sm:$0xff]
  %v38 = vld [vmem:[%s1 + $0x90] sm:$0xff]
  %v39 = vld [vmem:[%s1 + $0x98] sm:$0xff]
  %v40 = vld [vmem:[%s1 + $0xa0] sm:$0xff]
  %v41 = vld [vmem:[%s1 + $0xa8] sm:$0xff]
  %v42 = vld [vmem:[%s1 + $0xb0] sm:$0xff]
  %v43 = vld [vmem:[%s1 + $0xb8] sm:$0xff]
  %v44 = vld [vmem:[%s1 + $0xc0] sm:$0xff]
  %v45 = vld [vmem:[%s1 + $0xc8] sm:$0xff]
  %v46 = vld [vmem:[%s1 + $0xd0] sm:$0xff]
  %v47 = vld [vmem:[%s1 + $0xd8] sm:$0xff]
  %v48 = vld [vmem:[%s1 + $0xe0] sm:$0xff]
  %v49 = vld [vmem:[%s1 + $0xe8] sm:$0xff]
  %v50 = vld [vmem:[%s1 + $0xf0] sm:$0xff]
  %v51 = vld [vmem:[%s1 + $0xf8] sm:$0xff]
  %v52 = vld [vmem:[%s2] sm:$0xff]
  %v54 = vlaneseq
  %v55 = vshrl.u32 %v54, 7
  %v56 = vsub.s32 0, %v55
  %v57 = vrot.slane %v52, %v56
  %v58 = vlaneseq
  %v59 = vshrl.u32 %v58, 7
  %v60 = vsub.s32 1, %v59
  %v61 = vrot.slane %v52, %v60
  %v62 = vlaneseq
  %v63 = vshrl.u32 %v62, 7
  %v64 = vsub.s32 2, %v63
  %v65 = vrot.slane %v52, %v64
  %v66 = vlaneseq
  %v67 = vshrl.u32 %v66, 7
  %v68 = vsub.s32 3, %v67
  %v69 = vrot.slane %v52, %v68
  %v70 = vlaneseq
  %v71 = vshrl.u32 %v70, 7
  %v72 = vsub.s32 4, %v71
  %v73 = vrot.slane %v52, %v72
  %v74 = vlaneseq
  %v75 = vshrl.u32 %v74, 7
  %v76 = vsub.s32 5, %v75
  %v77 = vrot.slane %v52, %v76
  %v78 = vlaneseq
  %v79 = vshrl.u32 %v78, 7
  %v80 = vsub.s32 6, %v79
  %v81 = vrot.slane %v52, %v80
  %v82 = vlaneseq
  %v83 = vshrl.u32 %v82, 7
  %v84 = vsub.s32 7, %v83
  %v85 = vrot.slane %v52, %v84
  %v126 = vunpack.c.l.b16 %v20
  %v127 = vunpack.c.h.b16 %v20
  %v128 = vunpack.c.l.b16 %v21
  %v129 = vunpack.c.h.b16 %v21
  %v130 = vunpack.c.l.b16 %v22
  %v131 = vunpack.c.h.b16 %v22
  %v132 = vunpack.c.l.b16 %v23
  %v133 = vunpack.c.h.b16 %v23
  %v134 = vunpack.c.l.b16 %v24
  %v135 = vunpack.c.h.b16 %v24
  %v136 = vunpack.c.l.b16 %v25
  %v137 = vunpack.c.h.b16 %v25
  %v138 = vunpack.c.l.b16 %v26
  %v139 = vunpack.c.h.b16 %v26
  %v140 = vunpack.c.l.b16 %v27
  %v141 = vunpack.c.h.b16 %v27
  %v142 = vunpack.c.l.b16 %v28
  %v143 = vunpack.c.h.b16 %v28
  %v144 = vunpack.c.l.b16 %v29
  %v145 = vunpack.c.h.b16 %v29
  %v146 = vunpack.c.l.b16 %v30
  %v147 = vunpack.c.h.b16 %v30
  %v148 = vunpack.c.l.b16 %v31
  %v149 = vunpack.c.h.b16 %v31
  %v150 = vunpack.c.l.b16 %v32
  %v151 = vunpack.c.h.b16 %v32
  %v152 = vunpack.c.l.b16 %v33
  %v153 = vunpack.c.h.b16 %v33
  %v154 = vunpack.c.l.b16 %v34
  %v155 = vunpack.c.h.b16 %v34
  %v156 = vunpack.c.l.b16 %v35
  %v157 = vunpack.c.h.b16 %v35
  %v158 = vunpack.c.l.b16 %v36
  %v159 = vunpack.c.h.b16 %v36
  %v160 = vunpack.c.l.b16 %v37
  %v161 = vunpack.c.h.b16 %v37
  %v162 = vunpack.c.l.b16 %v38
  %v163 = vunpack.c.h.b16 %v38
  %v164 = vunpack.c.l.b16 %v39
  %v165 = vunpack.c.h.b16 %v39
  %v166 = vunpack.c.l.b16 %v40
  %v167 = vunpack.c.h.b16 %v40
  %v168 = vunpack.c.l.b16 %v41
  %v169 = vunpack.c.h.b16 %v41
  %v170 = vunpack.c.l.b16 %v42
  %v171 = vunpack.c.h.b16 %v42
  %v172 = vunpack.c.l.b16 %v43
  %v173 = vunpack.c.h.b16 %v43
  %v174 = vunpack.c.l.b16 %v44
  %v175 = vunpack.c.h.b16 %v44
  %v176 = vunpack.c.l.b16 %v45
  %v177 = vunpack.c.h.b16 %v45
  %v178 = vunpack.c.l.b16 %v46
  %v179 = vunpack.c.h.b16 %v46
  %v180 = vunpack.c.l.b16 %v47
  %v181 = vunpack.c.h.b16 %v47
  %v182 = vunpack.c.l.b16 %v48
  %v183 = vunpack.c.h.b16 %v48
  %v184 = vunpack.c.l.b16 %v49
  %v185 = vunpack.c.h.b16 %v49
  %v186 = vunpack.c.l.b16 %v50
  %v187 = vunpack.c.h.b16 %v50
  %v188 = vunpack.c.l.b16 %v51
  %v189 = vunpack.c.h.b16 %v51
  %v190 = vpack.c.b16 %v134, %v126
  %v191 = vpack.c.b16 %v135, %v127
  %v192 = vpack.c.b16 %v136, %v128
  %v193 = vpack.c.b16 %v137, %v129
  %v194 = vpack.c.b16 %v138, %v130
  %v195 = vpack.c.b16 %v139, %v131
  %v196 = vpack.c.b16 %v140, %v132
  %v197 = vpack.c.b16 %v141, %v133
  %v198 = vpack.c.b16 %v150, %v142
  %v199 = vpack.c.b16 %v151, %v143
  %v200 = vpack.c.b16 %v152, %v144
  %v201 = vpack.c.b16 %v153, %v145
  %v202 = vpack.c.b16 %v154, %v146
  %v203 = vpack.c.b16 %v155, %v147
  %v204 = vpack.c.b16 %v156, %v148
  %v205 = vpack.c.b16 %v157, %v149
  %v206 = vpack.c.b16 %v166, %v158
  %v207 = vpack.c.b16 %v167, %v159
  %v208 = vpack.c.b16 %v168, %v160
  %v209 = vpack.c.b16 %v169, %v161
  %v210 = vpack.c.b16 %v170, %v162
  %v211 = vpack.c.b16 %v171, %v163
  %v212 = vpack.c.b16 %v172, %v164
  %v213 = vpack.c.b16 %v173, %v165
  %v214 = vpack.c.b16 %v182, %v174
  %v215 = vpack.c.b16 %v183, %v175
  %v216 = vpack.c.b16 %v184, %v176
  %v217 = vpack.c.b16 %v185, %v177
  %v218 = vpack.c.b16 %v186, %v178
  %v219 = vpack.c.b16 %v187, %v179
  %v220 = vpack.c.b16 %v188, %v180
  %v221 = vpack.c.b16 %v189, %v181
  %vm254 = vcmask 523264
  %v256 = vsel %vm254, %v18, 0
  %v259 = vsel %vm254, %v19, 0
  %261 = vmatprep.subr.bf16.mxu0 %v191
  %262 = vmatpush1.bf16.msra.mxu0 %v190
  %263 = vmatprep.subr.bf16.mxu0 %v199
  %264 = vmatpush1.bf16.msra.mxu0 %v198
  %265 = vmatprep.subr.bf16.mxu0 %v207
  %266 = vmatpush1.bf16.msra.mxu0 %v206
  %267 = vmatprep.subr.bf16.mxu0 %v215
  %268 = vmatpush1.bf16.msra.mxu0 %v214
  %269 = vmatprep.subr.bf16.mxu0 0
  %270 = vmatpush1.bf16.msra.mxu0 0
  %271 = vmatprep.subr.bf16.mxu0 0
  %272 = vmatpush1.bf16.msra.mxu0 0
  %273 = vmatprep.subr.bf16.mxu0 0
  %274 = vmatpush1.bf16.msra.mxu0 0
  %275 = vmatprep.subr.bf16.mxu0 0
  %276 = vmatpush1.bf16.msra.mxu0 0
  %277 = vmatprep.subr.bf16.mxu0 0
  %278 = vmatpush1.bf16.msra.mxu0 0
  %279 = vmatprep.subr.bf16.mxu0 0
  %280 = vmatpush1.bf16.msra.mxu0 0
  %281 = vmatprep.subr.bf16.mxu0 0
  %282 = vmatpush1.bf16.msra.mxu0 0
  %283 = vmatprep.subr.bf16.mxu0 0
  %284 = vmatpush1.bf16.msra.mxu0 0
  %285 = vmatprep.subr.bf16.mxu0 0
  %286 = vmatpush1.bf16.msra.mxu0 0
  %287 = vmatprep.subr.bf16.mxu0 0
  %288 = vmatpush1.bf16.msra.mxu0 0
  %289 = vmatprep.subr.bf16.mxu0 0
  %290 = vmatpush1.bf16.msra.mxu0 0
  %291 = vmatprep.subr.bf16.mxu0 0
  %292 = vmatpush1.bf16.msra.mxu0 0
  %293 = vmatprep.mubr.bf16.mxu0 0
  %294 = vmatmul.mubr.bf16.gmra.mrb[0].mxu0 %v256
  %v295 = vpop.f32.mrb[0].mxu0
  %v296 = vadd.f32 %v57, %v295
  %v297 = vpop.f32.mrb[0].mxu0
  %v298 = vadd.f32 %v61, %v297
  %v299 = vpop.f32.mrb[0].mxu0
  %v300 = vadd.f32 %v57, %v299
  %v301 = vpop.f32.mrb[0].mxu0
  %v302 = vadd.f32 %v61, %v301
  %303 = vmatprep.mubr.bf16.mxu0 0
  %304 = vmatmul.mubr.bf16.gmra.mrb[0].mxu0 %v259
  %v305 = vpop.f32.mrb[0].mxu0
  %v306 = vadd.f32 %v57, %v305
  %v307 = vpop.f32.mrb[0].mxu0
  %v308 = vadd.f32 %v61, %v307
  %v309 = vpop.f32.mrb[0].mxu0
  %v310 = vpop.f32.mrb[0].mxu0
  %311 = vdwg.mxu0
  %312 = vmatprep.subr.bf16.mxu0 %v193
  %313 = vmatpush1.bf16.msra.mxu0 %v192
  %314 = vmatprep.subr.bf16.mxu0 %v201
  %315 = vmatpush1.bf16.msra.mxu0 %v200
  %316 = vmatprep.subr.bf16.mxu0 %v209
  %317 = vmatpush1.bf16.msra.mxu0 %v208
  %318 = vmatprep.subr.bf16.mxu0 %v217
  %319 = vmatpush1.bf16.msra.mxu0 %v216
  %320 = vmatprep.subr.bf16.mxu0 0
  %321 = vmatpush1.bf16.msra.mxu0 0
  %322 = vmatprep.subr.bf16.mxu0 0
  %323 = vmatpush1.bf16.msra.mxu0 0
  %324 = vmatprep.subr.bf16.mxu0 0
  %325 = vmatpush1.bf16.msra.mxu0 0
  %326 = vmatprep.subr.bf16.mxu0 0
  %327 = vmatpush1.bf16.msra.mxu0 0
  %328 = vmatprep.subr.bf16.mxu0 0
  %329 = vmatpush1.bf16.msra.mxu0 0
  %330 = vmatprep.subr.bf16.mxu0 0
  %331 = vmatpush1.bf16.msra.mxu0 0
  %332 = vmatprep.subr.bf16.mxu0 0
  %333 = vmatpush1.bf16.msra.mxu0 0
  %334 = vmatprep.subr.bf16.mxu0 0
  %335 = vmatpush1.bf16.msra.mxu0 0
  %336 = vmatprep.subr.bf16.mxu0 0
  %337 = vmatpush1.bf16.msra.mxu0 0
  %338 = vmatprep.subr.bf16.mxu0 0
  %339 = vmatpush1.bf16.msra.mxu0 0
  %340 = vmatprep.subr.bf16.mxu0 0
  %341 = vmatpush1.bf16.msra.mxu0 0
  %342 = vmatprep.subr.bf16.mxu0 0
  %343 = vmatpush1.bf16.msra.mxu0 0
  %344 = vmatprep.mubr.bf16.mxu0 0
  %345 = vmatmul.mubr.bf16.gmra.mrb[0].mxu0 %v256
  %v346 = vpop.f32.mrb[0].mxu0
  %v347 = vadd.f32 %v65, %v346
  %v348 = vpop.f32.mrb[0].mxu0
  %v349 = vadd.f32 %v69, %v348
  %v350 = vpop.f32.mrb[0].mxu0
  %v351 = vadd.f32 %v65, %v350
  %v352 = vpop.f32.mrb[0].mxu0
  %v353 = vadd.f32 %v69, %v352
  %354 = vmatprep.mubr.bf16.mxu0 0
  %355 = vmatmul.mubr.bf16.gmra.mrb[0].mxu0 %v259
  %v356 = vpop.f32.mrb[0].mxu0
  %v357 = vadd.f32 %v65, %v356
  %v358 = vpop.f32.mrb[0].mxu0
  %v359 = vadd.f32 %v69, %v358
  %v360 = vpop.f32.mrb[0].mxu0
  %v361 = vpop.f32.mrb[0].mxu0
  %362 = vdwg.mxu0
  %363 = vmatprep.subr.bf16.mxu0 %v195
  %364 = vmatpush1.bf16.msra.mxu0 %v194
  %365 = vmatprep.subr.bf16.mxu0 %v203
  %366 = vmatpush1.bf16.msra.mxu0 %v202
  %367 = vmatprep.subr.bf16.mxu0 %v211
  %368 = vmatpush1.bf16.msra.mxu0 %v210
  %369 = vmatprep.subr.bf16.mxu0 %v219
  %370 = vmatpush1.bf16.msra.mxu0 %v218
  %371 = vmatprep.subr.bf16.mxu0 0
  %372 = vmatpush1.bf16.msra.mxu0 0
  %373 = vmatprep.subr.bf16.mxu0 0
  %374 = vmatpush1.bf16.msra.mxu0 0
  %375 = vmatprep.subr.bf16.mxu0 0
  %376 = vmatpush1.bf16.msra.mxu0 0
  %377 = vmatprep.subr.bf16.mxu0 0
  %378 = vmatpush1.bf16.msra.mxu0 0
  %379 = vmatprep.subr.bf16.mxu0 0
  %380 = vmatpush1.bf16.msra.mxu0 0
  %381 = vmatprep.subr.bf16.mxu0 0
  %382 = vmatpush1.bf16.msra.mxu0 0
  %383 = vmatprep.subr.bf16.mxu0 0
  %384 = vmatpush1.bf16.msra.mxu0 0
  %385 = vmatprep.subr.bf16.mxu0 0
  %386 = vmatpush1.bf16.msra.mxu0 0
  %387 = vmatprep.subr.bf16.mxu0 0
  %388 = vmatpush1.bf16.msra.mxu0 0
  %389 = vmatprep.subr.bf16.mxu0 0
  %390 = vmatpush1.bf16.msra.mxu0 0
  %391 = vmatprep.subr.bf16.mxu0 0
  %392 = vmatpush1.bf16.msra.mxu0 0
  %393 = vmatprep.subr.bf16.mxu0 0
  %394 = vmatpush1.bf16.msra.mxu0 0
  %395 = vmatprep.mubr.bf16.mxu0 0
  %396 = vmatmul.mubr.bf16.gmra.mrb[0].mxu0 %v256
  %v397 = vpop.f32.mrb[0].mxu0
  %v398 = vadd.f32 %v73, %v397
  %v399 = vpop.f32.mrb[0].mxu0
  %v400 = vadd.f32 %v77, %v399
  %v401 = vpop.f32.mrb[0].mxu0
  %v402 = vadd.f32 %v73, %v401
  %v403 = vpop.f32.mrb[0].mxu0
  %v404 = vadd.f32 %v77, %v403
  %405 = vmatprep.mubr.bf16.mxu0 0
  %406 = vmatmul.mubr.bf16.gmra.mrb[0].mxu0 %v259
  %v407 = vpop.f32.mrb[0].mxu0
  %v408 = vadd.f32 %v73, %v407
  %v409 = vpop.f32.mrb[0].mxu0
  %v410 = vadd.f32 %v77, %v409
  %v411 = vpop.f32.mrb[0].mxu0
  %v412 = vpop.f32.mrb[0].mxu0
  %413 = vdwg.mxu0
  %414 = vmatprep.subr.bf16.mxu0 %v197
  %415 = vmatpush1.bf16.msra.mxu0 %v196
  %416 = vmatprep.subr.bf16.mxu0 %v205
  %417 = vmatpush1.bf16.msra.mxu0 %v204
  %418 = vmatprep.subr.bf16.mxu0 %v213
  %419 = vmatpush1.bf16.msra.mxu0 %v212
  %420 = vmatprep.subr.bf16.mxu0 %v221
  %421 = vmatpush1.bf16.msra.mxu0 %v220
  %422 = vmatprep.subr.bf16.mxu0 0
  %423 = vmatpush1.bf16.msra.mxu0 0
  %424 = vmatprep.subr.bf16.mxu0 0
  %425 = vmatpush1.bf16.msra.mxu0 0
  %426 = vmatprep.subr.bf16.mxu0 0
  %427 = vmatpush1.bf16.msra.mxu0 0
  %428 = vmatprep.subr.bf16.mxu0 0
  %429 = vmatpush1.bf16.msra.mxu0 0
  %430 = vmatprep.subr.bf16.mxu0 0
  %431 = vmatpush1.bf16.msra.mxu0 0
  %432 = vmatprep.subr.bf16.mxu0 0
  %433 = vmatpush1.bf16.msra.mxu0 0
  %434 = vmatprep.subr.bf16.mxu0 0
  %435 = vmatpush1.bf16.msra.mxu0 0
  %436 = vmatprep.subr.bf16.mxu0 0
  %437 = vmatpush1.bf16.msra.mxu0 0
  %438 = vmatprep.subr.bf16.mxu0 0
  %439 = vmatpush1.bf16.msra.mxu0 0
  %440 = vmatprep.subr.bf16.mxu0 0
  %441 = vmatpush1.bf16.msra.mxu0 0
  %442 = vmatprep.subr.bf16.mxu0 0
  %443 = vmatpush1.bf16.msra.mxu0 0
  %444 = vmatprep.subr.bf16.mxu0 0
  %445 = vmatpush1.bf16.msra.mxu0 0
  %446 = vmatprep.mubr.bf16.mxu0 0
  %447 = vmatmul.mubr.bf16.gmra.mrb[0].mxu0 %v256
  %v448 = vpop.f32.mrb[0].mxu0
  %v449 = vadd.f32 %v81, %v448
  %v450 = vpop.f32.mrb[0].mxu0
  %v451 = vadd.f32 %v85, %v450
  %v452 = vpop.f32.mrb[0].mxu0
  %v453 = vadd.f32 %v81, %v452
  %v454 = vpop.f32.mrb[0].mxu0
  %v455 = vadd.f32 %v85, %v454
  %456 = vmatprep.mubr.bf16.mxu0 0
  %457 = vmatmul.mubr.bf16.gmra.mrb[0].mxu0 %v259
  %v458 = vpop.f32.mrb[0].mxu0
  %v459 = vadd.f32 %v81, %v458
  %v460 = vpop.f32.mrb[0].mxu0
  %v461 = vadd.f32 %v85, %v460
  %v462 = vpop.f32.mrb[0].mxu0
  %v463 = vpop.f32.mrb[0].mxu0
  %464 = vdwg.mxu0
  %465 = vst [vmem:[%s3] sm:$0xff] %v296
  %466 = vst [vmem:[%s3 + $0x8] sm:$0xff] %v298
  %467 = vst [vmem:[%s3 + $0x10] sm:$0xff] %v347
  %468 = vst [vmem:[%s3 + $0x18] sm:$0xff] %v349
  %469 = vst [vmem:[%s3 + $0x20] sm:$0xff] %v398
  %470 = vst [vmem:[%s3 + $0x28] sm:$0xff] %v400
  %471 = vst [vmem:[%s3 + $0x30] sm:$0xff] %v449
  %472 = vst [vmem:[%s3 + $0x38] sm:$0xff] %v451
  %473 = vst [vmem:[%s3 + $0x40] sm:$0xff] %v300
  %474 = vst [vmem:[%s3 + $0x48] sm:$0xff] %v302
  %475 = vst [vmem:[%s3 + $0x50] sm:$0xff] %v351
  %476 = vst [vmem:[%s3 + $0x58] sm:$0xff] %v353
  %477 = vst [vmem:[%s3 + $0x60] sm:$0xff] %v402
  %478 = vst [vmem:[%s3 + $0x68] sm:$0xff] %v404
  %479 = vst [vmem:[%s3 + $0x70] sm:$0xff] %v453
  %480 = vst [vmem:[%s3 + $0x78] sm:$0xff] %v455
  %481 = vst [vmem:[%s3 + $0x80] sm:$0xff] %v306
  %482 = vst [vmem:[%s3 + $0x88] sm:$0xff] %v308
  %483 = vst [vmem:[%s3 + $0x90] sm:$0xff] %v357
  %484 = vst [vmem:[%s3 + $0x98] sm:$0xff] %v359
  %485 = vst [vmem:[%s3 + $0xa0] sm:$0xff] %v408
  %486 = vst [vmem:[%s3 + $0xa8] sm:$0xff] %v410
  %487 = vst [vmem:[%s3 + $0xb0] sm:$0xff] %v459
  %488 = vst [vmem:[%s3 + $0xb8] sm:$0xff] %v461
  // Predicated region
  $region14: #{emoji_lstm_forward.5} parent=0 // pred_check
    _
  $region15: #{emoji_lstm_forward.5} parent=0 // pred_check_branch
    %490 = sbr.rel (0) target = $region17
  $region16: #{emoji_lstm_forward.5} parent=0 // pred_region
    _
  $region17: #{emoji_lstm_forward.5} parent=0 // pred_fallthru
    _
  // Predicated region
  $region18: #{emoji_lstm_forward.5} parent=0 // pred_check
    _
  $region19: #{emoji_lstm_forward.5} parent=0 // pred_check_branch
    %492 = sbr.rel (0) target = $region21
  $region20: #{emoji_lstm_forward.5} parent=0 // pred_region
    _
  $region21: #{emoji_lstm_forward.5} parent=0 // pred_fallthru
    _

// kernel: emoji_lstm_forward.6
$region0: #{emoji_lstm_forward.6}
  #allocation0 [shape = 'u32[]', space=smem, size = 0x4, offset = 0x4, fixed_abs, tag = 'smem constant byte address 0x4 - core index']
  #allocation1 [shape = 'u32[144,128]{1,0:T(1,128)}', space=vmem, size = 0x12000, scoped, tag = 'internal scratch']
  #allocation2 [shape = 's32[1]{0}', space=sflag, size = 0x4, scoped, tag = 'scoped memory for emoji_lstm_forward.6']
  #allocation3 [shape = 's32[1]{0:T(128)S(6)}', space=smem, size = 0x200, scoped, tag = 'prefetched SMEM operand 0']
  %s0 = inlined_call_operand.<no memory space> [shape: s32[1], index: 0, kind: input, shape index: {}]
  %s1 = inlined_call_operand.vmem [shape: f32[12,2,1024], index: 1, kind: input, shape index: {}]
  %s2 = inlined_call_operand.vmem [shape: s32[2,1], index: 2, kind: input, shape index: {}]
  %s3 = inlined_call_operand.vmem [shape: bf16[2,128,512], index: 3, kind: input, shape index: {}]
  %s4 = inlined_call_operand.vmem [shape: f32[12,2,256], index: 4, kind: output, shape index: {0}]
  %s5 = inlined_call_operand.hbm [shape: f32[2,256], index: 5, kind: output, shape index: {1}]
  %6 = xla_tuple %s4, %s5
  %s7 = sld [smem:[#allocation0]]
  $region135: #{emoji_lstm_forward.6} parent=0
    _
  %s9 = ssub.s32 1, %s7
  %s10 = scalar_select 0, %s9, %s7
  %11 = sst [smem:[#allocation3]] %s0
  $region1: #{emoji_lstm_forward.6} parent=0
    #allocation4 [shape = 'u8[98304]{0}', space=vmem, size = 0x18000, scoped, tag = 'input window, operand 1']
    #allocation5 [shape = 'u8[24576]{0}', space=vmem, size = 0x6000, scoped, tag = 'output window, operand 0']
    #allocation6 [shape = 'u8[2048]{0}', space=vmem, size = 0x800, scoped, tag = 'output window, operand 1']
    #allocation7 [shape = 's32[2]{0}', space=sflag, size = 0x8, scoped, tag = 'scoped memory for emoji_lstm_forward.6']
    %12 = vsyncpa [#allocation7], 0
    %s13 = scalar_lea.sflag [#allocation7], 1
    %14 = vsyncpa %s13, 0
    loop: start=0, step=1, limit=4
    $region2: #{emoji_lstm_forward.6} parent=1 // loop_pre_header
      _
    $region3: #{emoji_lstm_forward.6} parent=1 // loop_header
      %s16 = sphi 0, %s20
      %p17 = scmp.ge.s32.totalorder %s16, 4
      %s26 = sphi 0, %s28
      %s29 = sphi 0, %s26
      %s30 = sphi 0, %s29
      %s46 = sphi 0, %s30
      %s50 = sphi 0, %s50
      %s52 = sphi 0, %s50
      %s53 = sphi 0, %s52
      %s67 = sphi 0, %s53
      %s73 = sphi 0, %s75
      %s76 = sphi 0, %s73
      %s77 = sphi 0, %s76
      %s93 = sphi 0, %s77
      %s99 = sphi 0, %s101
      %s102 = sphi 0, %s99
      %s103 = sphi 0, %s102
      %s119 = sphi 0, %s103
      %s125 = sphi 0, %s127
      %s128 = sphi 0, %s125
      %s129 = sphi 0, %s128
      %s145 = sphi 0, %s129
    $region4: #{emoji_lstm_forward.6} parent=1 // loop_header_branch
      %19 = sbr.rel (%p17) target = $region8
    $region5: #{emoji_lstm_forward.6} parent=1 // loop_body
      %s21 = ssub.s32 %s16, 1
      %s22 = ssub.s32 %s16, 2
      %s23 = sadd.s32 %s16, 1
      %s24 = ssub.s32 %s16, %s23
      %p25 = scmp.eq.s32.totalorder %s24, 0
      %s27 = sadd.s32 %s26, 1
      %s28 = scalar_select %p25, %s26, %s27
      %p31 = pneg %p25
      %p32 = scmp.eq.s32.totalorder %s16, 1
      %p33 = por %p31, %p32
      %p34 = scmp.ne.s32.totalorder %s26, %s29
      %p35 = scmp.eq.s32.totalorder %s16, 0
      %p36 = por %p34, %p35
      %p37 = scmp.ne.s32.totalorder %s26, %s29
      %p38 = scmp.eq.s32.totalorder %s21, 1
      %p39 = por %p37, %p38
      %p40 = scmp.ne.s32.totalorder %s29, %s30
      %p41 = scmp.eq.s32.totalorder %s21, 0
      %p42 = por %p40, %p41
      %p43 = scmp.ne.s32.totalorder %s29, %s30
      %p44 = scmp.eq.s32.totalorder %s22, 1
      %p45 = por %p43, %p44
      %p47 = scmp.ne.s32.totalorder %s30, %s46
      %p48 = scmp.eq.s32.totalorder %s22, 0
      %p49 = por %p47, %p48
      %s51 = sadd.s32 %s50, 1
      %p54 = scmp.eq.s32.totalorder %s16, 1
      %p55 = scmp.ne.s32.totalorder %s50, %s52
      %p56 = scmp.eq.s32.totalorder %s16, 0
      %p57 = por %p55, %p56
      %p58 = scmp.ne.s32.totalorder %s50, %s52
      %p59 = scmp.eq.s32.totalorder %s21, 1
      %p60 = por %p58, %p59
      %p61 = scmp.ne.s32.totalorder %s52, %s53
      %p62 = scmp.eq.s32.totalorder %s21, 0
      %p63 = por %p61, %p62
      %p64 = scmp.ne.s32.totalorder %s52, %s53
      %p65 = scmp.eq.s32.totalorder %s22, 1
      %p66 = por %p64, %p65
      %p68 = scmp.ne.s32.totalorder %s53, %s67
      %p69 = scmp.eq.s32.totalorder %s22, 0
      %p70 = por %p68, %p69
      %s71 = ssub.s32 %s16, %s23
      %p72 = scmp.eq.s32.totalorder %s71, 0
      %s74 = sadd.s32 %s73, 1
      %s75 = scalar_select %p72, %s73, %s74
      %p78 = pneg %p72
      %p79 = scmp.eq.s32.totalorder %s16, 1
      %p80 = por %p78, %p79
      %p81 = scmp.ne.s32.totalorder %s73, %s76
      %p82 = scmp.eq.s32.totalorder %s16, 0
      %p83 = por %p81, %p82
      %p84 = scmp.ne.s32.totalorder %s73, %s76
      %p85 = scmp.eq.s32.totalorder %s21, 1
      %p86 = por %p84, %p85
      %p87 = scmp.ne.s32.totalorder %s76, %s77
      %p88 = scmp.eq.s32.totalorder %s21, 0
      %p89 = por %p87, %p88
      %p90 = scmp.ne.s32.totalorder %s76, %s77
      %p91 = scmp.eq.s32.totalorder %s22, 1
      %p92 = por %p90, %p91
      %p94 = scmp.ne.s32.totalorder %s77, %s93
      %p95 = scmp.eq.s32.totalorder %s22, 0
      %p96 = por %p94, %p95
      %s97 = ssub.s32 %s16, %s23
      %p98 = scmp.eq.s32.totalorder %s97, 0
      %s100 = sadd.s32 %s99, 1
      %s101 = scalar_select %p98, %s99, %s100
      %p104 = pneg %p98
      %p105 = scmp.eq.s32.totalorder %s16, 1
      %p106 = por %p104, %p105
      %p107 = scmp.ne.s32.totalorder %s99, %s102
      %p108 = scmp.eq.s32.totalorder %s16, 0
      %p109 = por %p107, %p108
      %p110 = scmp.ne.s32.totalorder %s99, %s102
      %p111 = scmp.eq.s32.totalorder %s21, 1
      %p112 = por %p110, %p111
      %p113 = scmp.ne.s32.totalorder %s102, %s103
      %p114 = scmp.eq.s32.totalorder %s21, 0
      %p115 = por %p113, %p114
      %p116 = scmp.ne.s32.totalorder %s102, %s103
      %p117 = scmp.eq.s32.totalorder %s22, 1
      %p118 = por %p116, %p117
      %p120 = scmp.ne.s32.totalorder %s103, %s119
      %p121 = scmp.eq.s32.totalorder %s22, 0
      %p122 = por %p120, %p121
      %s123 = ssub.s32 %s16, %s23
      %p124 = scmp.eq.s32.totalorder %s123, 0
      %s126 = sadd.s32 %s125, 1
      %s127 = scalar_select %p124, %s125, %s126
      %p130 = pneg %p124
      %p131 = scmp.eq.s32.totalorder %s16, 1
      %p132 = por %p130, %p131
      %p133 = scmp.ne.s32.totalorder %s125, %s128
      %p134 = scmp.eq.s32.totalorder %s16, 0
      %p135 = por %p133, %p134
      %p136 = scmp.ne.s32.totalorder %s125, %s128
      %p137 = scmp.eq.s32.totalorder %s21, 1
      %p138 = por %p136, %p137
      %p139 = scmp.ne.s32.totalorder %s128, %s129
      %p140 = scmp.eq.s32.totalorder %s21, 0
      %p141 = por %p139, %p140
      %p142 = scmp.ne.s32.totalorder %s128, %s129
      %p143 = scmp.eq.s32.totalorder %s22, 1
      %p144 = por %p142, %p143
      %p146 = scmp.ne.s32.totalorder %s129, %s145
      %p147 = scmp.eq.s32.totalorder %s22, 0
      %p148 = por %p146, %p147
      %p149 = scmp.le.s32.totalorder 1, %s16
      %p150 = scmp.lt.s32.totalorder %s16, 3
      %p151 = pnand %p149, %p150
      %p152 = pneg %p151
      // Predicated region
      $region9: #{emoji_lstm_forward.6} parent=5 // pred_check
        _
      $region10: #{emoji_lstm_forward.6} parent=5 // pred_check_branch
        %154 = sbr.rel (%p151) target = $region12
      $region11: #{emoji_lstm_forward.6} parent=5 // pred_region
        %s155 = ssub.s32 %s16, 1
        // Predicated region
        $region13: #{emoji_lstm_forward.6} parent=11 // pred_check
          %p156 = pneg %p63
        $region14: #{emoji_lstm_forward.6} parent=11 // pred_check_branch
          %158 = sbr.rel (%p156) target = $region16
        $region15: #{emoji_lstm_forward.6} parent=11 // pred_region
          _
        $region16: #{emoji_lstm_forward.6} parent=11 // pred_fallthru
          _
      $region12: #{emoji_lstm_forward.6} parent=5 // pred_fallthru
        _
      %p159 = scmp.lt.s32.totalorder %s16, 2
      // Predicated region
      $region17: #{emoji_lstm_forward.6} parent=5 // pred_check
        %p160 = pneg %p159
      $region18: #{emoji_lstm_forward.6} parent=5 // pred_check_branch
        %162 = sbr.rel (%p160) target = $region20
      $region19: #{emoji_lstm_forward.6} parent=5 // pred_region
        // Predicated region
        $region21: #{emoji_lstm_forward.6} parent=19 // pred_check
          %p163 = pneg %p36
        $region22: #{emoji_lstm_forward.6} parent=19 // pred_check_branch
          %165 = sbr.rel (%p163) target = $region24
        $region23: #{emoji_lstm_forward.6} parent=19 // pred_region
          %s166 = sand.u32 %s26, 1
          %s167 = sand.u32 %s26, 1
          %s168 = smul.addr %s167, 96
          %s169 = scalar_lea.vmem [#allocation4], %s168
          %s170 = smul.u32 4, %s16
          %s171 = smul.addr %s170, 2
          %s172 = scalar_lea.vmem %s1, %s171
          // Predicated region
          $region25: #{emoji_lstm_forward.6} parent=23 // pred_check
            _
          $region26: #{emoji_lstm_forward.6} parent=23 // pred_check_branch
            %174 = sbr.rel (0) target = $region28
          $region27: #{emoji_lstm_forward.6} parent=23 // pred_region
            // Predicated region
            $region29: #{emoji_lstm_forward.6} parent=27 // pred_check
              _
            $region30: #{emoji_lstm_forward.6} parent=27 // pred_check_branch
              %176 = sbr.rel (0) target = $region32
            $region31: #{emoji_lstm_forward.6} parent=27 // pred_region
              // Predicated region
              $region44: #{emoji_lstm_forward.6} parent=31 // pred_check
                _
              $region45: #{emoji_lstm_forward.6} parent=31 // pred_check_branch
                %213 = sbr.rel (0) target = $region47
              $region46: #{emoji_lstm_forward.6} parent=31 // pred_region
                loop: start=0, step=1, limit=1
                $region48: #{emoji_lstm_forward.6} parent=46 // loop_pre_header
                  _
                $region49: #{emoji_lstm_forward.6} parent=46 // loop_header
                  %s215 = sphi 0, %s219
                  %p216 = scmp.ge.s32.totalorder %s215, 1
                  %s220 = sphi %s172, %s172
                  %s221 = sphi %s169, %s169
                $region50: #{emoji_lstm_forward.6} parent=46 // loop_header_branch
                  %218 = sbr.rel (%p216) target = $region54
                $region51: #{emoji_lstm_forward.6} parent=46 // loop_body
                  %v222 = vld [vmem:[%s220] sm:$0xff]
                  %223 = vst [vmem:[%s221] sm:$0xff] %v222
                  %v224 = vld [vmem:[%s220 + $0x10] sm:$0xff]
                  %225 = vst [vmem:[%s221 + $0x8] sm:$0xff] %v224
                  %v226 = vld [vmem:[%s220 + $0x20] sm:$0xff]
                  %227 = vst [vmem:[%s221 + $0x10] sm:$0xff] %v226
                  %v228 = vld [vmem:[%s220 + $0x30] sm:$0xff]
                  %229 = vst [vmem:[%s221 + $0x18] sm:$0xff] %v228
                  %v230 = vld [vmem:[%s220 + $0x40] sm:$0xff]
                  %231 = vst [vmem:[%s221 + $0x20] sm:$0xff] %v230
                  %v232 = vld [vmem:[%s220 + $0x50] sm:$0xff]
                  %233 = vst [vmem:[%s221 + $0x28] sm:$0xff] %v232
                  %v234 = vld [vmem:[%s220 + $0x60] sm:$0xff]
                  %235 = vst [vmem:[%s221 + $0x30] sm:$0xff] %v234
                  %v236 = vld [vmem:[%s220 + $0x70] sm:$0xff]
                  %237 = vst [vmem:[%s221 + $0x38] sm:$0xff] %v236
                  %v238 = vld [vmem:[%s220 + $0x80] sm:$0xff]
                  %239 = vst [vmem:[%s221 + $0x40] sm:$0xff] %v238
                  %v240 = vld [vmem:[%s220 + $0x90] sm:$0xff]
                  %241 = vst [vmem:[%s221 + $0x48] sm:$0xff] %v240
                  %v242 = vld [vmem:[%s220 + $0xa0] sm:$0xff]
                  %243 = vst [vmem:[%s221 + $0x50] sm:$0xff] %v242
                  %v244 = vld [vmem:[%s220 + $0xb0] sm:$0xff]
                  %245 = vst [vmem:[%s221 + $0x58] sm:$0xff] %v244
                $region52: #{emoji_lstm_forward.6} parent=46 // loop_footer
                  %s219 = sadd.s32 1, %s215
                $region53: #{emoji_lstm_forward.6} parent=46 // loop_footer_branch
                  %214 = sbr.rel target = $region49
                $region54: #{emoji_lstm_forward.6} parent=46 // loop_exit
                  _
              $region47: #{emoji_lstm_forward.6} parent=31 // pred_fallthru
                _
              // Predicated region
              $region55: #{emoji_lstm_forward.6} parent=31 // pred_check
                _
              $region56: #{emoji_lstm_forward.6} parent=31 // pred_check_branch
                %247 = sbr.rel target = $region58
              $region57: #{emoji_lstm_forward.6} parent=31 // pred_region
                _
              $region58: #{emoji_lstm_forward.6} parent=31 // pred_fallthru
                _
            $region32: #{emoji_lstm_forward.6} parent=27 // pred_fallthru
              _
            // Predicated region
            $region33: #{emoji_lstm_forward.6} parent=27 // pred_check
              _
            $region34: #{emoji_lstm_forward.6} parent=27 // pred_check_branch
              %178 = sbr.rel target = $region36
            $region35: #{emoji_lstm_forward.6} parent=27 // pred_region
              loop: start=0, step=1, limit=1
              $region37: #{emoji_lstm_forward.6} parent=35 // loop_pre_header
                _
              $region38: #{emoji_lstm_forward.6} parent=35 // loop_header
                %s181 = sphi 0, %s185
                %p182 = scmp.ge.s32.totalorder %s181, 1
                %s186 = sphi %s172, %s172
                %s187 = sphi %s169, %s169
              $region39: #{emoji_lstm_forward.6} parent=35 // loop_header_branch
                %184 = sbr.rel (%p182) target = $region43
              $region40: #{emoji_lstm_forward.6} parent=35 // loop_body
                %v188 = vld [vmem:[%s186] sm:$0xff]
                %189 = vst [vmem:[%s187] sm:$0xff] %v188
                %v190 = vld [vmem:[%s186 + $0x10] sm:$0xff]
                %191 = vst [vmem:[%s187 + $0x8] sm:$0xff] %v190
                %v192 = vld [vmem:[%s186 + $0x20] sm:$0xff]
                %193 = vst [vmem:[%s187 + $0x10] sm:$0xff] %v192
                %v194 = vld [vmem:[%s186 + $0x30] sm:$0xff]
                %195 = vst [vmem:[%s187 + $0x18] sm:$0xff] %v194
                %v196 = vld [vmem:[%s186 + $0x40] sm:$0xff]
                %197 = vst [vmem:[%s187 + $0x20] sm:$0xff] %v196
                %v198 = vld [vmem:[%s186 + $0x50] sm:$0xff]
                %199 = vst [vmem:[%s187 + $0x28] sm:$0xff] %v198
                %v200 = vld [vmem:[%s186 + $0x60] sm:$0xff]
                %201 = vst [vmem:[%s187 + $0x30] sm:$0xff] %v200
                %v202 = vld [vmem:[%s186 + $0x70] sm:$0xff]
                %203 = vst [vmem:[%s187 + $0x38] sm:$0xff] %v202
                %v204 = vld [vmem:[%s186 + $0x80] sm:$0xff]
                %205 = vst [vmem:[%s187 + $0x40] sm:$0xff] %v204
                %v206 = vld [vmem:[%s186 + $0x90] sm:$0xff]
                %207 = vst [vmem:[%s187 + $0x48] sm:$0xff] %v206
                %v208 = vld [vmem:[%s186 + $0xa0] sm:$0xff]
                %209 = vst [vmem:[%s187 + $0x50] sm:$0xff] %v208
                %v210 = vld [vmem:[%s186 + $0xb0] sm:$0xff]
                %211 = vst [vmem:[%s187 + $0x58] sm:$0xff] %v210
              $region41: #{emoji_lstm_forward.6} parent=35 // loop_footer
                %s185 = sadd.s32 1, %s181
              $region42: #{emoji_lstm_forward.6} parent=35 // loop_footer_branch
                %180 = sbr.rel target = $region38
              $region43: #{emoji_lstm_forward.6} parent=35 // loop_exit
                _
            $region36: #{emoji_lstm_forward.6} parent=27 // pred_fallthru
              _
          $region28: #{emoji_lstm_forward.6} parent=23 // pred_fallthru
            _
          %248 = vnop
        $region24: #{emoji_lstm_forward.6} parent=19 // pred_fallthru
          _
        // Predicated region
        $region59: #{emoji_lstm_forward.6} parent=19 // pred_check
          %p249 = pneg %p83
        $region60: #{emoji_lstm_forward.6} parent=19 // pred_check_branch
          %251 = sbr.rel (%p249) target = $region62
        $region61: #{emoji_lstm_forward.6} parent=19 // pred_region
          %p252 = scmp.lt.s32.totalorder %s16, 1
          %s253 = scalar_select %p252, %s16, 1
          %s254 = smul.addr %s253, 64
          %s255 = smul.addr %s254, 4
          %s256 = scalar_lea.vmem %s3, %s255
        $region62: #{emoji_lstm_forward.6} parent=19 // pred_fallthru
          _
      $region20: #{emoji_lstm_forward.6} parent=5 // pred_fallthru
        _
      %p257 = scmp.le.s32.totalorder 1, %s16
      %p258 = scmp.lt.s32.totalorder %s16, 3
      %p259 = pnand %p257, %p258
      %p260 = pneg %p259
      // Predicated region
      $region63: #{emoji_lstm_forward.6} parent=5 // pred_check
        _
      $region64: #{emoji_lstm_forward.6} parent=5 // pred_check_branch
        %262 = sbr.rel (%p259) target = $region66
      $region65: #{emoji_lstm_forward.6} parent=5 // pred_region
        %s263 = ssub.s32 %s16, 1
        %s264 = sand.u32 %s29, 1
        %s265 = sand.u32 %s29, 1
        %s266 = smul.addr %s265, 96
        %s267 = scalar_lea.vmem [#allocation4], %s266
        // Predicated region
        $region67: #{emoji_lstm_forward.6} parent=65 // pred_check
          %p268 = pneg %p42
        $region68: #{emoji_lstm_forward.6} parent=65 // pred_check_branch
          %270 = sbr.rel (%p268) target = $region70
        $region69: #{emoji_lstm_forward.6} parent=65 // pred_region
          _
        $region70: #{emoji_lstm_forward.6} parent=65 // pred_fallthru
          _
        %s271 = sand.u32 %s29, 1
        %s272 = sand.u32 %s29, 1
        %s273 = smul.addr %s272, 96
        %s274 = scalar_lea.vmem [#allocation4], %s273
        %p275 = pneg %p42
        %p276 = pneg %p39
        %p277 = pneg %p63
        %p278 = pneg %p60
        %p279 = scmp.lt.s32.totalorder %s21, 1
        %s280 = scalar_select %p279, %s21, 1
        %s281 = smul.addr %s280, 64
        %s282 = smul.addr %s281, 4
        %s283 = scalar_lea.vmem %s3, %s282
        %p284 = pneg %p89
        %p285 = pneg %p86
        %p286 = pneg %p115
        %p287 = pneg %p112
        %s288 = sand.u32 %s102, 1
        %s289 = sand.u32 %s102, 1
        %s290 = smul.addr %s289, 24
        %s291 = scalar_lea.vmem [#allocation5], %s290
        %p292 = pneg %p141
        %p293 = pneg %p138
        %s294 = sand.u32 %s128, 1
        %s295 = scalar_lea.sflag [#allocation7], %s294
        %s296 = sand.u32 %s128, 1
        %s297 = smul.addr %s296, 2
        %s298 = scalar_lea.vmem [#allocation6], %s297
        %s299 = smul.u32 4, %s21
        %p300 = scmp.lt.s32.totalorder %s21, 1
        %s301 = scalar_select %p300, %s21, 1
        %s302 = smul.addr %s301, 64
        %s303 = smul.addr %s302, 4
        %s304 = scalar_lea.vmem %s3, %s303
        %s306 = sld [smem:[#allocation3]]
        %v307 = vld [vmem:[%s304] sm:$0xff]
        %v308 = vld [vmem:[%s304 + $0x8] sm:$0xff]
        %v309 = vld [vmem:[%s304 + $0x10] sm:$0xff]
        %v310 = vld [vmem:[%s304 + $0x18] sm:$0xff]
        %v311 = vld [vmem:[%s304 + $0x20] sm:$0xff]
        %v312 = vld [vmem:[%s304 + $0x28] sm:$0xff]
        %v313 = vld [vmem:[%s304 + $0x30] sm:$0xff]
        %v314 = vld [vmem:[%s304 + $0x38] sm:$0xff]
        %v315 = vld [vmem:[%s304 + $0x40] sm:$0xff]
        %v316 = vld [vmem:[%s304 + $0x48] sm:$0xff]
        %v317 = vld [vmem:[%s304 + $0x50] sm:$0xff]
        %v318 = vld [vmem:[%s304 + $0x58] sm:$0xff]
        %v319 = vld [vmem:[%s304 + $0x60] sm:$0xff]
        %v320 = vld [vmem:[%s304 + $0x68] sm:$0xff]
        %v321 = vld [vmem:[%s304 + $0x70] sm:$0xff]
        %v322 = vld [vmem:[%s304 + $0x78] sm:$0xff]
        %v323 = vld [vmem:[%s304 + $0x80] sm:$0xff]
        %v324 = vld [vmem:[%s304 + $0x88] sm:$0xff]
        %v325 = vld [vmem:[%s304 + $0x90] sm:$0xff]
        %v326 = vld [vmem:[%s304 + $0x98] sm:$0xff]
        %v327 = vld [vmem:[%s304 + $0xa0] sm:$0xff]
        %v328 = vld [vmem:[%s304 + $0xa8] sm:$0xff]
        %v329 = vld [vmem:[%s304 + $0xb0] sm:$0xff]
        %v330 = vld [vmem:[%s304 + $0xb8] sm:$0xff]
        %v331 = vld [vmem:[%s304 + $0xc0] sm:$0xff]
        %v332 = vld [vmem:[%s304 + $0xc8] sm:$0xff]
        %v333 = vld [vmem:[%s304 + $0xd0] sm:$0xff]
        %v334 = vld [vmem:[%s304 + $0xd8] sm:$0xff]
        %v335 = vld [vmem:[%s304 + $0xe0] sm:$0xff]
        %v336 = vld [vmem:[%s304 + $0xe8] sm:$0xff]
        %v337 = vld [vmem:[%s304 + $0xf0] sm:$0xff]
        %v338 = vld [vmem:[%s304 + $0xf8] sm:$0xff]
        %v339 = vld [vmem:[%s2] sm:$0x3]
        %340 = vst [vmem:[%s291] sm:$0x3] 0.0
        %341 = vst [vmem:[%s291 + $0x2] sm:$0x3] 0.0
        %342 = vst [vmem:[%s291 + $0x4] sm:$0x3] 0.0
        %343 = vst [vmem:[%s291 + $0x6] sm:$0x3] 0.0
        %344 = vst [vmem:[%s291 + $0x8] sm:$0x3] 0.0
        %345 = vst [vmem:[%s291 + $0xa] sm:$0x3] 0.0
        %346 = vst [vmem:[%s291 + $0xc] sm:$0x3] 0.0
        %347 = vst [vmem:[%s291 + $0xe] sm:$0x3] 0.0
        %348 = vst [vmem:[%s291 + $0x10] sm:$0x3] 0.0
        %349 = vst [vmem:[%s291 + $0x12] sm:$0x3] 0.0
        %350 = vst [vmem:[%s291 + $0x14] sm:$0x3] 0.0
        %351 = vst [vmem:[%s291 + $0x16] sm:$0x3] 0.0
        // While loop
        $region71: #{emoji_lstm_forward.6} parent=65 // loop_pre_header
          _
        $region72: #{emoji_lstm_forward.6} parent=65 // loop_header
          %s353 = sphi 0, %s355
          %p354 = scmp.ge.s32.totalorder %s353, %s306
          %v358 = vphi 0.0, %v673
          %v359 = vphi 0.0, %v674
        $region73: #{emoji_lstm_forward.6} parent=65 // loop_header_branch
          %357 = sbr.rel (%p354) target = $region77
        $region74: #{emoji_lstm_forward.6} parent=65 // loop_body
          %s360 = ssub.s32 %s306, 1
          %s361 = smul.u32 %s353, 2
          %s362 = ssub.s32 %s360, %s361
          %s363 = smul.u32 %s21, %s362
          %s364 = sadd.s32 %s353, %s363
          %s365 = smul.u32 %s364, 4
          %s366 = smul.addr %s365, 2
          %s367 = scalar_lea.vmem %s267, %s366 [#allocation4]
          %v368 = vld [vmem:[%s367] sm:$0xff]
          %v369 = vpack.c.bf16 %v358, %v358
          %v402 = vunpack.c.l.b16 %v307
          %v403 = vunpack.c.h.b16 %v307
          %v404 = vunpack.c.l.b16 %v308
          %v405 = vunpack.c.h.b16 %v308
          %v406 = vunpack.c.l.b16 %v309
          %v407 = vunpack.c.h.b16 %v309
          %v408 = vunpack.c.l.b16 %v310
          %v409 = vunpack.c.h.b16 %v310
          %v410 = vunpack.c.l.b16 %v311
          %v411 = vunpack.c.h.b16 %v311
          %v412 = vunpack.c.l.b16 %v312
          %v413 = vunpack.c.h.b16 %v312
          %v414 = vunpack.c.l.b16 %v313
          %v415 = vunpack.c.h.b16 %v313
          %v416 = vunpack.c.l.b16 %v314
          %v417 = vunpack.c.h.b16 %v314
          %v418 = vunpack.c.l.b16 %v315
          %v419 = vunpack.c.h.b16 %v315
          %v420 = vunpack.c.l.b16 %v316
          %v421 = vunpack.c.h.b16 %v316
          %v422 = vunpack.c.l.b16 %v317
          %v423 = vunpack.c.h.b16 %v317
          %v424 = vunpack.c.l.b16 %v318
          %v425 = vunpack.c.h.b16 %v318
          %v426 = vunpack.c.l.b16 %v319
          %v427 = vunpack.c.h.b16 %v319
          %v428 = vunpack.c.l.b16 %v320
          %v429 = vunpack.c.h.b16 %v320
          %v430 = vunpack.c.l.b16 %v321
          %v431 = vunpack.c.h.b16 %v321
          %v432 = vunpack.c.l.b16 %v322
          %v433 = vunpack.c.h.b16 %v322
          %v434 = vunpack.c.l.b16 %v323
          %v435 = vunpack.c.h.b16 %v323
          %v436 = vunpack.c.l.b16 %v324
          %v437 = vunpack.c.h.b16 %v324
          %v438 = vunpack.c.l.b16 %v325
          %v439 = vunpack.c.h.b16 %v325
          %v440 = vunpack.c.l.b16 %v326
          %v441 = vunpack.c.h.b16 %v326
          %v442 = vunpack.c.l.b16 %v327
          %v443 = vunpack.c.h.b16 %v327
          %v444 = vunpack.c.l.b16 %v328
          %v445 = vunpack.c.h.b16 %v328
          %v446 = vunpack.c.l.b16 %v329
          %v447 = vunpack.c.h.b16 %v329
          %v448 = vunpack.c.l.b16 %v330
          %v449 = vunpack.c.h.b16 %v330
          %v450 = vunpack.c.l.b16 %v331
          %v451 = vunpack.c.h.b16 %v331
          %v452 = vunpack.c.l.b16 %v332
          %v453 = vunpack.c.h.b16 %v332
          %v454 = vunpack.c.l.b16 %v333
          %v455 = vunpack.c.h.b16 %v333
          %v456 = vunpack.c.l.b16 %v334
          %v457 = vunpack.c.h.b16 %v334
          %v458 = vunpack.c.l.b16 %v335
          %v459 = vunpack.c.h.b16 %v335
          %v460 = vunpack.c.l.b16 %v336
          %v461 = vunpack.c.h.b16 %v336
          %v462 = vunpack.c.l.b16 %v337
          %v463 = vunpack.c.h.b16 %v337
          %v464 = vunpack.c.l.b16 %v338
          %v465 = vunpack.c.h.b16 %v338
          %v466 = vpack.c.b16 %v406, %v402
          %v467 = vpack.c.b16 %v407, %v403
          %v468 = vpack.c.b16 %v408, %v404
          %v469 = vpack.c.b16 %v409, %v405
          %v470 = vpack.c.b16 %v414, %v410
          %v471 = vpack.c.b16 %v415, %v411
          %v472 = vpack.c.b16 %v416, %v412
          %v473 = vpack.c.b16 %v417, %v413
          %v474 = vpack.c.b16 %v422, %v418
          %v475 = vpack.c.b16 %v423, %v419
          %v476 = vpack.c.b16 %v424, %v420
          %v477 = vpack.c.b16 %v425, %v421
          %v478 = vpack.c.b16 %v430, %v426
          %v479 = vpack.c.b16 %v431, %v427
          %v480 = vpack.c.b16 %v432, %v428
          %v481 = vpack.c.b16 %v433, %v429
          %v482 = vpack.c.b16 %v438, %v434
          %v483 = vpack.c.b16 %v439, %v435
          %v484 = vpack.c.b16 %v440, %v436
          %v485 = vpack.c.b16 %v441, %v437
          %v486 = vpack.c.b16 %v446, %v442
          %v487 = vpack.c.b16 %v447, %v443
          %v488 = vpack.c.b16 %v448, %v444
          %v489 = vpack.c.b16 %v449, %v445
          %v490 = vpack.c.b16 %v454, %v450
          %v491 = vpack.c.b16 %v455, %v451
          %v492 = vpack.c.b16 %v456, %v452
          %v493 = vpack.c.b16 %v457, %v453
          %v494 = vpack.c.b16 %v462, %v458
          %v495 = vpack.c.b16 %v463, %v459
          %v496 = vpack.c.b16 %v464, %v460
          %v497 = vpack.c.b16 %v465, %v461
          %530 = vmatprep.subr.bf16.mxu0 %v467
          %531 = vmatpush1.bf16.msra.mxu0 %v466
          %532 = vmatprep.subr.bf16.mxu0 %v471
          %533 = vmatpush1.bf16.msra.mxu0 %v470
          %534 = vmatprep.subr.bf16.mxu0 %v475
          %535 = vmatpush1.bf16.msra.mxu0 %v474
          %536 = vmatprep.subr.bf16.mxu0 %v479
          %537 = vmatpush1.bf16.msra.mxu0 %v478
          %538 = vmatprep.subr.bf16.mxu0 %v483
          %539 = vmatpush1.bf16.msra.mxu0 %v482
          %540 = vmatprep.subr.bf16.mxu0 %v487
          %541 = vmatpush1.bf16.msra.mxu0 %v486
          %542 = vmatprep.subr.bf16.mxu0 %v491
          %543 = vmatpush1.bf16.msra.mxu0 %v490
          %544 = vmatprep.subr.bf16.mxu0 %v495
          %545 = vmatpush1.bf16.msra.mxu0 %v494
          %546 = vmatprep.subr.bf16.mxu0 0
          %547 = vmatpush1.bf16.msra.mxu0 0
          %548 = vmatprep.subr.bf16.mxu0 0
          %549 = vmatpush1.bf16.msra.mxu0 0
          %550 = vmatprep.subr.bf16.mxu0 0
          %551 = vmatpush1.bf16.msra.mxu0 0
          %552 = vmatprep.subr.bf16.mxu0 0
          %553 = vmatpush1.bf16.msra.mxu0 0
          %554 = vmatprep.subr.bf16.mxu0 0
          %555 = vmatpush1.bf16.msra.mxu0 0
          %556 = vmatprep.subr.bf16.mxu0 0
          %557 = vmatpush1.bf16.msra.mxu0 0
          %558 = vmatprep.subr.bf16.mxu0 0
          %559 = vmatpush1.bf16.msra.mxu0 0
          %560 = vmatprep.subr.bf16.mxu0 0
          %561 = vmatpush1.bf16.msra.mxu0 0
          %562 = vmatprep.mubr.bf16.mxu0 0
          %563 = vmatmul.mubr.bf16.gmra.mrb[0].mxu0 %v369
          %v564 = vpop.f32.mrb[0].mxu0
          %v565 = vadd.f32 0.0, %v564
          %v566 = vpop.f32.mrb[0].mxu0
          %v567 = vadd.f32 0.0, %v566
          %v568 = vpop.f32.mrb[0].mxu0
          %v569 = vpop.f32.mrb[0].mxu0
          %570 = vdwg.mxu0
          %571 = vmatprep.subr.bf16.mxu0 %v469
          %572 = vmatpush1.bf16.msra.mxu0 %v468
          %573 = vmatprep.subr.bf16.mxu0 %v473
          %574 = vmatpush1.bf16.msra.mxu0 %v472
          %575 = vmatprep.subr.bf16.mxu0 %v477
          %576 = vmatpush1.bf16.msra.mxu0 %v476
          %577 = vmatprep.subr.bf16.mxu0 %v481
          %578 = vmatpush1.bf16.msra.mxu0 %v480
          %579 = vmatprep.subr.bf16.mxu0 %v485
          %580 = vmatpush1.bf16.msra.mxu0 %v484
          %581 = vmatprep.subr.bf16.mxu0 %v489
          %582 = vmatpush1.bf16.msra.mxu0 %v488
          %583 = vmatprep.subr.bf16.mxu0 %v493
          %584 = vmatpush1.bf16.msra.mxu0 %v492
          %585 = vmatprep.subr.bf16.mxu0 %v497
          %586 = vmatpush1.bf16.msra.mxu0 %v496
          %587 = vmatprep.subr.bf16.mxu0 0
          %588 = vmatpush1.bf16.msra.mxu0 0
          %589 = vmatprep.subr.bf16.mxu0 0
          %590 = vmatpush1.bf16.msra.mxu0 0
          %591 = vmatprep.subr.bf16.mxu0 0
          %592 = vmatpush1.bf16.msra.mxu0 0
          %593 = vmatprep.subr.bf16.mxu0 0
          %594 = vmatpush1.bf16.msra.mxu0 0
          %595 = vmatprep.subr.bf16.mxu0 0
          %596 = vmatpush1.bf16.msra.mxu0 0
          %597 = vmatprep.subr.bf16.mxu0 0
          %598 = vmatpush1.bf16.msra.mxu0 0
          %599 = vmatprep.subr.bf16.mxu0 0
          %600 = vmatpush1.bf16.msra.mxu0 0
          %601 = vmatprep.subr.bf16.mxu0 0
          %602 = vmatpush1.bf16.msra.mxu0 0
          %603 = vmatprep.mubr.bf16.mxu0 0
          %604 = vmatmul.mubr.bf16.gmra.mrb[0].mxu0 %v369
          %v605 = vpop.f32.mrb[0].mxu0
          %v606 = vadd.f32 0.0, %v605
          %v607 = vpop.f32.mrb[0].mxu0
          %v608 = vadd.f32 0.0, %v607
          %v609 = vpop.f32.mrb[0].mxu0
          %v610 = vpop.f32.mrb[0].mxu0
          %611 = vdwg.mxu0
          %v616 = vcombine.low %v565, %v567
          %v617 = vcombine.low %v606, %v608
          %v619 = vunpack.c.l.s4 1983009808
          %v620 = vunpack.c.0.s8 %v619
          %v621 = vlaneseq
          %v622 = vshrl.u32 %v621, 7
          %v623 = vsub.s32 %v620, %v622
          %v624 = vrot.slane %v616, %v623
          %v626 = vunpack.c.l.s4 1983009808
          %v627 = vunpack.c.0.s8 %v626
          %v628 = vlaneseq
          %v629 = vshrl.u32 %v628, 7
          %v630 = vsub.s32 %v627, %v629
          %v631 = vrot.slane %v617, %v630
          %v632 = vcombine.low %v624, %v631
          %v634 = vadd.f32 %v368, %v632
          %v635 = vxor.u32 %v634, 2147483648
          %v636 = vmul.f32 %v635, 1.442695
          %v637 = vpow.pop %v636
          %v638 = vadd.f32 %v637, 1.0
          %v639 = vrcp.pop %v638
          %v640 = vmul.f32 1.0, %v639
          %v642 = vrot.slane %v634, 2
          %v644 = vxor.u32 %v642, 2147483648
          %v645 = vmul.f32 %v644, 1.442695
          %v646 = vpow.pop %v645
          %v647 = vadd.f32 %v646, 1.0
          %v648 = vrcp.pop %v647
          %v649 = vmul.f32 1.0, %v648
          %v650 = vrot.slane %v634, 4
          %v652 = vtanh.pop %v650
          %v653 = vrot.slane %v634, 6
          %v655 = vxor.u32 %v653, 2147483648
          %v656 = vmul.f32 %v655, 1.442695
          %v657 = vpow.pop %v656
          %v658 = vadd.f32 %v657, 1.0
          %v659 = vrcp.pop %v658
          %v660 = vmul.f32 1.0, %v659
          %v661 = vmul.f32 %v649, %v359
          %v662 = vmul.f32 %v640, %v652
          %v663 = vadd.f32 %v661, %v662
          %v664 = vtanh.pop %v663
          %v665 = vmul.f32 %v660, %v664
          %v666 = vstv %s364
          %vm667 = vcmp.lt.s32.totalorder %v666, %v339
          %v668 = vsel %vm667, 1, 0
          %669 = vset.pattern.permute.xlu0 0
          %670 = vperm.xlu0 %669, %v668
          %v671 = vpop.permute.xlu0 %670
          %vm672 = vcmp.eq.s32.totalorder %v671, 1
          %v673 = vsel %vm672, %v665, %v358
          %v674 = vsel %vm672, %v663, %v359
          %v675 = vsel %vm672, %v665, 0.0
          %s676 = smul.u32 %s364, 2
          %s677 = scalar_lea.vmem %s291, %s676 [#allocation5]
          %678 = vst [vmem:[%s677] sm:$0x3] %v675
        $region75: #{emoji_lstm_forward.6} parent=65 // loop_footer
          %s355 = sadd.s32 %s353, 1
        $region76: #{emoji_lstm_forward.6} parent=65 // loop_footer_branch
          %352 = sbr.rel target = $region72
        $region77: #{emoji_lstm_forward.6} parent=65 // loop_exit
          _
        %679 = vst [vmem:[%s298] sm:$0x3] %v358
        %s680 = sand.u32 %s102, 1
        %s681 = sand.u32 %s102, 1
        %s682 = smul.addr %s681, 24
        %s683 = scalar_lea.vmem [#allocation5], %s682
        %s684 = sand.u32 %s128, 1
        %s685 = scalar_lea.sflag [#allocation7], %s684
        %s686 = sand.u32 %s128, 1
        %s687 = smul.addr %s686, 2
        %s688 = scalar_lea.vmem [#allocation6], %s687
        // Predicated region
        $region78: #{emoji_lstm_forward.6} parent=65 // pred_check
          %p689 = pneg %p112
        $region79: #{emoji_lstm_forward.6} parent=65 // pred_check_branch
          %691 = sbr.rel (%p689) target = $region81
        $region80: #{emoji_lstm_forward.6} parent=65 // pred_region
          %s692 = smul.addr %s21, 2
          %s693 = scalar_lea.vmem %s4, %s692
          // Predicated region
          $region82: #{emoji_lstm_forward.6} parent=80 // pred_check
            _
          $region83: #{emoji_lstm_forward.6} parent=80 // pred_check_branch
            %695 = sbr.rel (0) target = $region85
          $region84: #{emoji_lstm_forward.6} parent=80 // pred_region
            // Predicated region
            $region86: #{emoji_lstm_forward.6} parent=84 // pred_check
              _
            $region87: #{emoji_lstm_forward.6} parent=84 // pred_check_branch
              %697 = sbr.rel target = $region89
            $region88: #{emoji_lstm_forward.6} parent=84 // pred_region
              // Predicated region
              $region101: #{emoji_lstm_forward.6} parent=88 // pred_check
                _
              $region102: #{emoji_lstm_forward.6} parent=88 // pred_check_branch
                %734 = sbr.rel (0) target = $region104
              $region103: #{emoji_lstm_forward.6} parent=88 // pred_region
                loop: start=0, step=1, limit=1
                $region105: #{emoji_lstm_forward.6} parent=103 // loop_pre_header
                  _
                $region106: #{emoji_lstm_forward.6} parent=103 // loop_header
                  %s736 = sphi 0, %s740
                  %p737 = scmp.ge.s32.totalorder %s736, 1
                  %s741 = sphi %s683, %s683
                  %s742 = sphi %s693, %s693
                $region107: #{emoji_lstm_forward.6} parent=103 // loop_header_branch
                  %739 = sbr.rel (%p737) target = $region111
                $region108: #{emoji_lstm_forward.6} parent=103 // loop_body
                  _
                $region109: #{emoji_lstm_forward.6} parent=103 // loop_footer
                  %s740 = sadd.s32 1, %s736
                $region110: #{emoji_lstm_forward.6} parent=103 // loop_footer_branch
                  %735 = sbr.rel target = $region106
                $region111: #{emoji_lstm_forward.6} parent=103 // loop_exit
                  _
                loop: start=0, step=1, limit=1
                $region112: #{emoji_lstm_forward.6} parent=103 // loop_pre_header
                  _
                $region113: #{emoji_lstm_forward.6} parent=103 // loop_header
                  %s745 = sphi 0, %s749
                  %p746 = scmp.ge.s32.totalorder %s745, 1
                  %s750 = sphi %s683, %s683
                  %s751 = sphi %s693, %s693
                $region114: #{emoji_lstm_forward.6} parent=103 // loop_header_branch
                  %748 = sbr.rel (%p746) target = $region118
                $region115: #{emoji_lstm_forward.6} parent=103 // loop_body
                  %v752 = vld [vmem:[%s750] sm:$0x3]
                  %753 = vst [vmem:[%s751] sm:$0x3] %v752
                  %v754 = vld [vmem:[%s750 + $0x2] sm:$0x3]
                  %755 = vst [vmem:[%s751 + $0x4] sm:$0x3] %v754
                  %v756 = vld [vmem:[%s750 + $0x4] sm:$0x3]
                  %757 = vst [vmem:[%s751 + $0x8] sm:$0x3] %v756
                  %v758 = vld [vmem:[%s750 + $0x6] sm:$0x3]
                  %759 = vst [vmem:[%s751 + $0xc] sm:$0x3] %v758
                  %v760 = vld [vmem:[%s750 + $0x8] sm:$0x3]
                  %761 = vst [vmem:[%s751 + $0x10] sm:$0x3] %v760
                  %v762 = vld [vmem:[%s750 + $0xa] sm:$0x3]
                  %763 = vst [vmem:[%s751 + $0x14] sm:$0x3] %v762
                  %v764 = vld [vmem:[%s750 + $0xc] sm:$0x3]
                  %765 = vst [vmem:[%s751 + $0x18] sm:$0x3] %v764
                  %v766 = vld [vmem:[%s750 + $0xe] sm:$0x3]
                  %767 = vst [vmem:[%s751 + $0x1c] sm:$0x3] %v766
                  %v768 = vld [vmem:[%s750 + $0x10] sm:$0x3]
                  %769 = vst [vmem:[%s751 + $0x20] sm:$0x3] %v768
                  %v770 = vld [vmem:[%s750 + $0x12] sm:$0x3]
                  %771 = vst [vmem:[%s751 + $0x24] sm:$0x3] %v770
                  %v772 = vld [vmem:[%s750 + $0x14] sm:$0x3]
                  %773 = vst [vmem:[%s751 + $0x28] sm:$0x3] %v772
                  %v774 = vld [vmem:[%s750 + $0x16] sm:$0x3]
                  %775 = vst [vmem:[%s751 + $0x2c] sm:$0x3] %v774
                $region116: #{emoji_lstm_forward.6} parent=103 // loop_footer
                  %s749 = sadd.s32 1, %s745
                $region117: #{emoji_lstm_forward.6} parent=103 // loop_footer_branch
                  %744 = sbr.rel target = $region113
                $region118: #{emoji_lstm_forward.6} parent=103 // loop_exit
                  _
              $region104: #{emoji_lstm_forward.6} parent=88 // pred_fallthru
                _
            $region89: #{emoji_lstm_forward.6} parent=84 // pred_fallthru
              _
            // Predicated region
            $region90: #{emoji_lstm_forward.6} parent=84 // pred_check
              _
            $region91: #{emoji_lstm_forward.6} parent=84 // pred_check_branch
              %699 = sbr.rel (0) target = $region93
            $region92: #{emoji_lstm_forward.6} parent=84 // pred_region
              loop: start=0, step=1, limit=1
              $region94: #{emoji_lstm_forward.6} parent=92 // loop_pre_header
                _
              $region95: #{emoji_lstm_forward.6} parent=92 // loop_header
                %s702 = sphi 0, %s706
                %p703 = scmp.ge.s32.totalorder %s702, 1
                %s707 = sphi %s683, %s683
                %s708 = sphi %s693, %s693
              $region96: #{emoji_lstm_forward.6} parent=92 // loop_header_branch
                %705 = sbr.rel (%p703) target = $region100
              $region97: #{emoji_lstm_forward.6} parent=92 // loop_body
                %v709 = vld [vmem:[%s707] sm:$0x3]
                %710 = vst [vmem:[%s708] sm:$0x3] %v709
                %v711 = vld [vmem:[%s707 + $0x2] sm:$0x3]
                %712 = vst [vmem:[%s708 + $0x4] sm:$0x3] %v711
                %v713 = vld [vmem:[%s707 + $0x4] sm:$0x3]
                %714 = vst [vmem:[%s708 + $0x8] sm:$0x3] %v713
                %v715 = vld [vmem:[%s707 + $0x6] sm:$0x3]
                %716 = vst [vmem:[%s708 + $0xc] sm:$0x3] %v715
                %v717 = vld [vmem:[%s707 + $0x8] sm:$0x3]
                %718 = vst [vmem:[%s708 + $0x10] sm:$0x3] %v717
                %v719 = vld [vmem:[%s707 + $0xa] sm:$0x3]
                %720 = vst [vmem:[%s708 + $0x14] sm:$0x3] %v719
                %v721 = vld [vmem:[%s707 + $0xc] sm:$0x3]
                %722 = vst [vmem:[%s708 + $0x18] sm:$0x3] %v721
                %v723 = vld [vmem:[%s707 + $0xe] sm:$0x3]
                %724 = vst [vmem:[%s708 + $0x1c] sm:$0x3] %v723
                %v725 = vld [vmem:[%s707 + $0x10] sm:$0x3]
                %726 = vst [vmem:[%s708 + $0x20] sm:$0x3] %v725
                %v727 = vld [vmem:[%s707 + $0x12] sm:$0x3]
                %728 = vst [vmem:[%s708 + $0x24] sm:$0x3] %v727
                %v729 = vld [vmem:[%s707 + $0x14] sm:$0x3]
                %730 = vst [vmem:[%s708 + $0x28] sm:$0x3] %v729
                %v731 = vld [vmem:[%s707 + $0x16] sm:$0x3]
                %732 = vst [vmem:[%s708 + $0x2c] sm:$0x3] %v731
              $region98: #{emoji_lstm_forward.6} parent=92 // loop_footer
                %s706 = sadd.s32 1, %s702
              $region99: #{emoji_lstm_forward.6} parent=92 // loop_footer_branch
                %701 = sbr.rel target = $region95
              $region100: #{emoji_lstm_forward.6} parent=92 // loop_exit
                _
            $region93: #{emoji_lstm_forward.6} parent=84 // pred_fallthru
              _
          $region85: #{emoji_lstm_forward.6} parent=80 // pred_fallthru
            _
          %776 = vnop
        $region81: #{emoji_lstm_forward.6} parent=65 // pred_fallthru
          _
        // Predicated region
        $region119: #{emoji_lstm_forward.6} parent=65 // pred_check
          %p777 = pneg %p138
        $region120: #{emoji_lstm_forward.6} parent=65 // pred_check_branch
          %779 = sbr.rel (%p777) target = $region122
        $region121: #{emoji_lstm_forward.6} parent=65 // pred_region
          %s781 = ssub.s32 32, 32
          %782 = vsyncadd %s685, %s781
          %s783 = smul.addr %s21, 32
          %s784 = scalar_lea.hbm %s5, %s783
          %s786 = sshll.u32 %s688, 4
          %s787 = int_to_ptr.vmem [resolvable:$true] %s786
          %789 = dma.vmem_to_hbm [thread:$0]  %s787, 32, %s784, %s685
        $region122: #{emoji_lstm_forward.6} parent=65 // pred_fallthru
          _
      $region66: #{emoji_lstm_forward.6} parent=5 // pred_fallthru
        _
      %p790 = scmp.le.s32.totalorder 2, %s16
      // Predicated region
      $region123: #{emoji_lstm_forward.6} parent=5 // pred_check
        %p791 = pneg %p790
      $region124: #{emoji_lstm_forward.6} parent=5 // pred_check_branch
        %793 = sbr.rel (%p791) target = $region126
      $region125: #{emoji_lstm_forward.6} parent=5 // pred_region
        %s794 = ssub.s32 %s16, 2
        // Predicated region
        $region127: #{emoji_lstm_forward.6} parent=125 // pred_check
          %p795 = pneg %p118
        $region128: #{emoji_lstm_forward.6} parent=125 // pred_check_branch
          %797 = sbr.rel (%p795) target = $region130
        $region129: #{emoji_lstm_forward.6} parent=125 // pred_region
          %s798 = sand.u32 %s103, 1
          %s799 = sand.u32 %s103, 1
          %s800 = smul.addr %s799, 24
          %s801 = scalar_lea.vmem [#allocation5], %s800
        $region130: #{emoji_lstm_forward.6} parent=125 // pred_fallthru
          _
        // Predicated region
        $region131: #{emoji_lstm_forward.6} parent=125 // pred_check
          %p802 = pneg %p144
        $region132: #{emoji_lstm_forward.6} parent=125 // pred_check_branch
          %804 = sbr.rel (%p802) target = $region134
        $region133: #{emoji_lstm_forward.6} parent=125 // pred_region
          %s805 = sand.u32 %s129, 1
          %s806 = scalar_lea.sflag [#allocation7], %s805
          %s807 = sand.u32 %s129, 1
          %s808 = smul.addr %s807, 2
          %s809 = scalar_lea.vmem [#allocation6], %s808
          %810 = dma.done %s806, 32
        $region134: #{emoji_lstm_forward.6} parent=125 // pred_fallthru
          _
      $region126: #{emoji_lstm_forward.6} parent=5 // pred_fallthru
        _
    $region6: #{emoji_lstm_forward.6} parent=1 // loop_footer
      %s20 = sadd.s32 1, %s16
    $region7: #{emoji_lstm_forward.6} parent=1 // loop_footer_branch
      %15 = sbr.rel target = $region3
    $region8: #{emoji_lstm_forward.6} parent=1 // loop_exit
      _
    %811 = vsyncpa [#allocation7], 1
    %s812 = scalar_lea.sflag [#allocation7], 1
    %813 = vsyncpa %s812, 1

// kernel: emoji_lstm_forward.8
$region0: #{emoji_lstm_forward.8}
  #allocation0 [shape = 'u32[]', space=smem, size = 0x4, offset = 0x4, fixed_abs, tag = 'smem constant byte address 0x4 - core index']
  #allocation1 [shape = 'u32[144,128]{1,0:T(1,128)}', space=vmem, size = 0x12000, scoped, tag = 'internal scratch']
  #allocation2 [shape = 's32[1]{0}', space=sflag, size = 0x4, scoped, tag = 'scoped memory for emoji_lstm_forward.8']
  #allocation3 [shape = 's32[1]{0:T(128)S(6)}', space=smem, size = 0x200, scoped, tag = 'prefetched SMEM operand 0']
  %s0 = inlined_call_operand.<no memory space> [shape: s32[1], index: 0, kind: input, shape index: {}]
  %s1 = inlined_call_operand.vmem [shape: f32[12,2,1024], index: 1, kind: input, shape index: {}]
  %s2 = inlined_call_operand.vmem [shape: s32[2,1], index: 2, kind: input, shape index: {}]
  %s3 = inlined_call_operand.vmem [shape: bf16[2,128,512], index: 3, kind: input, shape index: {}]
  %s4 = inlined_call_operand.hbm [shape: f32[12,2,256], index: 4, kind: output, shape index: {0}]
  %s5 = inlined_call_operand.vmem [shape: f32[2,256], index: 5, kind: output, shape index: {1}]
  %6 = xla_tuple %s4, %s5
  %s7 = sld [smem:[#allocation0]]
  $region98: #{emoji_lstm_forward.8} parent=0
    _
  %s9 = ssub.s32 1, %s7
  %s10 = scalar_select 0, %s9, %s7
  %11 = sst [smem:[#allocation3]] %s0
  $region1: #{emoji_lstm_forward.8} parent=0
    #allocation4 [shape = 'u8[98304]{0}', space=vmem, size = 0x18000, scoped, tag = 'input window, operand 1']
    #allocation5 [shape = 'u8[24576]{0}', space=vmem, size = 0x6000, scoped, tag = 'output window, operand 0']
    #allocation6 [shape = 's32[2]{0}', space=sflag, size = 0x8, scoped, tag = 'scoped memory for emoji_lstm_forward.8']
    %12 = vsyncpa [#allocation6], 0
    %s13 = scalar_lea.sflag [#allocation6], 1
    %14 = vsyncpa %s13, 0
    loop: start=0, step=1, limit=4
    $region2: #{emoji_lstm_forward.8} parent=1 // loop_pre_header
      _
    $region3: #{emoji_lstm_forward.8} parent=1 // loop_header
      %s16 = sphi 0, %s20
      %p17 = scmp.ge.s32.totalorder %s16, 4
      %s26 = sphi 0, %s28
      %s29 = sphi 0, %s26
      %s30 = sphi 0, %s29
      %s46 = sphi 0, %s30
      %s50 = sphi 0, %s50
      %s52 = sphi 0, %s50
      %s53 = sphi 0, %s52
      %s67 = sphi 0, %s53
      %s73 = sphi 0, %s75
      %s76 = sphi 0, %s73
      %s77 = sphi 0, %s76
      %s93 = sphi 0, %s77
      %s99 = sphi 0, %s101
      %s102 = sphi 0, %s99
      %s103 = sphi 0, %s102
      %s119 = sphi 0, %s103
      %s125 = sphi 0, %s127
      %s128 = sphi 0, %s125
      %s129 = sphi 0, %s128
      %s145 = sphi 0, %s129
    $region4: #{emoji_lstm_forward.8} parent=1 // loop_header_branch
      %19 = sbr.rel (%p17) target = $region8
    $region5: #{emoji_lstm_forward.8} parent=1 // loop_body
      %s21 = ssub.s32 %s16, 1
      %s22 = ssub.s32 %s16, 2
      %s23 = sadd.s32 %s16, 1
      %s24 = ssub.s32 %s16, %s23
      %p25 = scmp.eq.s32.totalorder %s24, 0
      %s27 = sadd.s32 %s26, 1
      %s28 = scalar_select %p25, %s26, %s27
      %p31 = pneg %p25
      %p32 = scmp.eq.s32.totalorder %s16, 1
      %p33 = por %p31, %p32
      %p34 = scmp.ne.s32.totalorder %s26, %s29
      %p35 = scmp.eq.s32.totalorder %s16, 0
      %p36 = por %p34, %p35
      %p37 = scmp.ne.s32.totalorder %s26, %s29
      %p38 = scmp.eq.s32.totalorder %s21, 1
      %p39 = por %p37, %p38
      %p40 = scmp.ne.s32.totalorder %s29, %s30
      %p41 = scmp.eq.s32.totalorder %s21, 0
      %p42 = por %p40, %p41
      %p43 = scmp.ne.s32.totalorder %s29, %s30
      %p44 = scmp.eq.s32.totalorder %s22, 1
      %p45 = por %p43, %p44
      %p47 = scmp.ne.s32.totalorder %s30, %s46
      %p48 = scmp.eq.s32.totalorder %s22, 0
      %p49 = por %p47, %p48
      %s51 = sadd.s32 %s50, 1
      %p54 = scmp.eq.s32.totalorder %s16, 1
      %p55 = scmp.ne.s32.totalorder %s50, %s52
      %p56 = scmp.eq.s32.totalorder %s16, 0
      %p57 = por %p55, %p56
      %p58 = scmp.ne.s32.totalorder %s50, %s52
      %p59 = scmp.eq.s32.totalorder %s21, 1
      %p60 = por %p58, %p59
      %p61 = scmp.ne.s32.totalorder %s52, %s53
      %p62 = scmp.eq.s32.totalorder %s21, 0
      %p63 = por %p61, %p62
      %p64 = scmp.ne.s32.totalorder %s52, %s53
      %p65 = scmp.eq.s32.totalorder %s22, 1
      %p66 = por %p64, %p65
      %p68 = scmp.ne.s32.totalorder %s53, %s67
      %p69 = scmp.eq.s32.totalorder %s22, 0
      %p70 = por %p68, %p69
      %s71 = ssub.s32 %s16, %s23
      %p72 = scmp.eq.s32.totalorder %s71, 0
      %s74 = sadd.s32 %s73, 1
      %s75 = scalar_select %p72, %s73, %s74
      %p78 = pneg %p72
      %p79 = scmp.eq.s32.totalorder %s16, 1
      %p80 = por %p78, %p79
      %p81 = scmp.ne.s32.totalorder %s73, %s76
      %p82 = scmp.eq.s32.totalorder %s16, 0
      %p83 = por %p81, %p82
      %p84 = scmp.ne.s32.totalorder %s73, %s76
      %p85 = scmp.eq.s32.totalorder %s21, 1
      %p86 = por %p84, %p85
      %p87 = scmp.ne.s32.totalorder %s76, %s77
      %p88 = scmp.eq.s32.totalorder %s21, 0
      %p89 = por %p87, %p88
      %p90 = scmp.ne.s32.totalorder %s76, %s77
      %p91 = scmp.eq.s32.totalorder %s22, 1
      %p92 = por %p90, %p91
      %p94 = scmp.ne.s32.totalorder %s77, %s93
      %p95 = scmp.eq.s32.totalorder %s22, 0
      %p96 = por %p94, %p95
      %s97 = ssub.s32 %s16, %s23
      %p98 = scmp.eq.s32.totalorder %s97, 0
      %s100 = sadd.s32 %s99, 1
      %s101 = scalar_select %p98, %s99, %s100
      %p104 = pneg %p98
      %p105 = scmp.eq.s32.totalorder %s16, 1
      %p106 = por %p104, %p105
      %p107 = scmp.ne.s32.totalorder %s99, %s102
      %p108 = scmp.eq.s32.totalorder %s16, 0
      %p109 = por %p107, %p108
      %p110 = scmp.ne.s32.totalorder %s99, %s102
      %p111 = scmp.eq.s32.totalorder %s21, 1
      %p112 = por %p110, %p111
      %p113 = scmp.ne.s32.totalorder %s102, %s103
      %p114 = scmp.eq.s32.totalorder %s21, 0
      %p115 = por %p113, %p114
      %p116 = scmp.ne.s32.totalorder %s102, %s103
      %p117 = scmp.eq.s32.totalorder %s22, 1
      %p118 = por %p116, %p117
      %p120 = scmp.ne.s32.totalorder %s103, %s119
      %p121 = scmp.eq.s32.totalorder %s22, 0
      %p122 = por %p120, %p121
      %s123 = ssub.s32 %s16, %s23
      %p124 = scmp.eq.s32.totalorder %s123, 0
      %s126 = sadd.s32 %s125, 1
      %s127 = scalar_select %p124, %s125, %s126
      %p130 = pneg %p124
      %p131 = scmp.eq.s32.totalorder %s16, 1
      %p132 = por %p130, %p131
      %p133 = scmp.ne.s32.totalorder %s125, %s128
      %p134 = scmp.eq.s32.totalorder %s16, 0
      %p135 = por %p133, %p134
      %p136 = scmp.ne.s32.totalorder %s125, %s128
      %p137 = scmp.eq.s32.totalorder %s21, 1
      %p138 = por %p136, %p137
      %p139 = scmp.ne.s32.totalorder %s128, %s129
      %p140 = scmp.eq.s32.totalorder %s21, 0
      %p141 = por %p139, %p140
      %p142 = scmp.ne.s32.totalorder %s128, %s129
      %p143 = scmp.eq.s32.totalorder %s22, 1
      %p144 = por %p142, %p143
      %p146 = scmp.ne.s32.totalorder %s129, %s145
      %p147 = scmp.eq.s32.totalorder %s22, 0
      %p148 = por %p146, %p147
      %p149 = scmp.le.s32.totalorder 1, %s16
      %p150 = scmp.lt.s32.totalorder %s16, 3
      %p151 = pnand %p149, %p150
      %p152 = pneg %p151
      // Predicated region
      $region9: #{emoji_lstm_forward.8} parent=5 // pred_check
        _
      $region10: #{emoji_lstm_forward.8} parent=5 // pred_check_branch
        %154 = sbr.rel (%p151) target = $region12
      $region11: #{emoji_lstm_forward.8} parent=5 // pred_region
        %s155 = ssub.s32 %s16, 1
        // Predicated region
        $region13: #{emoji_lstm_forward.8} parent=11 // pred_check
          %p156 = pneg %p63
        $region14: #{emoji_lstm_forward.8} parent=11 // pred_check_branch
          %158 = sbr.rel (%p156) target = $region16
        $region15: #{emoji_lstm_forward.8} parent=11 // pred_region
          _
        $region16: #{emoji_lstm_forward.8} parent=11 // pred_fallthru
          _
      $region12: #{emoji_lstm_forward.8} parent=5 // pred_fallthru
        _
      %p159 = scmp.lt.s32.totalorder %s16, 2
      // Predicated region
      $region17: #{emoji_lstm_forward.8} parent=5 // pred_check
        %p160 = pneg %p159
      $region18: #{emoji_lstm_forward.8} parent=5 // pred_check_branch
        %162 = sbr.rel (%p160) target = $region20
      $region19: #{emoji_lstm_forward.8} parent=5 // pred_region
        // Predicated region
        $region21: #{emoji_lstm_forward.8} parent=19 // pred_check
          %p163 = pneg %p36
        $region22: #{emoji_lstm_forward.8} parent=19 // pred_check_branch
          %165 = sbr.rel (%p163) target = $region24
        $region23: #{emoji_lstm_forward.8} parent=19 // pred_region
          %s166 = sand.u32 %s26, 1
          %s167 = sand.u32 %s26, 1
          %s168 = smul.addr %s167, 96
          %s169 = scalar_lea.vmem [#allocation4], %s168
          %s170 = smul.u32 4, %s16
          %s171 = smul.addr %s170, 2
          %s172 = scalar_lea.vmem %s1, %s171
          // Predicated region
          $region25: #{emoji_lstm_forward.8} parent=23 // pred_check
            _
          $region26: #{emoji_lstm_forward.8} parent=23 // pred_check_branch
            %174 = sbr.rel (0) target = $region28
          $region27: #{emoji_lstm_forward.8} parent=23 // pred_region
            // Predicated region
            $region29: #{emoji_lstm_forward.8} parent=27 // pred_check
              _
            $region30: #{emoji_lstm_forward.8} parent=27 // pred_check_branch
              %176 = sbr.rel (0) target = $region32
            $region31: #{emoji_lstm_forward.8} parent=27 // pred_region
              // Predicated region
              $region44: #{emoji_lstm_forward.8} parent=31 // pred_check
                _
              $region45: #{emoji_lstm_forward.8} parent=31 // pred_check_branch
                %213 = sbr.rel (0) target = $region47
              $region46: #{emoji_lstm_forward.8} parent=31 // pred_region
                loop: start=0, step=1, limit=1
                $region48: #{emoji_lstm_forward.8} parent=46 // loop_pre_header
                  _
                $region49: #{emoji_lstm_forward.8} parent=46 // loop_header
                  %s215 = sphi 0, %s219
                  %p216 = scmp.ge.s32.totalorder %s215, 1
                  %s220 = sphi %s172, %s172
                  %s221 = sphi %s169, %s169
                $region50: #{emoji_lstm_forward.8} parent=46 // loop_header_branch
                  %218 = sbr.rel (%p216) target = $region54
                $region51: #{emoji_lstm_forward.8} parent=46 // loop_body
                  %v222 = vld [vmem:[%s220] sm:$0xff]
                  %223 = vst [vmem:[%s221] sm:$0xff] %v222
                  %v224 = vld [vmem:[%s220 + $0x10] sm:$0xff]
                  %225 = vst [vmem:[%s221 + $0x8] sm:$0xff] %v224
                  %v226 = vld [vmem:[%s220 + $0x20] sm:$0xff]
                  %227 = vst [vmem:[%s221 + $0x10] sm:$0xff] %v226
                  %v228 = vld [vmem:[%s220 + $0x30] sm:$0xff]
                  %229 = vst [vmem:[%s221 + $0x18] sm:$0xff] %v228
                  %v230 = vld [vmem:[%s220 + $0x40] sm:$0xff]
                  %231 = vst [vmem:[%s221 + $0x20] sm:$0xff] %v230
                  %v232 = vld [vmem:[%s220 + $0x50] sm:$0xff]
                  %233 = vst [vmem:[%s221 + $0x28] sm:$0xff] %v232
                  %v234 = vld [vmem:[%s220 + $0x60] sm:$0xff]
                  %235 = vst [vmem:[%s221 + $0x30] sm:$0xff] %v234
                  %v236 = vld [vmem:[%s220 + $0x70] sm:$0xff]
                  %237 = vst [vmem:[%s221 + $0x38] sm:$0xff] %v236
                  %v238 = vld [vmem:[%s220 + $0x80] sm:$0xff]
                  %239 = vst [vmem:[%s221 + $0x40] sm:$0xff] %v238
                  %v240 = vld [vmem:[%s220 + $0x90] sm:$0xff]
                  %241 = vst [vmem:[%s221 + $0x48] sm:$0xff] %v240
                  %v242 = vld [vmem:[%s220 + $0xa0] sm:$0xff]
                  %243 = vst [vmem:[%s221 + $0x50] sm:$0xff] %v242
                  %v244 = vld [vmem:[%s220 + $0xb0] sm:$0xff]
                  %245 = vst [vmem:[%s221 + $0x58] sm:$0xff] %v244
                $region52: #{emoji_lstm_forward.8} parent=46 // loop_footer
                  %s219 = sadd.s32 1, %s215
                $region53: #{emoji_lstm_forward.8} parent=46 // loop_footer_branch
                  %214 = sbr.rel target = $region49
                $region54: #{emoji_lstm_forward.8} parent=46 // loop_exit
                  _
              $region47: #{emoji_lstm_forward.8} parent=31 // pred_fallthru
                _
              // Predicated region
              $region55: #{emoji_lstm_forward.8} parent=31 // pred_check
                _
              $region56: #{emoji_lstm_forward.8} parent=31 // pred_check_branch
                %247 = sbr.rel target = $region58
              $region57: #{emoji_lstm_forward.8} parent=31 // pred_region
                _
              $region58: #{emoji_lstm_forward.8} parent=31 // pred_fallthru
                _
            $region32: #{emoji_lstm_forward.8} parent=27 // pred_fallthru
              _
            // Predicated region
            $region33: #{emoji_lstm_forward.8} parent=27 // pred_check
              _
            $region34: #{emoji_lstm_forward.8} parent=27 // pred_check_branch
              %178 = sbr.rel target = $region36
            $region35: #{emoji_lstm_forward.8} parent=27 // pred_region
              loop: start=0, step=1, limit=1
              $region37: #{emoji_lstm_forward.8} parent=35 // loop_pre_header
                _
              $region38: #{emoji_lstm_forward.8} parent=35 // loop_header
                %s181 = sphi 0, %s185
                %p182 = scmp.ge.s32.totalorder %s181, 1
                %s186 = sphi %s172, %s172
                %s187 = sphi %s169, %s169
              $region39: #{emoji_lstm_forward.8} parent=35 // loop_header_branch
                %184 = sbr.rel (%p182) target = $region43
              $region40: #{emoji_lstm_forward.8} parent=35 // loop_body
                %v188 = vld [vmem:[%s186] sm:$0xff]
                %189 = vst [vmem:[%s187] sm:$0xff] %v188
                %v190 = vld [vmem:[%s186 + $0x10] sm:$0xff]
                %191 = vst [vmem:[%s187 + $0x8] sm:$0xff] %v190
                %v192 = vld [vmem:[%s186 + $0x20] sm:$0xff]
                %193 = vst [vmem:[%s187 + $0x10] sm:$0xff] %v192
                %v194 = vld [vmem:[%s186 + $0x30] sm:$0xff]
                %195 = vst [vmem:[%s187 + $0x18] sm:$0xff] %v194
                %v196 = vld [vmem:[%s186 + $0x40] sm:$0xff]
                %197 = vst [vmem:[%s187 + $0x20] sm:$0xff] %v196
                %v198 = vld [vmem:[%s186 + $0x50] sm:$0xff]
                %199 = vst [vmem:[%s187 + $0x28] sm:$0xff] %v198
                %v200 = vld [vmem:[%s186 + $0x60] sm:$0xff]
                %201 = vst [vmem:[%s187 + $0x30] sm:$0xff] %v200
                %v202 = vld [vmem:[%s186 + $0x70] sm:$0xff]
                %203 = vst [vmem:[%s187 + $0x38] sm:$0xff] %v202
                %v204 = vld [vmem:[%s186 + $0x80] sm:$0xff]
                %205 = vst [vmem:[%s187 + $0x40] sm:$0xff] %v204
                %v206 = vld [vmem:[%s186 + $0x90] sm:$0xff]
                %207 = vst [vmem:[%s187 + $0x48] sm:$0xff] %v206
                %v208 = vld [vmem:[%s186 + $0xa0] sm:$0xff]
                %209 = vst [vmem:[%s187 + $0x50] sm:$0xff] %v208
                %v210 = vld [vmem:[%s186 + $0xb0] sm:$0xff]
                %211 = vst [vmem:[%s187 + $0x58] sm:$0xff] %v210
              $region41: #{emoji_lstm_forward.8} parent=35 // loop_footer
                %s185 = sadd.s32 1, %s181
              $region42: #{emoji_lstm_forward.8} parent=35 // loop_footer_branch
                %180 = sbr.rel target = $region38
              $region43: #{emoji_lstm_forward.8} parent=35 // loop_exit
                _
            $region36: #{emoji_lstm_forward.8} parent=27 // pred_fallthru
              _
          $region28: #{emoji_lstm_forward.8} parent=23 // pred_fallthru
            _
          %248 = vnop
        $region24: #{emoji_lstm_forward.8} parent=19 // pred_fallthru
          _
        // Predicated region
        $region59: #{emoji_lstm_forward.8} parent=19 // pred_check
          %p249 = pneg %p83
        $region60: #{emoji_lstm_forward.8} parent=19 // pred_check_branch
          %251 = sbr.rel (%p249) target = $region62
        $region61: #{emoji_lstm_forward.8} parent=19 // pred_region
          %p252 = scmp.lt.s32.totalorder %s16, 1
          %s253 = scalar_select %p252, %s16, 1
          %s254 = smul.addr %s253, 64
          %s255 = smul.addr %s254, 4
          %s256 = scalar_lea.vmem %s3, %s255
        $region62: #{emoji_lstm_forward.8} parent=19 // pred_fallthru
          _
      $region20: #{emoji_lstm_forward.8} parent=5 // pred_fallthru
        _
      %p257 = scmp.le.s32.totalorder 1, %s16
      %p258 = scmp.lt.s32.totalorder %s16, 3
      %p259 = pnand %p257, %p258
      %p260 = pneg %p259
      // Predicated region
      $region63: #{emoji_lstm_forward.8} parent=5 // pred_check
        _
      $region64: #{emoji_lstm_forward.8} parent=5 // pred_check_branch
        %262 = sbr.rel (%p259) target = $region66
      $region65: #{emoji_lstm_forward.8} parent=5 // pred_region
        %s263 = ssub.s32 %s16, 1
        %s264 = sand.u32 %s29, 1
        %s265 = sand.u32 %s29, 1
        %s266 = smul.addr %s265, 96
        %s267 = scalar_lea.vmem [#allocation4], %s266
        // Predicated region
        $region67: #{emoji_lstm_forward.8} parent=65 // pred_check
          %p268 = pneg %p42
        $region68: #{emoji_lstm_forward.8} parent=65 // pred_check_branch
          %270 = sbr.rel (%p268) target = $region70
        $region69: #{emoji_lstm_forward.8} parent=65 // pred_region
          _
        $region70: #{emoji_lstm_forward.8} parent=65 // pred_fallthru
          _
        %s271 = sand.u32 %s29, 1
        %s272 = sand.u32 %s29, 1
        %s273 = smul.addr %s272, 96
        %s274 = scalar_lea.vmem [#allocation4], %s273
        %p275 = pneg %p42
        %p276 = pneg %p39
        %p277 = pneg %p63
        %p278 = pneg %p60
        %p279 = scmp.lt.s32.totalorder %s21, 1
        %s280 = scalar_select %p279, %s21, 1
        %s281 = smul.addr %s280, 64
        %s282 = smul.addr %s281, 4
        %s283 = scalar_lea.vmem %s3, %s282
        %p284 = pneg %p89
        %p285 = pneg %p86
        %p286 = pneg %p115
        %p287 = pneg %p112
        %s288 = sand.u32 %s102, 1
        %s289 = scalar_lea.sflag [#allocation6], %s288
        %s290 = sand.u32 %s102, 1
        %s291 = smul.addr %s290, 24
        %s292 = scalar_lea.vmem [#allocation5], %s291
        %p293 = pneg %p141
        %p294 = pneg %p138
        %p295 = scmp.lt.s32.totalorder %s21, 1
        %s296 = scalar_select %p295, %s21, 1
        %s297 = smul.addr %s296, 2
        %s298 = scalar_lea.vmem %s5, %s297
        %s299 = smul.u32 4, %s21
        %p300 = scmp.lt.s32.totalorder %s21, 1
        %s301 = scalar_select %p300, %s21, 1
        %s302 = smul.addr %s301, 64
        %s303 = smul.addr %s302, 4
        %s304 = scalar_lea.vmem %s3, %s303
        %p305 = scmp.lt.s32.totalorder %s21, 1
        %s306 = scalar_select %p305, %s21, 1
        %s307 = smul.addr %s306, 2
        %s308 = scalar_lea.vmem %s5, %s307
        %s310 = sld [smem:[#allocation3]]
        %v311 = vld [vmem:[%s304] sm:$0xff]
        %v312 = vld [vmem:[%s304 + $0x8] sm:$0xff]
        %v313 = vld [vmem:[%s304 + $0x10] sm:$0xff]
        %v314 = vld [vmem:[%s304 + $0x18] sm:$0xff]
        %v315 = vld [vmem:[%s304 + $0x20] sm:$0xff]
        %v316 = vld [vmem:[%s304 + $0x28] sm:$0xff]
        %v317 = vld [vmem:[%s304 + $0x30] sm:$0xff]
        %v318 = vld [vmem:[%s304 + $0x38] sm:$0xff]
        %v319 = vld [vmem:[%s304 + $0x40] sm:$0xff]
        %v320 = vld [vmem:[%s304 + $0x48] sm:$0xff]
        %v321 = vld [vmem:[%s304 + $0x50] sm:$0xff]
        %v322 = vld [vmem:[%s304 + $0x58] sm:$0xff]
        %v323 = vld [vmem:[%s304 + $0x60] sm:$0xff]
        %v324 = vld [vmem:[%s304 + $0x68] sm:$0xff]
        %v325 = vld [vmem:[%s304 + $0x70] sm:$0xff]
        %v326 = vld [vmem:[%s304 + $0x78] sm:$0xff]
        %v327 = vld [vmem:[%s304 + $0x80] sm:$0xff]
        %v328 = vld [vmem:[%s304 + $0x88] sm:$0xff]
        %v329 = vld [vmem:[%s304 + $0x90] sm:$0xff]
        %v330 = vld [vmem:[%s304 + $0x98] sm:$0xff]
        %v331 = vld [vmem:[%s304 + $0xa0] sm:$0xff]
        %v332 = vld [vmem:[%s304 + $0xa8] sm:$0xff]
        %v333 = vld [vmem:[%s304 + $0xb0] sm:$0xff]
        %v334 = vld [vmem:[%s304 + $0xb8] sm:$0xff]
        %v335 = vld [vmem:[%s304 + $0xc0] sm:$0xff]
        %v336 = vld [vmem:[%s304 + $0xc8] sm:$0xff]
        %v337 = vld [vmem:[%s304 + $0xd0] sm:$0xff]
        %v338 = vld [vmem:[%s304 + $0xd8] sm:$0xff]
        %v339 = vld [vmem:[%s304 + $0xe0] sm:$0xff]
        %v340 = vld [vmem:[%s304 + $0xe8] sm:$0xff]
        %v341 = vld [vmem:[%s304 + $0xf0] sm:$0xff]
        %v342 = vld [vmem:[%s304 + $0xf8] sm:$0xff]
        %v343 = vld [vmem:[%s2] sm:$0x3]
        %344 = vst [vmem:[%s292] sm:$0x3] 0.0
        %345 = vst [vmem:[%s292 + $0x2] sm:$0x3] 0.0
        %346 = vst [vmem:[%s292 + $0x4] sm:$0x3] 0.0
        %347 = vst [vmem:[%s292 + $0x6] sm:$0x3] 0.0
        %348 = vst [vmem:[%s292 + $0x8] sm:$0x3] 0.0
        %349 = vst [vmem:[%s292 + $0xa] sm:$0x3] 0.0
        %350 = vst [vmem:[%s292 + $0xc] sm:$0x3] 0.0
        %351 = vst [vmem:[%s292 + $0xe] sm:$0x3] 0.0
        %352 = vst [vmem:[%s292 + $0x10] sm:$0x3] 0.0
        %353 = vst [vmem:[%s292 + $0x12] sm:$0x3] 0.0
        %354 = vst [vmem:[%s292 + $0x14] sm:$0x3] 0.0
        %355 = vst [vmem:[%s292 + $0x16] sm:$0x3] 0.0
        // While loop
        $region71: #{emoji_lstm_forward.8} parent=65 // loop_pre_header
          _
        $region72: #{emoji_lstm_forward.8} parent=65 // loop_header
          %s357 = sphi 0, %s359
          %p358 = scmp.ge.s32.totalorder %s357, %s310
          %v362 = vphi 0.0, %v677
          %v363 = vphi 0.0, %v678
        $region73: #{emoji_lstm_forward.8} parent=65 // loop_header_branch
          %361 = sbr.rel (%p358) target = $region77
        $region74: #{emoji_lstm_forward.8} parent=65 // loop_body
          %s364 = ssub.s32 %s310, 1
          %s365 = smul.u32 %s357, 2
          %s366 = ssub.s32 %s364, %s365
          %s367 = smul.u32 %s21, %s366
          %s368 = sadd.s32 %s357, %s367
          %s369 = smul.u32 %s368, 4
          %s370 = smul.addr %s369, 2
          %s371 = scalar_lea.vmem %s267, %s370 [#allocation4]
          %v372 = vld [vmem:[%s371] sm:$0xff]
          %v373 = vpack.c.bf16 %v362, %v362
          %v406 = vunpack.c.l.b16 %v311
          %v407 = vunpack.c.h.b16 %v311
          %v408 = vunpack.c.l.b16 %v312
          %v409 = vunpack.c.h.b16 %v312
          %v410 = vunpack.c.l.b16 %v313
          %v411 = vunpack.c.h.b16 %v313
          %v412 = vunpack.c.l.b16 %v314
          %v413 = vunpack.c.h.b16 %v314
          %v414 = vunpack.c.l.b16 %v315
          %v415 = vunpack.c.h.b16 %v315
          %v416 = vunpack.c.l.b16 %v316
          %v417 = vunpack.c.h.b16 %v316
          %v418 = vunpack.c.l.b16 %v317
          %v419 = vunpack.c.h.b16 %v317
          %v420 = vunpack.c.l.b16 %v318
          %v421 = vunpack.c.h.b16 %v318
          %v422 = vunpack.c.l.b16 %v319
          %v423 = vunpack.c.h.b16 %v319
          %v424 = vunpack.c.l.b16 %v320
          %v425 = vunpack.c.h.b16 %v320
          %v426 = vunpack.c.l.b16 %v321
          %v427 = vunpack.c.h.b16 %v321
          %v428 = vunpack.c.l.b16 %v322
          %v429 = vunpack.c.h.b16 %v322
          %v430 = vunpack.c.l.b16 %v323
          %v431 = vunpack.c.h.b16 %v323
          %v432 = vunpack.c.l.b16 %v324
          %v433 = vunpack.c.h.b16 %v324
          %v434 = vunpack.c.l.b16 %v325
          %v435 = vunpack.c.h.b16 %v325
          %v436 = vunpack.c.l.b16 %v326
          %v437 = vunpack.c.h.b16 %v326
          %v438 = vunpack.c.l.b16 %v327
          %v439 = vunpack.c.h.b16 %v327
          %v440 = vunpack.c.l.b16 %v328
          %v441 = vunpack.c.h.b16 %v328
          %v442 = vunpack.c.l.b16 %v329
          %v443 = vunpack.c.h.b16 %v329
          %v444 = vunpack.c.l.b16 %v330
          %v445 = vunpack.c.h.b16 %v330
          %v446 = vunpack.c.l.b16 %v331
          %v447 = vunpack.c.h.b16 %v331
          %v448 = vunpack.c.l.b16 %v332
          %v449 = vunpack.c.h.b16 %v332
          %v450 = vunpack.c.l.b16 %v333
          %v451 = vunpack.c.h.b16 %v333
          %v452 = vunpack.c.l.b16 %v334
          %v453 = vunpack.c.h.b16 %v334
          %v454 = vunpack.c.l.b16 %v335
          %v455 = vunpack.c.h.b16 %v335
          %v456 = vunpack.c.l.b16 %v336
          %v457 = vunpack.c.h.b16 %v336
          %v458 = vunpack.c.l.b16 %v337
          %v459 = vunpack.c.h.b16 %v337
          %v460 = vunpack.c.l.b16 %v338
          %v461 = vunpack.c.h.b16 %v338
          %v462 = vunpack.c.l.b16 %v339
          %v463 = vunpack.c.h.b16 %v339
          %v464 = vunpack.c.l.b16 %v340
          %v465 = vunpack.c.h.b16 %v340
          %v466 = vunpack.c.l.b16 %v341
          %v467 = vunpack.c.h.b16 %v341
          %v468 = vunpack.c.l.b16 %v342
          %v469 = vunpack.c.h.b16 %v342
          %v470 = vpack.c.b16 %v410, %v406
          %v471 = vpack.c.b16 %v411, %v407
          %v472 = vpack.c.b16 %v412, %v408
          %v473 = vpack.c.b16 %v413, %v409
          %v474 = vpack.c.b16 %v418, %v414
          %v475 = vpack.c.b16 %v419, %v415
          %v476 = vpack.c.b16 %v420, %v416
          %v477 = vpack.c.b16 %v421, %v417
          %v478 = vpack.c.b16 %v426, %v422
          %v479 = vpack.c.b16 %v427, %v423
          %v480 = vpack.c.b16 %v428, %v424
          %v481 = vpack.c.b16 %v429, %v425
          %v482 = vpack.c.b16 %v434, %v430
          %v483 = vpack.c.b16 %v435, %v431
          %v484 = vpack.c.b16 %v436, %v432
          %v485 = vpack.c.b16 %v437, %v433
          %v486 = vpack.c.b16 %v442, %v438
          %v487 = vpack.c.b16 %v443, %v439
          %v488 = vpack.c.b16 %v444, %v440
          %v489 = vpack.c.b16 %v445, %v441
          %v490 = vpack.c.b16 %v450, %v446
          %v491 = vpack.c.b16 %v451, %v447
          %v492 = vpack.c.b16 %v452, %v448
          %v493 = vpack.c.b16 %v453, %v449
          %v494 = vpack.c.b16 %v458, %v454
          %v495 = vpack.c.b16 %v459, %v455
          %v496 = vpack.c.b16 %v460, %v456
          %v497 = vpack.c.b16 %v461, %v457
          %v498 = vpack.c.b16 %v466, %v462
          %v499 = vpack.c.b16 %v467, %v463
          %v500 = vpack.c.b16 %v468, %v464
          %v501 = vpack.c.b16 %v469, %v465
          %534 = vmatprep.subr.bf16.mxu0 %v471
          %535 = vmatpush1.bf16.msra.mxu0 %v470
          %536 = vmatprep.subr.bf16.mxu0 %v475
          %537 = vmatpush1.bf16.msra.mxu0 %v474
          %538 = vmatprep.subr.bf16.mxu0 %v479
          %539 = vmatpush1.bf16.msra.mxu0 %v478
          %540 = vmatprep.subr.bf16.mxu0 %v483
          %541 = vmatpush1.bf16.msra.mxu0 %v482
          %542 = vmatprep.subr.bf16.mxu0 %v487
          %543 = vmatpush1.bf16.msra.mxu0 %v486
          %544 = vmatprep.subr.bf16.mxu0 %v491
          %545 = vmatpush1.bf16.msra.mxu0 %v490
          %546 = vmatprep.subr.bf16.mxu0 %v495
          %547 = vmatpush1.bf16.msra.mxu0 %v494
          %548 = vmatprep.subr.bf16.mxu0 %v499
          %549 = vmatpush1.bf16.msra.mxu0 %v498
          %550 = vmatprep.subr.bf16.mxu0 0
          %551 = vmatpush1.bf16.msra.mxu0 0
          %552 = vmatprep.subr.bf16.mxu0 0
          %553 = vmatpush1.bf16.msra.mxu0 0
          %554 = vmatprep.subr.bf16.mxu0 0
          %555 = vmatpush1.bf16.msra.mxu0 0
          %556 = vmatprep.subr.bf16.mxu0 0
          %557 = vmatpush1.bf16.msra.mxu0 0
          %558 = vmatprep.subr.bf16.mxu0 0
          %559 = vmatpush1.bf16.msra.mxu0 0
          %560 = vmatprep.subr.bf16.mxu0 0
          %561 = vmatpush1.bf16.msra.mxu0 0
          %562 = vmatprep.subr.bf16.mxu0 0
          %563 = vmatpush1.bf16.msra.mxu0 0
          %564 = vmatprep.subr.bf16.mxu0 0
          %565 = vmatpush1.bf16.msra.mxu0 0
          %566 = vmatprep.mubr.bf16.mxu0 0
          %567 = vmatmul.mubr.bf16.gmra.mrb[0].mxu0 %v373
          %v568 = vpop.f32.mrb[0].mxu0
          %v569 = vadd.f32 0.0, %v568
          %v570 = vpop.f32.mrb[0].mxu0
          %v571 = vadd.f32 0.0, %v570
          %v572 = vpop.f32.mrb[0].mxu0
          %v573 = vpop.f32.mrb[0].mxu0
          %574 = vdwg.mxu0
          %575 = vmatprep.subr.bf16.mxu0 %v473
          %576 = vmatpush1.bf16.msra.mxu0 %v472
          %577 = vmatprep.subr.bf16.mxu0 %v477
          %578 = vmatpush1.bf16.msra.mxu0 %v476
          %579 = vmatprep.subr.bf16.mxu0 %v481
          %580 = vmatpush1.bf16.msra.mxu0 %v480
          %581 = vmatprep.subr.bf16.mxu0 %v485
          %582 = vmatpush1.bf16.msra.mxu0 %v484
          %583 = vmatprep.subr.bf16.mxu0 %v489
          %584 = vmatpush1.bf16.msra.mxu0 %v488
          %585 = vmatprep.subr.bf16.mxu0 %v493
          %586 = vmatpush1.bf16.msra.mxu0 %v492
          %587 = vmatprep.subr.bf16.mxu0 %v497
          %588 = vmatpush1.bf16.msra.mxu0 %v496
          %589 = vmatprep.subr.bf16.mxu0 %v501
          %590 = vmatpush1.bf16.msra.mxu0 %v500
          %591 = vmatprep.subr.bf16.mxu0 0
          %592 = vmatpush1.bf16.msra.mxu0 0
          %593 = vmatprep.subr.bf16.mxu0 0
          %594 = vmatpush1.bf16.msra.mxu0 0
          %595 = vmatprep.subr.bf16.mxu0 0
          %596 = vmatpush1.bf16.msra.mxu0 0
          %597 = vmatprep.subr.bf16.mxu0 0
          %598 = vmatpush1.bf16.msra.mxu0 0
          %599 = vmatprep.subr.bf16.mxu0 0
          %600 = vmatpush1.bf16.msra.mxu0 0
          %601 = vmatprep.subr.bf16.mxu0 0
          %602 = vmatpush1.bf16.msra.mxu0 0
          %603 = vmatprep.subr.bf16.mxu0 0
          %604 = vmatpush1.bf16.msra.mxu0 0
          %605 = vmatprep.subr.bf16.mxu0 0
          %606 = vmatpush1.bf16.msra.mxu0 0
          %607 = vmatprep.mubr.bf16.mxu0 0
          %608 = vmatmul.mubr.bf16.gmra.mrb[0].mxu0 %v373
          %v609 = vpop.f32.mrb[0].mxu0
          %v610 = vadd.f32 0.0, %v609
          %v611 = vpop.f32.mrb[0].mxu0
          %v612 = vadd.f32 0.0, %v611
          %v613 = vpop.f32.mrb[0].mxu0
          %v614 = vpop.f32.mrb[0].mxu0
          %615 = vdwg.mxu0
          %v620 = vcombine.low %v569, %v571
          %v621 = vcombine.low %v610, %v612
          %v623 = vunpack.c.l.s4 1983009808
          %v624 = vunpack.c.0.s8 %v623
          %v625 = vlaneseq
          %v626 = vshrl.u32 %v625, 7
          %v627 = vsub.s32 %v624, %v626
          %v628 = vrot.slane %v620, %v627
          %v630 = vunpack.c.l.s4 1983009808
          %v631 = vunpack.c.0.s8 %v630
          %v632 = vlaneseq
          %v633 = vshrl.u32 %v632, 7
          %v634 = vsub.s32 %v631, %v633
          %v635 = vrot.slane %v621, %v634
          %v636 = vcombine.low %v628, %v635
          %v638 = vadd.f32 %v372, %v636
          %v639 = vxor.u32 %v638, 2147483648
          %v640 = vmul.f32 %v639, 1.442695
          %v641 = vpow.pop %v640
          %v642 = vadd.f32 %v641, 1.0
          %v643 = vrcp.pop %v642
          %v644 = vmul.f32 1.0, %v643
          %v646 = vrot.slane %v638, 2
          %v648 = vxor.u32 %v646, 2147483648
          %v649 = vmul.f32 %v648, 1.442695
          %v650 = vpow.pop %v649
          %v651 = vadd.f32 %v650, 1.0
          %v652 = vrcp.pop %v651
          %v653 = vmul.f32 1.0, %v652
          %v654 = vrot.slane %v638, 4
          %v656 = vtanh.pop %v654
          %v657 = vrot.slane %v638, 6
          %v659 = vxor.u32 %v657, 2147483648
          %v660 = vmul.f32 %v659, 1.442695
          %v661 = vpow.pop %v660
          %v662 = vadd.f32 %v661, 1.0
          %v663 = vrcp.pop %v662
          %v664 = vmul.f32 1.0, %v663
          %v665 = vmul.f32 %v653, %v363
          %v666 = vmul.f32 %v644, %v656
          %v667 = vadd.f32 %v665, %v666
          %v668 = vtanh.pop %v667
          %v669 = vmul.f32 %v664, %v668
          %v670 = vstv %s368
          %vm671 = vcmp.lt.s32.totalorder %v670, %v343
          %v672 = vsel %vm671, 1, 0
          %673 = vset.pattern.permute.xlu0 0
          %674 = vperm.xlu0 %673, %v672
          %v675 = vpop.permute.xlu0 %674
          %vm676 = vcmp.eq.s32.totalorder %v675, 1
          %v677 = vsel %vm676, %v669, %v362
          %v678 = vsel %vm676, %v667, %v363
          %v679 = vsel %vm676, %v669, 0.0
          %s680 = smul.u32 %s368, 2
          %s681 = scalar_lea.vmem %s292, %s680 [#allocation5]
          %682 = vst [vmem:[%s681] sm:$0x3] %v679
        $region75: #{emoji_lstm_forward.8} parent=65 // loop_footer
          %s359 = sadd.s32 %s357, 1
        $region76: #{emoji_lstm_forward.8} parent=65 // loop_footer_branch
          %356 = sbr.rel target = $region72
        $region77: #{emoji_lstm_forward.8} parent=65 // loop_exit
          _
        %683 = vst [vmem:[%s308] sm:$0x3] %v362
        %s684 = sand.u32 %s102, 1
        %s685 = scalar_lea.sflag [#allocation6], %s684
        %s686 = sand.u32 %s102, 1
        %s687 = smul.addr %s686, 24
        %s688 = scalar_lea.vmem [#allocation5], %s687
        %p689 = scmp.lt.s32.totalorder %s21, 1
        %s690 = scalar_select %p689, %s21, 1
        %s691 = smul.addr %s690, 2
        %s692 = scalar_lea.vmem %s5, %s691
        // Predicated region
        $region78: #{emoji_lstm_forward.8} parent=65 // pred_check
          %p693 = pneg %p112
        $region79: #{emoji_lstm_forward.8} parent=65 // pred_check_branch
          %695 = sbr.rel (%p693) target = $region81
        $region80: #{emoji_lstm_forward.8} parent=65 // pred_region
          %s697 = ssub.s32 384, 384
          %698 = vsyncadd %s685, %s697
          %s699 = smul.addr %s21, 32
          %s700 = scalar_lea.hbm %s4, %s699
          %s701 = sshll.u32 %s688, 4
          %s702 = int_to_ptr.vmem [resolvable:$true] %s701
          %707 = dma.vmem_to_hbm [thread:$0]  %s702, 384, %s700, %s685, 32, 64, 2
        $region81: #{emoji_lstm_forward.8} parent=65 // pred_fallthru
          _
        // Predicated region
        $region82: #{emoji_lstm_forward.8} parent=65 // pred_check
          %p708 = pneg %p138
        $region83: #{emoji_lstm_forward.8} parent=65 // pred_check_branch
          %710 = sbr.rel (%p708) target = $region85
        $region84: #{emoji_lstm_forward.8} parent=65 // pred_region
          _
        $region85: #{emoji_lstm_forward.8} parent=65 // pred_fallthru
          _
      $region66: #{emoji_lstm_forward.8} parent=5 // pred_fallthru
        _
      %p711 = scmp.le.s32.totalorder 2, %s16
      // Predicated region
      $region86: #{emoji_lstm_forward.8} parent=5 // pred_check
        %p712 = pneg %p711
      $region87: #{emoji_lstm_forward.8} parent=5 // pred_check_branch
        %714 = sbr.rel (%p712) target = $region89
      $region88: #{emoji_lstm_forward.8} parent=5 // pred_region
        %s715 = ssub.s32 %s16, 2
        // Predicated region
        $region90: #{emoji_lstm_forward.8} parent=88 // pred_check
          %p716 = pneg %p118
        $region91: #{emoji_lstm_forward.8} parent=88 // pred_check_branch
          %718 = sbr.rel (%p716) target = $region93
        $region92: #{emoji_lstm_forward.8} parent=88 // pred_region
          %s719 = sand.u32 %s103, 1
          %s720 = scalar_lea.sflag [#allocation6], %s719
          %s721 = sand.u32 %s103, 1
          %s722 = smul.addr %s721, 24
          %s723 = scalar_lea.vmem [#allocation5], %s722
          %724 = dma.done %s720, 384
        $region93: #{emoji_lstm_forward.8} parent=88 // pred_fallthru
          _
        // Predicated region
        $region94: #{emoji_lstm_forward.8} parent=88 // pred_check
          %p725 = pneg %p144
        $region95: #{emoji_lstm_forward.8} parent=88 // pred_check_branch
          %727 = sbr.rel (%p725) target = $region97
        $region96: #{emoji_lstm_forward.8} parent=88 // pred_region
          %p728 = scmp.lt.s32.totalorder %s22, 1
          %s729 = scalar_select %p728, %s22, 1
          %s730 = smul.addr %s729, 2
          %s731 = scalar_lea.vmem %s5, %s730
        $region97: #{emoji_lstm_forward.8} parent=88 // pred_fallthru
          _
      $region89: #{emoji_lstm_forward.8} parent=5 // pred_fallthru
        _
    $region6: #{emoji_lstm_forward.8} parent=1 // loop_footer
      %s20 = sadd.s32 1, %s16
    $region7: #{emoji_lstm_forward.8} parent=1 // loop_footer_branch
      %15 = sbr.rel target = $region3
    $region8: #{emoji_lstm_forward.8} parent=1 // loop_exit
      _
    %732 = vsyncpa [#allocation6], 1
    %s733 = scalar_lea.sflag [#allocation6], 1
    %734 = vsyncpa %s733, 1

// kernel: emoji_lstm_forward.7
$region0: #{emoji_lstm_forward.7}
  #allocation0 [shape = 'u32[]', space=smem, size = 0x4, offset = 0x4, fixed_abs, tag = 'smem constant byte address 0x4 - core index']
  #allocation1 [shape = 'u32[144,128]{1,0:T(1,128)}', space=vmem, size = 0x12000, scoped, tag = 'internal scratch']
  %s0 = inlined_call_operand.vmem [shape: f32[24,256], index: 0, kind: input, shape index: {}]
  %s1 = inlined_call_operand.vmem [shape: bf16[256,1024], index: 1, kind: input, shape index: {}]
  %s2 = inlined_call_operand.vmem [shape: f32[1,1024], index: 2, kind: input, shape index: {}]
  %s3 = inlined_call_operand.vmem [shape: f32[24,1024], index: 3, kind: output, shape index: {}]
  %s4 = sld [smem:[#allocation0]]
  $region22: #{emoji_lstm_forward.7} parent=0
    _
  %s6 = ssub.s32 1, %s4
  %s7 = scalar_select 0, %s6, %s4
  // Predicated region
  $region2: #{emoji_lstm_forward.7} parent=0 // pred_check
    _
  $region3: #{emoji_lstm_forward.7} parent=0 // pred_check_branch
    %9 = sbr.rel (0) target = $region5
  $region4: #{emoji_lstm_forward.7} parent=0 // pred_region
    _
  $region5: #{emoji_lstm_forward.7} parent=0 // pred_fallthru
    _
  // Predicated region
  $region6: #{emoji_lstm_forward.7} parent=0 // pred_check
    _
  $region7: #{emoji_lstm_forward.7} parent=0 // pred_check_branch
    %11 = sbr.rel (0) target = $region9
  $region8: #{emoji_lstm_forward.7} parent=0 // pred_region
    _
  $region9: #{emoji_lstm_forward.7} parent=0 // pred_fallthru
    _
  // Predicated region
  $region10: #{emoji_lstm_forward.7} parent=0 // pred_check
    _
  $region11: #{emoji_lstm_forward.7} parent=0 // pred_check_branch
    %13 = sbr.rel (0) target = $region13
  $region12: #{emoji_lstm_forward.7} parent=0 // pred_region
    _
  $region13: #{emoji_lstm_forward.7} parent=0 // pred_fallthru
    _
  %v14 = vld [vmem:[%s0] sm:$0xff]
  %v15 = vld [vmem:[%s0 + $0x8] sm:$0xff]
  %v16 = vld [vmem:[%s0 + $0x10] sm:$0xff]
  %v17 = vld [vmem:[%s0 + $0x18] sm:$0xff]
  %v18 = vld [vmem:[%s0 + $0x20] sm:$0xff]
  %v19 = vld [vmem:[%s0 + $0x28] sm:$0xff]
  %v20 = vpack.c.bf16 %v16, %v14
  %v21 = vpack.c.bf16 %v17, %v15
  %v22 = vpack.c.bf16 %v18, %v18
  %v23 = vpack.c.bf16 %v19, %v19
  %v24 = vld [vmem:[%s1] sm:$0xff]
  %v25 = vld [vmem:[%s1 + $0x8] sm:$0xff]
  %v26 = vld [vmem:[%s1 + $0x10] sm:$0xff]
  %v27 = vld [vmem:[%s1 + $0x18] sm:$0xff]
  %v28 = vld [vmem:[%s1 + $0x20] sm:$0xff]
  %v29 = vld [vmem:[%s1 + $0x28] sm:$0xff]
  %v30 = vld [vmem:[%s1 + $0x30] sm:$0xff]
  %v31 = vld [vmem:[%s1 + $0x38] sm:$0xff]
  %v32 = vld [vmem:[%s1 + $0x40] sm:$0xff]
  %v33 = vld [vmem:[%s1 + $0x48] sm:$0xff]
  %v34 = vld [vmem:[%s1 + $0x50] sm:$0xff]
  %v35 = vld [vmem:[%s1 + $0x58] sm:$0xff]
  %v36 = vld [vmem:[%s1 + $0x60] sm:$0xff]
  %v37 = vld [vmem:[%s1 + $0x68] sm:$0xff]
  %v38 = vld [vmem:[%s1 + $0x70] sm:$0xff]
  %v39 = vld [vmem:[%s1 + $0x78] sm:$0xff]
  %v40 = vld [vmem:[%s1 + $0x80] sm:$0xff]
  %v41 = vld [vmem:[%s1 + $0x88] sm:$0xff]
  %v42 = vld [vmem:[%s1 + $0x90] sm:$0xff]
  %v43 = vld [vmem:[%s1 + $0x98] sm:$0xff]
  %v44 = vld [vmem:[%s1 + $0xa0] sm:$0xff]
  %v45 = vld [vmem:[%s1 + $0xa8] sm:$0xff]
  %v46 = vld [vmem:[%s1 + $0xb0] sm:$0xff]
  %v47 = vld [vmem:[%s1 + $0xb8] sm:$0xff]
  %v48 = vld [vmem:[%s1 + $0xc0] sm:$0xff]
  %v49 = vld [vmem:[%s1 + $0xc8] sm:$0xff]
  %v50 = vld [vmem:[%s1 + $0xd0] sm:$0xff]
  %v51 = vld [vmem:[%s1 + $0xd8] sm:$0xff]
  %v52 = vld [vmem:[%s1 + $0xe0] sm:$0xff]
  %v53 = vld [vmem:[%s1 + $0xe8] sm:$0xff]
  %v54 = vld [vmem:[%s1 + $0xf0] sm:$0xff]
  %v55 = vld [vmem:[%s1 + $0xf8] sm:$0xff]
  %v56 = vld [vmem:[%s1 + $0x100] sm:$0xff]
  %v57 = vld [vmem:[%s1 + $0x108] sm:$0xff]
  %v58 = vld [vmem:[%s1 + $0x110] sm:$0xff]
  %v59 = vld [vmem:[%s1 + $0x118] sm:$0xff]
  %v60 = vld [vmem:[%s1 + $0x120] sm:$0xff]
  %v61 = vld [vmem:[%s1 + $0x128] sm:$0xff]
  %v62 = vld [vmem:[%s1 + $0x130] sm:$0xff]
  %v63 = vld [vmem:[%s1 + $0x138] sm:$0xff]
  %v64 = vld [vmem:[%s1 + $0x140] sm:$0xff]
  %v65 = vld [vmem:[%s1 + $0x148] sm:$0xff]
  %v66 = vld [vmem:[%s1 + $0x150] sm:$0xff]
  %v67 = vld [vmem:[%s1 + $0x158] sm:$0xff]
  %v68 = vld [vmem:[%s1 + $0x160] sm:$0xff]
  %v69 = vld [vmem:[%s1 + $0x168] sm:$0xff]
  %v70 = vld [vmem:[%s1 + $0x170] sm:$0xff]
  %v71 = vld [vmem:[%s1 + $0x178] sm:$0xff]
  %v72 = vld [vmem:[%s1 + $0x180] sm:$0xff]
  %v73 = vld [vmem:[%s1 + $0x188] sm:$0xff]
  %v74 = vld [vmem:[%s1 + $0x190] sm:$0xff]
  %v75 = vld [vmem:[%s1 + $0x198] sm:$0xff]
  %v76 = vld [vmem:[%s1 + $0x1a0] sm:$0xff]
  %v77 = vld [vmem:[%s1 + $0x1a8] sm:$0xff]
  %v78 = vld [vmem:[%s1 + $0x1b0] sm:$0xff]
  %v79 = vld [vmem:[%s1 + $0x1b8] sm:$0xff]
  %v80 = vld [vmem:[%s1 + $0x1c0] sm:$0xff]
  %v81 = vld [vmem:[%s1 + $0x1c8] sm:$0xff]
  %v82 = vld [vmem:[%s1 + $0x1d0] sm:$0xff]
  %v83 = vld [vmem:[%s1 + $0x1d8] sm:$0xff]
  %v84 = vld [vmem:[%s1 + $0x1e0] sm:$0xff]
  %v85 = vld [vmem:[%s1 + $0x1e8] sm:$0xff]
  %v86 = vld [vmem:[%s1 + $0x1f0] sm:$0xff]
  %v87 = vld [vmem:[%s1 + $0x1f8] sm:$0xff]
  %v88 = vld [vmem:[%s1 + $0x200] sm:$0xff]
  %v89 = vld [vmem:[%s1 + $0x208] sm:$0xff]
  %v90 = vld [vmem:[%s1 + $0x210] sm:$0xff]
  %v91 = vld [vmem:[%s1 + $0x218] sm:$0xff]
  %v92 = vld [vmem:[%s1 + $0x220] sm:$0xff]
  %v93 = vld [vmem:[%s1 + $0x228] sm:$0xff]
  %v94 = vld [vmem:[%s1 + $0x230] sm:$0xff]
  %v95 = vld [vmem:[%s1 + $0x238] sm:$0xff]
  %v96 = vld [vmem:[%s1 + $0x240] sm:$0xff]
  %v97 = vld [vmem:[%s1 + $0x248] sm:$0xff]
  %v98 = vld [vmem:[%s1 + $0x250] sm:$0xff]
  %v99 = vld [vmem:[%s1 + $0x258] sm:$0xff]
  %v100 = vld [vmem:[%s1 + $0x260] sm:$0xff]
  %v101 = vld [vmem:[%s1 + $0x268] sm:$0xff]
  %v102 = vld [vmem:[%s1 + $0x270] sm:$0xff]
  %v103 = vld [vmem:[%s1 + $0x278] sm:$0xff]
  %v104 = vld [vmem:[%s1 + $0x280] sm:$0xff]
  %v105 = vld [vmem:[%s1 + $0x288] sm:$0xff]
  %v106 = vld [vmem:[%s1 + $0x290] sm:$0xff]
  %v107 = vld [vmem:[%s1 + $0x298] sm:$0xff]
  %v108 = vld [vmem:[%s1 + $0x2a0] sm:$0xff]
  %v109 = vld [vmem:[%s1 + $0x2a8] sm:$0xff]
  %v110 = vld [vmem:[%s1 + $0x2b0] sm:$0xff]
  %v111 = vld [vmem:[%s1 + $0x2b8] sm:$0xff]
  %v112 = vld [vmem:[%s1 + $0x2c0] sm:$0xff]
  %v113 = vld [vmem:[%s1 + $0x2c8] sm:$0xff]
  %v114 = vld [vmem:[%s1 + $0x2d0] sm:$0xff]
  %v115 = vld [vmem:[%s1 + $0x2d8] sm:$0xff]
  %v116 = vld [vmem:[%s1 + $0x2e0] sm:$0xff]
  %v117 = vld [vmem:[%s1 + $0x2e8] sm:$0xff]
  %v118 = vld [vmem:[%s1 + $0x2f0] sm:$0xff]
  %v119 = vld [vmem:[%s1 + $0x2f8] sm:$0xff]
  %v120 = vld [vmem:[%s1 + $0x300] sm:$0xff]
  %v121 = vld [vmem:[%s1 + $0x308] sm:$0xff]
  %v122 = vld [vmem:[%s1 + $0x310] sm:$0xff]
  %v123 = vld [vmem:[%s1 + $0x318] sm:$0xff]
  %v124 = vld [vmem:[%s1 + $0x320] sm:$0xff]
  %v125 = vld [vmem:[%s1 + $0x328] sm:$0xff]
  %v126 = vld [vmem:[%s1 + $0x330] sm:$0xff]
  %v127 = vld [vmem:[%s1 + $0x338] sm:$0xff]
  %v128 = vld [vmem:[%s1 + $0x340] sm:$0xff]
  %v129 = vld [vmem:[%s1 + $0x348] sm:$0xff]
  %v130 = vld [vmem:[%s1 + $0x350] sm:$0xff]
  %v131 = vld [vmem:[%s1 + $0x358] sm:$0xff]
  %v132 = vld [vmem:[%s1 + $0x360] sm:$0xff]
  %v133 = vld [vmem:[%s1 + $0x368] sm:$0xff]
  %v134 = vld [vmem:[%s1 + $0x370] sm:$0xff]
  %v135 = vld [vmem:[%s1 + $0x378] sm:$0xff]
  %v136 = vld [vmem:[%s1 + $0x380] sm:$0xff]
  %v137 = vld [vmem:[%s1 + $0x388] sm:$0xff]
  %v138 = vld [vmem:[%s1 + $0x390] sm:$0xff]
  %v139 = vld [vmem:[%s1 + $0x398] sm:$0xff]
  %v140 = vld [vmem:[%s1 + $0x3a0] sm:$0xff]
  %v141 = vld [vmem:[%s1 + $0x3a8] sm:$0xff]
  %v142 = vld [vmem:[%s1 + $0x3b0] sm:$0xff]
  %v143 = vld [vmem:[%s1 + $0x3b8] sm:$0xff]
  %v144 = vld [vmem:[%s1 + $0x3c0] sm:$0xff]
  %v145 = vld [vmem:[%s1 + $0x3c8] sm:$0xff]
  %v146 = vld [vmem:[%s1 + $0x3d0] sm:$0xff]
  %v147 = vld [vmem:[%s1 + $0x3d8] sm:$0xff]
  %v148 = vld [vmem:[%s1 + $0x3e0] sm:$0xff]
  %v149 = vld [vmem:[%s1 + $0x3e8] sm:$0xff]
  %v150 = vld [vmem:[%s1 + $0x3f0] sm:$0xff]
  %v151 = vld [vmem:[%s1 + $0x3f8] sm:$0xff]
  %v152 = vld [vmem:[%s2] sm:$0xff]
  %v154 = vlaneseq
  %v155 = vshrl.u32 %v154, 7
  %v156 = vsub.s32 0, %v155
  %v157 = vrot.slane %v152, %v156
  %v158 = vlaneseq
  %v159 = vshrl.u32 %v158, 7
  %v160 = vsub.s32 1, %v159
  %v161 = vrot.slane %v152, %v160
  %v162 = vlaneseq
  %v163 = vshrl.u32 %v162, 7
  %v164 = vsub.s32 2, %v163
  %v165 = vrot.slane %v152, %v164
  %v166 = vlaneseq
  %v167 = vshrl.u32 %v166, 7
  %v168 = vsub.s32 3, %v167
  %v169 = vrot.slane %v152, %v168
  %v170 = vlaneseq
  %v171 = vshrl.u32 %v170, 7
  %v172 = vsub.s32 4, %v171
  %v173 = vrot.slane %v152, %v172
  %v174 = vlaneseq
  %v175 = vshrl.u32 %v174, 7
  %v176 = vsub.s32 5, %v175
  %v177 = vrot.slane %v152, %v176
  %v178 = vlaneseq
  %v179 = vshrl.u32 %v178, 7
  %v180 = vsub.s32 6, %v179
  %v181 = vrot.slane %v152, %v180
  %v182 = vlaneseq
  %v183 = vshrl.u32 %v182, 7
  %v184 = vsub.s32 7, %v183
  %v185 = vrot.slane %v152, %v184
  %v322 = vunpack.c.l.b16 %v24
  %v323 = vunpack.c.h.b16 %v24
  %v324 = vunpack.c.l.b16 %v25
  %v325 = vunpack.c.h.b16 %v25
  %v326 = vunpack.c.l.b16 %v26
  %v327 = vunpack.c.h.b16 %v26
  %v328 = vunpack.c.l.b16 %v27
  %v329 = vunpack.c.h.b16 %v27
  %v330 = vunpack.c.l.b16 %v28
  %v331 = vunpack.c.h.b16 %v28
  %v332 = vunpack.c.l.b16 %v29
  %v333 = vunpack.c.h.b16 %v29
  %v334 = vunpack.c.l.b16 %v30
  %v335 = vunpack.c.h.b16 %v30
  %v336 = vunpack.c.l.b16 %v31
  %v337 = vunpack.c.h.b16 %v31
  %v338 = vunpack.c.l.b16 %v32
  %v339 = vunpack.c.h.b16 %v32
  %v340 = vunpack.c.l.b16 %v33
  %v341 = vunpack.c.h.b16 %v33
  %v342 = vunpack.c.l.b16 %v34
  %v343 = vunpack.c.h.b16 %v34
  %v344 = vunpack.c.l.b16 %v35
  %v345 = vunpack.c.h.b16 %v35
  %v346 = vunpack.c.l.b16 %v36
  %v347 = vunpack.c.h.b16 %v36
  %v348 = vunpack.c.l.b16 %v37
  %v349 = vunpack.c.h.b16 %v37
  %v350 = vunpack.c.l.b16 %v38
  %v351 = vunpack.c.h.b16 %v38
  %v352 = vunpack.c.l.b16 %v39
  %v353 = vunpack.c.h.b16 %v39
  %v354 = vunpack.c.l.b16 %v40
  %v355 = vunpack.c.h.b16 %v40
  %v356 = vunpack.c.l.b16 %v41
  %v357 = vunpack.c.h.b16 %v41
  %v358 = vunpack.c.l.b16 %v42
  %v359 = vunpack.c.h.b16 %v42
  %v360 = vunpack.c.l.b16 %v43
  %v361 = vunpack.c.h.b16 %v43
  %v362 = vunpack.c.l.b16 %v44
  %v363 = vunpack.c.h.b16 %v44
  %v364 = vunpack.c.l.b16 %v45
  %v365 = vunpack.c.h.b16 %v45
  %v366 = vunpack.c.l.b16 %v46
  %v367 = vunpack.c.h.b16 %v46
  %v368 = vunpack.c.l.b16 %v47
  %v369 = vunpack.c.h.b16 %v47
  %v370 = vunpack.c.l.b16 %v48
  %v371 = vunpack.c.h.b16 %v48
  %v372 = vunpack.c.l.b16 %v49
  %v373 = vunpack.c.h.b16 %v49
  %v374 = vunpack.c.l.b16 %v50
  %v375 = vunpack.c.h.b16 %v50
  %v376 = vunpack.c.l.b16 %v51
  %v377 = vunpack.c.h.b16 %v51
  %v378 = vunpack.c.l.b16 %v52
  %v379 = vunpack.c.h.b16 %v52
  %v380 = vunpack.c.l.b16 %v53
  %v381 = vunpack.c.h.b16 %v53
  %v382 = vunpack.c.l.b16 %v54
  %v383 = vunpack.c.h.b16 %v54
  %v384 = vunpack.c.l.b16 %v55
  %v385 = vunpack.c.h.b16 %v55
  %v386 = vunpack.c.l.b16 %v56
  %v387 = vunpack.c.h.b16 %v56
  %v388 = vunpack.c.l.b16 %v57
  %v389 = vunpack.c.h.b16 %v57
  %v390 = vunpack.c.l.b16 %v58
  %v391 = vunpack.c.h.b16 %v58
  %v392 = vunpack.c.l.b16 %v59
  %v393 = vunpack.c.h.b16 %v59
  %v394 = vunpack.c.l.b16 %v60
  %v395 = vunpack.c.h.b16 %v60
  %v396 = vunpack.c.l.b16 %v61
  %v397 = vunpack.c.h.b16 %v61
  %v398 = vunpack.c.l.b16 %v62
  %v399 = vunpack.c.h.b16 %v62
  %v400 = vunpack.c.l.b16 %v63
  %v401 = vunpack.c.h.b16 %v63
  %v402 = vunpack.c.l.b16 %v64
  %v403 = vunpack.c.h.b16 %v64
  %v404 = vunpack.c.l.b16 %v65
  %v405 = vunpack.c.h.b16 %v65
  %v406 = vunpack.c.l.b16 %v66
  %v407 = vunpack.c.h.b16 %v66
  %v408 = vunpack.c.l.b16 %v67
  %v409 = vunpack.c.h.b16 %v67
  %v410 = vunpack.c.l.b16 %v68
  %v411 = vunpack.c.h.b16 %v68
  %v412 = vunpack.c.l.b16 %v69
  %v413 = vunpack.c.h.b16 %v69
  %v414 = vunpack.c.l.b16 %v70
  %v415 = vunpack.c.h.b16 %v70
  %v416 = vunpack.c.l.b16 %v71
  %v417 = vunpack.c.h.b16 %v71
  %v418 = vunpack.c.l.b16 %v72
  %v419 = vunpack.c.h.b16 %v72
  %v420 = vunpack.c.l.b16 %v73
  %v421 = vunpack.c.h.b16 %v73
  %v422 = vunpack.c.l.b16 %v74
  %v423 = vunpack.c.h.b16 %v74
  %v424 = vunpack.c.l.b16 %v75
  %v425 = vunpack.c.h.b16 %v75
  %v426 = vunpack.c.l.b16 %v76
  %v427 = vunpack.c.h.b16 %v76
  %v428 = vunpack.c.l.b16 %v77
  %v429 = vunpack.c.h.b16 %v77
  %v430 = vunpack.c.l.b16 %v78
  %v431 = vunpack.c.h.b16 %v78
  %v432 = vunpack.c.l.b16 %v79
  %v433 = vunpack.c.h.b16 %v79
  %v434 = vunpack.c.l.b16 %v80
  %v435 = vunpack.c.h.b16 %v80
  %v436 = vunpack.c.l.b16 %v81
  %v437 = vunpack.c.h.b16 %v81
  %v438 = vunpack.c.l.b16 %v82
  %v439 = vunpack.c.h.b16 %v82
  %v440 = vunpack.c.l.b16 %v83
  %v441 = vunpack.c.h.b16 %v83
  %v442 = vunpack.c.l.b16 %v84
  %v443 = vunpack.c.h.b16 %v84
  %v444 = vunpack.c.l.b16 %v85
  %v445 = vunpack.c.h.b16 %v85
  %v446 = vunpack.c.l.b16 %v86
  %v447 = vunpack.c.h.b16 %v86
  %v448 = vunpack.c.l.b16 %v87
  %v449 = vunpack.c.h.b16 %v87
  %v450 = vunpack.c.l.b16 %v88
  %v451 = vunpack.c.h.b16 %v88
  %v452 = vunpack.c.l.b16 %v89
  %v453 = vunpack.c.h.b16 %v89
  %v454 = vunpack.c.l.b16 %v90
  %v455 = vunpack.c.h.b16 %v90
  %v456 = vunpack.c.l.b16 %v91
  %v457 = vunpack.c.h.b16 %v91
  %v458 = vunpack.c.l.b16 %v92
  %v459 = vunpack.c.h.b16 %v92
  %v460 = vunpack.c.l.b16 %v93
  %v461 = vunpack.c.h.b16 %v93
  %v462 = vunpack.c.l.b16 %v94
  %v463 = vunpack.c.h.b16 %v94
  %v464 = vunpack.c.l.b16 %v95
  %v465 = vunpack.c.h.b16 %v95
  %v466 = vunpack.c.l.b16 %v96
  %v467 = vunpack.c.h.b16 %v96
  %v468 = vunpack.c.l.b16 %v97
  %v469 = vunpack.c.h.b16 %v97
  %v470 = vunpack.c.l.b16 %v98
  %v471 = vunpack.c.h.b16 %v98
  %v472 = vunpack.c.l.b16 %v99
  %v473 = vunpack.c.h.b16 %v99
  %v474 = vunpack.c.l.b16 %v100
  %v475 = vunpack.c.h.b16 %v100
  %v476 = vunpack.c.l.b16 %v101
  %v477 = vunpack.c.h.b16 %v101
  %v478 = vunpack.c.l.b16 %v102
  %v479 = vunpack.c.h.b16 %v102
  %v480 = vunpack.c.l.b16 %v103
  %v481 = vunpack.c.h.b16 %v103
  %v482 = vunpack.c.l.b16 %v104
  %v483 = vunpack.c.h.b16 %v104
  %v484 = vunpack.c.l.b16 %v105
  %v485 = vunpack.c.h.b16 %v105
  %v486 = vunpack.c.l.b16 %v106
  %v487 = vunpack.c.h.b16 %v106
  %v488 = vunpack.c.l.b16 %v107
  %v489 = vunpack.c.h.b16 %v107
  %v490 = vunpack.c.l.b16 %v108
  %v491 = vunpack.c.h.b16 %v108
  %v492 = vunpack.c.l.b16 %v109
  %v493 = vunpack.c.h.b16 %v109
  %v494 = vunpack.c.l.b16 %v110
  %v495 = vunpack.c.h.b16 %v110
  %v496 = vunpack.c.l.b16 %v111
  %v497 = vunpack.c.h.b16 %v111
  %v498 = vunpack.c.l.b16 %v112
  %v499 = vunpack.c.h.b16 %v112
  %v500 = vunpack.c.l.b16 %v113
  %v501 = vunpack.c.h.b16 %v113
  %v502 = vunpack.c.l.b16 %v114
  %v503 = vunpack.c.h.b16 %v114
  %v504 = vunpack.c.l.b16 %v115
  %v505 = vunpack.c.h.b16 %v115
  %v506 = vunpack.c.l.b16 %v116
  %v507 = vunpack.c.h.b16 %v116
  %v508 = vunpack.c.l.b16 %v117
  %v509 = vunpack.c.h.b16 %v117
  %v510 = vunpack.c.l.b16 %v118
  %v511 = vunpack.c.h.b16 %v118
  %v512 = vunpack.c.l.b16 %v119
  %v513 = vunpack.c.h.b16 %v119
  %v514 = vunpack.c.l.b16 %v120
  %v515 = vunpack.c.h.b16 %v120
  %v516 = vunpack.c.l.b16 %v121
  %v517 = vunpack.c.h.b16 %v121
  %v518 = vunpack.c.l.b16 %v122
  %v519 = vunpack.c.h.b16 %v122
  %v520 = vunpack.c.l.b16 %v123
  %v521 = vunpack.c.h.b16 %v123
  %v522 = vunpack.c.l.b16 %v124
  %v523 = vunpack.c.h.b16 %v124
  %v524 = vunpack.c.l.b16 %v125
  %v525 = vunpack.c.h.b16 %v125
  %v526 = vunpack.c.l.b16 %v126
  %v527 = vunpack.c.h.b16 %v126
  %v528 = vunpack.c.l.b16 %v127
  %v529 = vunpack.c.h.b16 %v127
  %v530 = vunpack.c.l.b16 %v128
  %v531 = vunpack.c.h.b16 %v128
  %v532 = vunpack.c.l.b16 %v129
  %v533 = vunpack.c.h.b16 %v129
  %v534 = vunpack.c.l.b16 %v130
  %v535 = vunpack.c.h.b16 %v130
  %v536 = vunpack.c.l.b16 %v131
  %v537 = vunpack.c.h.b16 %v131
  %v538 = vunpack.c.l.b16 %v132
  %v539 = vunpack.c.h.b16 %v132
  %v540 = vunpack.c.l.b16 %v133
  %v541 = vunpack.c.h.b16 %v133
  %v542 = vunpack.c.l.b16 %v134
  %v543 = vunpack.c.h.b16 %v134
  %v544 = vunpack.c.l.b16 %v135
  %v545 = vunpack.c.h.b16 %v135
  %v546 = vunpack.c.l.b16 %v136
  %v547 = vunpack.c.h.b16 %v136
  %v548 = vunpack.c.l.b16 %v137
  %v549 = vunpack.c.h.b16 %v137
  %v550 = vunpack.c.l.b16 %v138
  %v551 = vunpack.c.h.b16 %v138
  %v552 = vunpack.c.l.b16 %v139
  %v553 = vunpack.c.h.b16 %v139
  %v554 = vunpack.c.l.b16 %v140
  %v555 = vunpack.c.h.b16 %v140
  %v556 = vunpack.c.l.b16 %v141
  %v557 = vunpack.c.h.b16 %v141
  %v558 = vunpack.c.l.b16 %v142
  %v559 = vunpack.c.h.b16 %v142
  %v560 = vunpack.c.l.b16 %v143
  %v561 = vunpack.c.h.b16 %v143
  %v562 = vunpack.c.l.b16 %v144
  %v563 = vunpack.c.h.b16 %v144
  %v564 = vunpack.c.l.b16 %v145
  %v565 = vunpack.c.h.b16 %v145
  %v566 = vunpack.c.l.b16 %v146
  %v567 = vunpack.c.h.b16 %v146
  %v568 = vunpack.c.l.b16 %v147
  %v569 = vunpack.c.h.b16 %v147
  %v570 = vunpack.c.l.b16 %v148
  %v571 = vunpack.c.h.b16 %v148
  %v572 = vunpack.c.l.b16 %v149
  %v573 = vunpack.c.h.b16 %v149
  %v574 = vunpack.c.l.b16 %v150
  %v575 = vunpack.c.h.b16 %v150
  %v576 = vunpack.c.l.b16 %v151
  %v577 = vunpack.c.h.b16 %v151
  %v578 = vpack.c.b16 %v330, %v322
  %v579 = vpack.c.b16 %v331, %v323
  %v580 = vpack.c.b16 %v332, %v324
  %v581 = vpack.c.b16 %v333, %v325
  %v582 = vpack.c.b16 %v334, %v326
  %v583 = vpack.c.b16 %v335, %v327
  %v584 = vpack.c.b16 %v336, %v328
  %v585 = vpack.c.b16 %v337, %v329
  %v586 = vpack.c.b16 %v346, %v338
  %v587 = vpack.c.b16 %v347, %v339
  %v588 = vpack.c.b16 %v348, %v340
  %v589 = vpack.c.b16 %v349, %v341
  %v590 = vpack.c.b16 %v350, %v342
  %v591 = vpack.c.b16 %v351, %v343
  %v592 = vpack.c.b16 %v352, %v344
  %v593 = vpack.c.b16 %v353, %v345
  %v594 = vpack.c.b16 %v362, %v354
  %v595 = vpack.c.b16 %v363, %v355
  %v596 = vpack.c.b16 %v364, %v356
  %v597 = vpack.c.b16 %v365, %v357
  %v598 = vpack.c.b16 %v366, %v358
  %v599 = vpack.c.b16 %v367, %v359
  %v600 = vpack.c.b16 %v368, %v360
  %v601 = vpack.c.b16 %v369, %v361
  %v602 = vpack.c.b16 %v378, %v370
  %v603 = vpack.c.b16 %v379, %v371
  %v604 = vpack.c.b16 %v380, %v372
  %v605 = vpack.c.b16 %v381, %v373
  %v606 = vpack.c.b16 %v382, %v374
  %v607 = vpack.c.b16 %v383, %v375
  %v608 = vpack.c.b16 %v384, %v376
  %v609 = vpack.c.b16 %v385, %v377
  %v610 = vpack.c.b16 %v394, %v386
  %v611 = vpack.c.b16 %v395, %v387
  %v612 = vpack.c.b16 %v396, %v388
  %v613 = vpack.c.b16 %v397, %v389
  %v614 = vpack.c.b16 %v398, %v390
  %v615 = vpack.c.b16 %v399, %v391
  %v616 = vpack.c.b16 %v400, %v392
  %v617 = vpack.c.b16 %v401, %v393
  %v618 = vpack.c.b16 %v410, %v402
  %v619 = vpack.c.b16 %v411, %v403
  %v620 = vpack.c.b16 %v412, %v404
  %v621 = vpack.c.b16 %v413, %v405
  %v622 = vpack.c.b16 %v414, %v406
  %v623 = vpack.c.b16 %v415, %v407
  %v624 = vpack.c.b16 %v416, %v408
  %v625 = vpack.c.b16 %v417, %v409
  %v626 = vpack.c.b16 %v426, %v418
  %v627 = vpack.c.b16 %v427, %v419
  %v628 = vpack.c.b16 %v428, %v420
  %v629 = vpack.c.b16 %v429, %v421
  %v630 = vpack.c.b16 %v430, %v422
  %v631 = vpack.c.b16 %v431, %v423
  %v632 = vpack.c.b16 %v432, %v424
  %v633 = vpack.c.b16 %v433, %v425
  %v634 = vpack.c.b16 %v442, %v434
  %v635 = vpack.c.b16 %v443, %v435
  %v636 = vpack.c.b16 %v444, %v436
  %v637 = vpack.c.b16 %v445, %v437
  %v638 = vpack.c.b16 %v446, %v438
  %v639 = vpack.c.b16 %v447, %v439
  %v640 = vpack.c.b16 %v448, %v440
  %v641 = vpack.c.b16 %v449, %v441
  %v642 = vpack.c.b16 %v458, %v450
  %v643 = vpack.c.b16 %v459, %v451
  %v644 = vpack.c.b16 %v460, %v452
  %v645 = vpack.c.b16 %v461, %v453
  %v646 = vpack.c.b16 %v462, %v454
  %v647 = vpack.c.b16 %v463, %v455
  %v648 = vpack.c.b16 %v464, %v456
  %v649 = vpack.c.b16 %v465, %v457
  %v650 = vpack.c.b16 %v474, %v466
  %v651 = vpack.c.b16 %v475, %v467
  %v652 = vpack.c.b16 %v476, %v468
  %v653 = vpack.c.b16 %v477, %v469
  %v654 = vpack.c.b16 %v478, %v470
  %v655 = vpack.c.b16 %v479, %v471
  %v656 = vpack.c.b16 %v480, %v472
  %v657 = vpack.c.b16 %v481, %v473
  %v658 = vpack.c.b16 %v490, %v482
  %v659 = vpack.c.b16 %v491, %v483
  %v660 = vpack.c.b16 %v492, %v484
  %v661 = vpack.c.b16 %v493, %v485
  %v662 = vpack.c.b16 %v494, %v486
  %v663 = vpack.c.b16 %v495, %v487
  %v664 = vpack.c.b16 %v496, %v488
  %v665 = vpack.c.b16 %v497, %v489
  %v666 = vpack.c.b16 %v506, %v498
  %v667 = vpack.c.b16 %v507, %v499
  %v668 = vpack.c.b16 %v508, %v500
  %v669 = vpack.c.b16 %v509, %v501
  %v670 = vpack.c.b16 %v510, %v502
  %v671 = vpack.c.b16 %v511, %v503
  %v672 = vpack.c.b16 %v512, %v504
  %v673 = vpack.c.b16 %v513, %v505
  %v674 = vpack.c.b16 %v522, %v514
  %v675 = vpack.c.b16 %v523, %v515
  %v676 = vpack.c.b16 %v524, %v516
  %v677 = vpack.c.b16 %v525, %v517
  %v678 = vpack.c.b16 %v526, %v518
  %v679 = vpack.c.b16 %v527, %v519
  %v680 = vpack.c.b16 %v528, %v520
  %v681 = vpack.c.b16 %v529, %v521
  %v682 = vpack.c.b16 %v538, %v530
  %v683 = vpack.c.b16 %v539, %v531
  %v684 = vpack.c.b16 %v540, %v532
  %v685 = vpack.c.b16 %v541, %v533
  %v686 = vpack.c.b16 %v542, %v534
  %v687 = vpack.c.b16 %v543, %v535
  %v688 = vpack.c.b16 %v544, %v536
  %v689 = vpack.c.b16 %v545, %v537
  %v690 = vpack.c.b16 %v554, %v546
  %v691 = vpack.c.b16 %v555, %v547
  %v692 = vpack.c.b16 %v556, %v548
  %v693 = vpack.c.b16 %v557, %v549
  %v694 = vpack.c.b16 %v558, %v550
  %v695 = vpack.c.b16 %v559, %v551
  %v696 = vpack.c.b16 %v560, %v552
  %v697 = vpack.c.b16 %v561, %v553
  %v698 = vpack.c.b16 %v570, %v562
  %v699 = vpack.c.b16 %v571, %v563
  %v700 = vpack.c.b16 %v572, %v564
  %v701 = vpack.c.b16 %v573, %v565
  %v702 = vpack.c.b16 %v574, %v566
  %v703 = vpack.c.b16 %v575, %v567
  %v704 = vpack.c.b16 %v576, %v568
  %v705 = vpack.c.b16 %v577, %v569
  %834 = vmatprep.subr.bf16.mxu0 %v579
  %835 = vmatpush1.bf16.msra.mxu0 %v578
  %836 = vmatprep.subr.bf16.mxu0 %v587
  %837 = vmatpush1.bf16.msra.mxu0 %v586
  %838 = vmatprep.subr.bf16.mxu0 %v595
  %839 = vmatpush1.bf16.msra.mxu0 %v594
  %840 = vmatprep.subr.bf16.mxu0 %v603
  %841 = vmatpush1.bf16.msra.mxu0 %v602
  %842 = vmatprep.subr.bf16.mxu0 %v611
  %843 = vmatpush1.bf16.msra.mxu0 %v610
  %844 = vmatprep.subr.bf16.mxu0 %v619
  %845 = vmatpush1.bf16.msra.mxu0 %v618
  %846 = vmatprep.subr.bf16.mxu0 %v627
  %847 = vmatpush1.bf16.msra.mxu0 %v626
  %848 = vmatprep.subr.bf16.mxu0 %v635
  %849 = vmatpush1.bf16.msra.mxu0 %v634
  %850 = vmatprep.subr.bf16.mxu0 %v643
  %851 = vmatpush1.bf16.msra.mxu0 %v642
  %852 = vmatprep.subr.bf16.mxu0 %v651
  %853 = vmatpush1.bf16.msra.mxu0 %v650
  %854 = vmatprep.subr.bf16.mxu0 %v659
  %855 = vmatpush1.bf16.msra.mxu0 %v658
  %856 = vmatprep.subr.bf16.mxu0 %v667
  %857 = vmatpush1.bf16.msra.mxu0 %v666
  %858 = vmatprep.subr.bf16.mxu0 %v675
  %859 = vmatpush1.bf16.msra.mxu0 %v674
  %860 = vmatprep.subr.bf16.mxu0 %v683
  %861 = vmatpush1.bf16.msra.mxu0 %v682
  %862 = vmatprep.subr.bf16.mxu0 %v691
  %863 = vmatpush1.bf16.msra.mxu0 %v690
  %864 = vmatprep.subr.bf16.mxu0 %v699
  %865 = vmatpush1.bf16.msra.mxu0 %v698
  %866 = vmatprep.mubr.bf16.mxu0 %v21
  %867 = vmatmul.mubr.bf16.gmra.mrb[0].mxu0 %v20
  %v868 = vpop.f32.mrb[0].mxu0
  %v869 = vadd.f32 %v157, %v868
  %v870 = vpop.f32.mrb[0].mxu0
  %v871 = vadd.f32 %v161, %v870
  %v872 = vpop.f32.mrb[0].mxu0
  %v873 = vadd.f32 %v157, %v872
  %v874 = vpop.f32.mrb[0].mxu0
  %v875 = vadd.f32 %v161, %v874
  %876 = vmatprep.mubr.bf16.mxu0 %v23
  %877 = vmatmul.mubr.bf16.gmra.mrb[0].mxu0 %v22
  %v878 = vpop.f32.mrb[0].mxu0
  %v879 = vadd.f32 %v157, %v878
  %v880 = vpop.f32.mrb[0].mxu0
  %v881 = vadd.f32 %v161, %v880
  %v882 = vpop.f32.mrb[0].mxu0
  %v883 = vpop.f32.mrb[0].mxu0
  %884 = vdwg.mxu0
  %885 = vmatprep.subr.bf16.mxu0 %v581
  %886 = vmatpush1.bf16.msra.mxu0 %v580
  %887 = vmatprep.subr.bf16.mxu0 %v589
  %888 = vmatpush1.bf16.msra.mxu0 %v588
  %889 = vmatprep.subr.bf16.mxu0 %v597
  %890 = vmatpush1.bf16.msra.mxu0 %v596
  %891 = vmatprep.subr.bf16.mxu0 %v605
  %892 = vmatpush1.bf16.msra.mxu0 %v604
  %893 = vmatprep.subr.bf16.mxu0 %v613
  %894 = vmatpush1.bf16.msra.mxu0 %v612
  %895 = vmatprep.subr.bf16.mxu0 %v621
  %896 = vmatpush1.bf16.msra.mxu0 %v620
  %897 = vmatprep.subr.bf16.mxu0 %v629
  %898 = vmatpush1.bf16.msra.mxu0 %v628
  %899 = vmatprep.subr.bf16.mxu0 %v637
  %900 = vmatpush1.bf16.msra.mxu0 %v636
  %901 = vmatprep.subr.bf16.mxu0 %v645
  %902 = vmatpush1.bf16.msra.mxu0 %v644
  %903 = vmatprep.subr.bf16.mxu0 %v653
  %904 = vmatpush1.bf16.msra.mxu0 %v652
  %905 = vmatprep.subr.bf16.mxu0 %v661
  %906 = vmatpush1.bf16.msra.mxu0 %v660
  %907 = vmatprep.subr.bf16.mxu0 %v669
  %908 = vmatpush1.bf16.msra.mxu0 %v668
  %909 = vmatprep.subr.bf16.mxu0 %v677
  %910 = vmatpush1.bf16.msra.mxu0 %v676
  %911 = vmatprep.subr.bf16.mxu0 %v685
  %912 = vmatpush1.bf16.msra.mxu0 %v684
  %913 = vmatprep.subr.bf16.mxu0 %v693
  %914 = vmatpush1.bf16.msra.mxu0 %v692
  %915 = vmatprep.subr.bf16.mxu0 %v701
  %916 = vmatpush1.bf16.msra.mxu0 %v700
  %917 = vmatprep.mubr.bf16.mxu0 %v21
  %918 = vmatmul.mubr.bf16.gmra.mrb[0].mxu0 %v20
  %v919 = vpop.f32.mrb[0].mxu0
  %v920 = vadd.f32 %v165, %v919
  %v921 = vpop.f32.mrb[0].mxu0
  %v922 = vadd.f32 %v169, %v921
  %v923 = vpop.f32.mrb[0].mxu0
  %v924 = vadd.f32 %v165, %v923
  %v925 = vpop.f32.mrb[0].mxu0
  %v926 = vadd.f32 %v169, %v925
  %927 = vmatprep.mubr.bf16.mxu0 %v23
  %928 = vmatmul.mubr.bf16.gmra.mrb[0].mxu0 %v22
  %v929 = vpop.f32.mrb[0].mxu0
  %v930 = vadd.f32 %v165, %v929
  %v931 = vpop.f32.mrb[0].mxu0
  %v932 = vadd.f32 %v169, %v931
  %v933 = vpop.f32.mrb[0].mxu0
  %v934 = vpop.f32.mrb[0].mxu0
  %935 = vdwg.mxu0
  %936 = vmatprep.subr.bf16.mxu0 %v583
  %937 = vmatpush1.bf16.msra.mxu0 %v582
  %938 = vmatprep.subr.bf16.mxu0 %v591
  %939 = vmatpush1.bf16.msra.mxu0 %v590
  %940 = vmatprep.subr.bf16.mxu0 %v599
  %941 = vmatpush1.bf16.msra.mxu0 %v598
  %942 = vmatprep.subr.bf16.mxu0 %v607
  %943 = vmatpush1.bf16.msra.mxu0 %v606
  %944 = vmatprep.subr.bf16.mxu0 %v615
  %945 = vmatpush1.bf16.msra.mxu0 %v614
  %946 = vmatprep.subr.bf16.mxu0 %v623
  %947 = vmatpush1.bf16.msra.mxu0 %v622
  %948 = vmatprep.subr.bf16.mxu0 %v631
  %949 = vmatpush1.bf16.msra.mxu0 %v630
  %950 = vmatprep.subr.bf16.mxu0 %v639
  %951 = vmatpush1.bf16.msra.mxu0 %v638
  %952 = vmatprep.subr.bf16.mxu0 %v647
  %953 = vmatpush1.bf16.msra.mxu0 %v646
  %954 = vmatprep.subr.bf16.mxu0 %v655
  %955 = vmatpush1.bf16.msra.mxu0 %v654
  %956 = vmatprep.subr.bf16.mxu0 %v663
  %957 = vmatpush1.bf16.msra.mxu0 %v662
  %958 = vmatprep.subr.bf16.mxu0 %v671
  %959 = vmatpush1.bf16.msra.mxu0 %v670
  %960 = vmatprep.subr.bf16.mxu0 %v679
  %961 = vmatpush1.bf16.msra.mxu0 %v678
  %962 = vmatprep.subr.bf16.mxu0 %v687
  %963 = vmatpush1.bf16.msra.mxu0 %v686
  %964 = vmatprep.subr.bf16.mxu0 %v695
  %965 = vmatpush1.bf16.msra.mxu0 %v694
  %966 = vmatprep.subr.bf16.mxu0 %v703
  %967 = vmatpush1.bf16.msra.mxu0 %v702
  %968 = vmatprep.mubr.bf16.mxu0 %v21
  %969 = vmatmul.mubr.bf16.gmra.mrb[0].mxu0 %v20
  %v970 = vpop.f32.mrb[0].mxu0
  %v971 = vadd.f32 %v173, %v970
  %v972 = vpop.f32.mrb[0].mxu0
  %v973 = vadd.f32 %v177, %v972
  %v974 = vpop.f32.mrb[0].mxu0
  %v975 = vadd.f32 %v173, %v974
  %v976 = vpop.f32.mrb[0].mxu0
  %v977 = vadd.f32 %v177, %v976
  %978 = vmatprep.mubr.bf16.mxu0 %v23
  %979 = vmatmul.mubr.bf16.gmra.mrb[0].mxu0 %v22
  %v980 = vpop.f32.mrb[0].mxu0
  %v981 = vadd.f32 %v173, %v980
  %v982 = vpop.f32.mrb[0].mxu0
  %v983 = vadd.f32 %v177, %v982
  %v984 = vpop.f32.mrb[0].mxu0
  %v985 = vpop.f32.mrb[0].mxu0
  %986 = vdwg.mxu0
  %987 = vmatprep.subr.bf16.mxu0 %v585
  %988 = vmatpush1.bf16.msra.mxu0 %v584
  %989 = vmatprep.subr.bf16.mxu0 %v593
  %990 = vmatpush1.bf16.msra.mxu0 %v592
  %991 = vmatprep.subr.bf16.mxu0 %v601
  %992 = vmatpush1.bf16.msra.mxu0 %v600
  %993 = vmatprep.subr.bf16.mxu0 %v609
  %994 = vmatpush1.bf16.msra.mxu0 %v608
  %995 = vmatprep.subr.bf16.mxu0 %v617
  %996 = vmatpush1.bf16.msra.mxu0 %v616
  %997 = vmatprep.subr.bf16.mxu0 %v625
  %998 = vmatpush1.bf16.msra.mxu0 %v624
  %999 = vmatprep.subr.bf16.mxu0 %v633
  %1000 = vmatpush1.bf16.msra.mxu0 %v632
  %1001 = vmatprep.subr.bf16.mxu0 %v641
  %1002 = vmatpush1.bf16.msra.mxu0 %v640
  %1003 = vmatprep.subr.bf16.mxu0 %v649
  %1004 = vmatpush1.bf16.msra.mxu0 %v648
  %1005 = vmatprep.subr.bf16.mxu0 %v657
  %1006 = vmatpush1.bf16.msra.mxu0 %v656
  %1007 = vmatprep.subr.bf16.mxu0 %v665
  %1008 = vmatpush1.bf16.msra.mxu0 %v664
  %1009 = vmatprep.subr.bf16.mxu0 %v673
  %1010 = vmatpush1.bf16.msra.mxu0 %v672
  %1011 = vmatprep.subr.bf16.mxu0 %v681
  %1012 = vmatpush1.bf16.msra.mxu0 %v680
  %1013 = vmatprep.subr.bf16.mxu0 %v689
  %1014 = vmatpush1.bf16.msra.mxu0 %v688
  %1015 = vmatprep.subr.bf16.mxu0 %v697
  %1016 = vmatpush1.bf16.msra.mxu0 %v696
  %1017 = vmatprep.subr.bf16.mxu0 %v705
  %1018 = vmatpush1.bf16.msra.mxu0 %v704
  %1019 = vmatprep.mubr.bf16.mxu0 %v21
  %1020 = vmatmul.mubr.bf16.gmra.mrb[0].mxu0 %v20
  %v1021 = vpop.f32.mrb[0].mxu0
  %v1022 = vadd.f32 %v181, %v1021
  %v1023 = vpop.f32.mrb[0].mxu0
  %v1024 = vadd.f32 %v185, %v1023
  %v1025 = vpop.f32.mrb[0].mxu0
  %v1026 = vadd.f32 %v181, %v1025
  %v1027 = vpop.f32.mrb[0].mxu0
  %v1028 = vadd.f32 %v185, %v1027
  %1029 = vmatprep.mubr.bf16.mxu0 %v23
  %1030 = vmatmul.mubr.bf16.gmra.mrb[0].mxu0 %v22
  %v1031 = vpop.f32.mrb[0].mxu0
  %v1032 = vadd.f32 %v181, %v1031
  %v1033 = vpop.f32.mrb[0].mxu0
  %v1034 = vadd.f32 %v185, %v1033
  %v1035 = vpop.f32.mrb[0].mxu0
  %v1036 = vpop.f32.mrb[0].mxu0
  %1037 = vdwg.mxu0
  %1038 = vst [vmem:[%s3] sm:$0xff] %v869
  %1039 = vst [vmem:[%s3 + $0x8] sm:$0xff] %v871
  %1040 = vst [vmem:[%s3 + $0x10] sm:$0xff] %v920
  %1041 = vst [vmem:[%s3 + $0x18] sm:$0xff] %v922
  %1042 = vst [vmem:[%s3 + $0x20] sm:$0xff] %v971
  %1043 = vst [vmem:[%s3 + $0x28] sm:$0xff] %v973
  %1044 = vst [vmem:[%s3 + $0x30] sm:$0xff] %v1022
  %1045 = vst [vmem:[%s3 + $0x38] sm:$0xff] %v1024
  %1046 = vst [vmem:[%s3 + $0x40] sm:$0xff] %v873
  %1047 = vst [vmem:[%s3 + $0x48] sm:$0xff] %v875
  %1048 = vst [vmem:[%s3 + $0x50] sm:$0xff] %v924
  %1049 = vst [vmem:[%s3 + $0x58] sm:$0xff] %v926
  %1050 = vst [vmem:[%s3 + $0x60] sm:$0xff] %v975
  %1051 = vst [vmem:[%s3 + $0x68] sm:$0xff] %v977
  %1052 = vst [vmem:[%s3 + $0x70] sm:$0xff] %v1026
  %1053 = vst [vmem:[%s3 + $0x78] sm:$0xff] %v1028
  %1054 = vst [vmem:[%s3 + $0x80] sm:$0xff] %v879
  %1055 = vst [vmem:[%s3 + $0x88] sm:$0xff] %v881
  %1056 = vst [vmem:[%s3 + $0x90] sm:$0xff] %v930
  %1057 = vst [vmem:[%s3 + $0x98] sm:$0xff] %v932
  %1058 = vst [vmem:[%s3 + $0xa0] sm:$0xff] %v981
  %1059 = vst [vmem:[%s3 + $0xa8] sm:$0xff] %v983
  %1060 = vst [vmem:[%s3 + $0xb0] sm:$0xff] %v1032
  %1061 = vst [vmem:[%s3 + $0xb8] sm:$0xff] %v1034
  // Predicated region
  $region14: #{emoji_lstm_forward.7} parent=0 // pred_check
    _
  $region15: #{emoji_lstm_forward.7} parent=0 // pred_check_branch
    %1063 = sbr.rel (0) target = $region17
  $region16: #{emoji_lstm_forward.7} parent=0 // pred_region
    _
  $region17: #{emoji_lstm_forward.7} parent=0 // pred_fallthru
    _
  // Predicated region
  $region18: #{emoji_lstm_forward.7} parent=0 // pred_check
    _
  $region19: #{emoji_lstm_forward.7} parent=0 // pred_check_branch
    %1065 = sbr.rel (0) target = $region21
  $region20: #{emoji_lstm_forward.7} parent=0 // pred_region
    _
  $region21: #{emoji_lstm_forward.7} parent=0 // pred_fallthru
    _

// kernel: emoji_lstm_forward.9
$region0: #{emoji_lstm_forward.9}
  #allocation0 [shape = 'u32[]', space=smem, size = 0x4, offset = 0x4, fixed_abs, tag = 'smem constant byte address 0x4 - core index']
  #allocation1 [shape = 'u32[144,128]{1,0:T(1,128)}', space=vmem, size = 0x12000, scoped, tag = 'internal scratch']
  %s0 = inlined_call_operand.vmem [shape: f32[2,256], index: 0, kind: input, shape index: {}]
  %s1 = inlined_call_operand.vmem [shape: bf16[256,8], index: 1, kind: input, shape index: {}]
  %s2 = inlined_call_operand.vmem [shape: f32[1,8], index: 2, kind: input, shape index: {}]
  %s3 = inlined_call_operand.hbm [shape: f32[2,8], index: 3, kind: output, shape index: {}]
  %s4 = sld [smem:[#allocation0]]
  $region22: #{emoji_lstm_forward.9} parent=0
    _
  %s6 = ssub.s32 1, %s4
  %s7 = scalar_select 0, %s6, %s4
  $region1: #{emoji_lstm_forward.9} parent=0
    #allocation2 [shape = 'u8[1024]{0}', space=vmem, size = 0x400, scoped, tag = 'output window, operand 0, single buffered']
    #allocation3 [shape = 's32[1]{0}', space=sflag, size = 0x4, scoped, tag = 'scoped memory for emoji_lstm_forward.9']
    %8 = vsyncpa [#allocation3], 0
    // Predicated region
    $region2: #{emoji_lstm_forward.9} parent=1 // pred_check
      _
    $region3: #{emoji_lstm_forward.9} parent=1 // pred_check_branch
      %10 = sbr.rel (0) target = $region5
    $region4: #{emoji_lstm_forward.9} parent=1 // pred_region
      _
    $region5: #{emoji_lstm_forward.9} parent=1 // pred_fallthru
      _
    // Predicated region
    $region6: #{emoji_lstm_forward.9} parent=1 // pred_check
      _
    $region7: #{emoji_lstm_forward.9} parent=1 // pred_check_branch
      %12 = sbr.rel (0) target = $region9
    $region8: #{emoji_lstm_forward.9} parent=1 // pred_region
      _
    $region9: #{emoji_lstm_forward.9} parent=1 // pred_fallthru
      _
    // Predicated region
    $region10: #{emoji_lstm_forward.9} parent=1 // pred_check
      _
    $region11: #{emoji_lstm_forward.9} parent=1 // pred_check_branch
      %14 = sbr.rel (0) target = $region13
    $region12: #{emoji_lstm_forward.9} parent=1 // pred_region
      _
    $region13: #{emoji_lstm_forward.9} parent=1 // pred_fallthru
      _
    %v16 = vld [vmem:[%s0] sm:$0xf]
    %v19 = vunpack.c.l.s4 1983009808
    %v20 = vunpack.c.0.s8 %v19
    %v21 = vlaneseq
    %v22 = vshrl.u32 %v21, 7
    %v23 = vsub.s32 %v20, %v22
    %v24 = vrot.slane %v16, %v23
    %v25 = vcombine.high %v24, %v24
    %v28 = vpack.c.bf16 %v24, %v24
    %v29 = vpack.c.bf16 %v25, %v25
    %v30 = vld [vmem:[%s1] sm:$0xf]
    %v31 = vld [vmem:[%s1 + $0x4] sm:$0xf]
    %v32 = vld [vmem:[%s1 + $0x8] sm:$0xf]
    %v33 = vld [vmem:[%s1 + $0xc] sm:$0xf]
    %v34 = vld [vmem:[%s1 + $0x10] sm:$0xf]
    %v35 = vld [vmem:[%s1 + $0x14] sm:$0xf]
    %v36 = vld [vmem:[%s1 + $0x18] sm:$0xf]
    %v37 = vld [vmem:[%s1 + $0x1c] sm:$0xf]
    %v38 = vld [vmem:[%s1 + $0x20] sm:$0xf]
    %v39 = vld [vmem:[%s1 + $0x24] sm:$0xf]
    %v40 = vld [vmem:[%s1 + $0x28] sm:$0xf]
    %v41 = vld [vmem:[%s1 + $0x2c] sm:$0xf]
    %v42 = vld [vmem:[%s1 + $0x30] sm:$0xf]
    %v43 = vld [vmem:[%s1 + $0x34] sm:$0xf]
    %v44 = vld [vmem:[%s1 + $0x38] sm:$0xf]
    %v45 = vld [vmem:[%s1 + $0x3c] sm:$0xf]
    %v46 = vld [vmem:[%s1 + $0x40] sm:$0xf]
    %v47 = vld [vmem:[%s1 + $0x44] sm:$0xf]
    %v48 = vld [vmem:[%s1 + $0x48] sm:$0xf]
    %v49 = vld [vmem:[%s1 + $0x4c] sm:$0xf]
    %v50 = vld [vmem:[%s1 + $0x50] sm:$0xf]
    %v51 = vld [vmem:[%s1 + $0x54] sm:$0xf]
    %v52 = vld [vmem:[%s1 + $0x58] sm:$0xf]
    %v53 = vld [vmem:[%s1 + $0x5c] sm:$0xf]
    %v54 = vld [vmem:[%s1 + $0x60] sm:$0xf]
    %v55 = vld [vmem:[%s1 + $0x64] sm:$0xf]
    %v56 = vld [vmem:[%s1 + $0x68] sm:$0xf]
    %v57 = vld [vmem:[%s1 + $0x6c] sm:$0xf]
    %v58 = vld [vmem:[%s1 + $0x70] sm:$0xf]
    %v59 = vld [vmem:[%s1 + $0x74] sm:$0xf]
    %v60 = vld [vmem:[%s1 + $0x78] sm:$0xf]
    %v61 = vld [vmem:[%s1 + $0x7c] sm:$0xf]
    %v62 = vld [vmem:[%s2] sm:$0x1]
    %v64 = vlaneseq
    %v65 = vshrl.u32 %v64, 7
    %v66 = vsub.s32 0, %v65
    %v67 = vrot.slane %v62, %v66
    %v101 = vunpack.c.l.b16 %v30
    %v102 = vunpack.c.l.b16 %v31
    %v103 = vunpack.c.l.b16 %v32
    %v104 = vunpack.c.l.b16 %v33
    %v105 = vunpack.c.l.b16 %v34
    %v106 = vunpack.c.l.b16 %v35
    %v107 = vunpack.c.l.b16 %v36
    %v108 = vunpack.c.l.b16 %v37
    %v109 = vunpack.c.l.b16 %v38
    %v110 = vunpack.c.l.b16 %v39
    %v111 = vunpack.c.l.b16 %v40
    %v112 = vunpack.c.l.b16 %v41
    %v113 = vunpack.c.l.b16 %v42
    %v114 = vunpack.c.l.b16 %v43
    %v115 = vunpack.c.l.b16 %v44
    %v116 = vunpack.c.l.b16 %v45
    %v117 = vunpack.c.l.b16 %v46
    %v118 = vunpack.c.l.b16 %v47
    %v119 = vunpack.c.l.b16 %v48
    %v120 = vunpack.c.l.b16 %v49
    %v121 = vunpack.c.l.b16 %v50
    %v122 = vunpack.c.l.b16 %v51
    %v123 = vunpack.c.l.b16 %v52
    %v124 = vunpack.c.l.b16 %v53
    %v125 = vunpack.c.l.b16 %v54
    %v126 = vunpack.c.l.b16 %v55
    %v127 = vunpack.c.l.b16 %v56
    %v128 = vunpack.c.l.b16 %v57
    %v129 = vunpack.c.l.b16 %v58
    %v130 = vunpack.c.l.b16 %v59
    %v131 = vunpack.c.l.b16 %v60
    %v132 = vunpack.c.l.b16 %v61
    %v133 = vpack.c.b16 %v102, %v101
    %v134 = vpack.c.b16 %v104, %v103
    %v135 = vpack.c.b16 %v106, %v105
    %v136 = vpack.c.b16 %v108, %v107
    %v137 = vpack.c.b16 %v110, %v109
    %v138 = vpack.c.b16 %v112, %v111
    %v139 = vpack.c.b16 %v114, %v113
    %v140 = vpack.c.b16 %v116, %v115
    %v141 = vpack.c.b16 %v118, %v117
    %v142 = vpack.c.b16 %v120, %v119
    %v143 = vpack.c.b16 %v122, %v121
    %v144 = vpack.c.b16 %v124, %v123
    %v145 = vpack.c.b16 %v126, %v125
    %v146 = vpack.c.b16 %v128, %v127
    %v147 = vpack.c.b16 %v130, %v129
    %v148 = vpack.c.b16 %v132, %v131
    %165 = vmatprep.subr.bf16.mxu0 0
    %166 = vmatpush1.bf16.msra.mxu0 %v133
    %167 = vmatprep.subr.bf16.mxu0 0
    %168 = vmatpush1.bf16.msra.mxu0 %v134
    %169 = vmatprep.subr.bf16.mxu0 0
    %170 = vmatpush1.bf16.msra.mxu0 %v135
    %171 = vmatprep.subr.bf16.mxu0 0
    %172 = vmatpush1.bf16.msra.mxu0 %v136
    %173 = vmatprep.subr.bf16.mxu0 0
    %174 = vmatpush1.bf16.msra.mxu0 %v137
    %175 = vmatprep.subr.bf16.mxu0 0
    %176 = vmatpush1.bf16.msra.mxu0 %v138
    %177 = vmatprep.subr.bf16.mxu0 0
    %178 = vmatpush1.bf16.msra.mxu0 %v139
    %179 = vmatprep.subr.bf16.mxu0 0
    %180 = vmatpush1.bf16.msra.mxu0 %v140
    %181 = vmatprep.subr.bf16.mxu0 0
    %182 = vmatpush1.bf16.msra.mxu0 %v141
    %183 = vmatprep.subr.bf16.mxu0 0
    %184 = vmatpush1.bf16.msra.mxu0 %v142
    %185 = vmatprep.subr.bf16.mxu0 0
    %186 = vmatpush1.bf16.msra.mxu0 %v143
    %187 = vmatprep.subr.bf16.mxu0 0
    %188 = vmatpush1.bf16.msra.mxu0 %v144
    %189 = vmatprep.subr.bf16.mxu0 0
    %190 = vmatpush1.bf16.msra.mxu0 %v145
    %191 = vmatprep.subr.bf16.mxu0 0
    %192 = vmatpush1.bf16.msra.mxu0 %v146
    %193 = vmatprep.subr.bf16.mxu0 0
    %194 = vmatpush1.bf16.msra.mxu0 %v147
    %195 = vmatprep.subr.bf16.mxu0 0
    %196 = vmatpush1.bf16.msra.mxu0 %v148
    %197 = vmatprep.mubr.bf16.mxu0 %v29
    %198 = vmatmul.mubr.bf16.gmra.mrb[0].mxu0 %v28
    %v199 = vpop.f32.mrb[0].mxu0
    %v200 = vadd.f32 %v67, %v199
    %v201 = vpop.f32.mrb[0].mxu0
    %v202 = vpop.f32.mrb[0].mxu0
    %v203 = vpop.f32.mrb[0].mxu0
    %204 = vdwg.mxu0
    %vm205 = vcmask 58368
    %206 = vst.msk [vmem:[#allocation2] sm:$0x3] %vm205, %v200
    // Predicated region
    $region14: #{emoji_lstm_forward.9} parent=1 // pred_check
      _
    $region15: #{emoji_lstm_forward.9} parent=1 // pred_check_branch
      %208 = sbr.rel (0) target = $region17
    $region16: #{emoji_lstm_forward.9} parent=1 // pred_region
      %s210 = ssub.s32 32, 32
      %211 = vsyncadd [#allocation3], %s210
      %s213 = sshll.u32 [#allocation2], 4
      %s214 = int_to_ptr.vmem [resolvable:$true] %s213
      %216 = dma.vmem_to_hbm [thread:$0]  %s214, 32, %s3, [#allocation3]
    $region17: #{emoji_lstm_forward.9} parent=1 // pred_fallthru
      _
    // Predicated region
    $region18: #{emoji_lstm_forward.9} parent=1 // pred_check
      _
    $region19: #{emoji_lstm_forward.9} parent=1 // pred_check_branch
      %218 = sbr.rel (0) target = $region21
    $region20: #{emoji_lstm_forward.9} parent=1 // pred_region
      %219 = dma.done [#allocation3], 32
    $region21: #{emoji_lstm_forward.9} parent=1 // pred_fallthru
      _
    %220 = vsyncpa [#allocation3], 1

</llo_original>
